<compile_context>
chip_gen: v7x
topology: tpu7x:2x2x1
jax: 0.10.0
libtpu: 0.0.40
codegen_flags: <defaults>
</compile_context>

<pallas_src>
import functools
import math

import jax
import jax.numpy as jnp
from jax import lax
from jax.experimental import pallas as pl
from jax.experimental.pallas import tpu as pltpu

EPS = 1e-5          # PyTorch GroupNorm default eps
GROUPS = 32         # nn.GroupNorm(32, in_ch)
_VMEM_LIMIT = 48 * 1024 * 1024          # explicit scoped-VMEM limit (headroom on v7x's 64 MiB)
_FUSED_VMEM_BUDGET = 32 * 1024 * 1024   # use the fully-fused kernel below this working set


# ----------------------------- helpers ------------------------------

def _pick_tile(n, pref):
    """Largest divisor of n that is <= pref and a multiple of 8; else n (full extent)."""
    for t in range(min(n, pref), 7, -1):
        if n % t == 0 and t % 8 == 0:
            return t
    # TODO(synk): odd spatial sizes fall back to a single full-extent tile; a
    # masked-tail grid would be needed to tile those.
    return n


def _fused_vmem_bytes(HW, C, tq):
    """Rough VMEM working-set estimate for the fully-fused kernel."""
    return (2 * HW * C * 4        # double-buffered full-batch x (f32)
            + 3 * HW * C * 2      # q/k/v bf16 scratch (KV resident)
            + HW * 3 * C * 4      # qkv f32 intermediate at the prologue step
            + 2 * tq * HW * 4     # score matrix + exp(p)
            + 2 * tq * C * 4      # double-buffered output tile
            + 8 * C * C * 2)      # weights (double-buffered, bf16)


# ----------------------------- fully-fused kernel (small/medium HW) ------------------------------

def _fused_kernel(x_ref, fold_ref, foldt_ref, gamma_ref, beta_ref,
                  wqkv_ref, bqkv_ref, wp_ref, bp_ref, o_ref,
                  q_scr, k_scr, v_scr, *, scale, n, eps, tq):
    """GroupNorm + fused QKV proj + attention + output proj + residual for one batch element.

    grid = (B, HW // tq); at i == 0 the whole per-batch K/V (and Q) are computed
    once into VMEM scratch, then each query tile attends against the resident K/V.
    """
    i = pl.program_id(1)
    C = wp_ref.shape[0]

    @pl.when(i == 0)
    def _():
        # --- GroupNorm stats: two-pass (numerically stable) + one-hot group fold ---
        x = x_ref[...].astype(jnp.float32)                                   # (HW, C)
        csum = jnp.sum(x, axis=0, keepdims=True)                             # (1, C)
        mean_g = jnp.dot(csum, fold_ref[...],
                         preferred_element_type=jnp.float32) * (1.0 / n)     # (1, G)
        mean_c = jnp.dot(mean_g, foldt_ref[...],
                         preferred_element_type=jnp.float32)                 # (1, C)
        cen = x - mean_c
        csq = jnp.sum(cen * cen, axis=0, keepdims=True)                      # (1, C)
        var_g = jnp.dot(csq, fold_ref[...],
                        preferred_element_type=jnp.float32) * (1.0 / n)      # (1, G)
        inv_c = jnp.dot(lax.rsqrt(var_g + eps), foldt_ref[...],
                        preferred_element_type=jnp.float32)                  # (1, C)
        h = (cen * inv_c * gamma_ref[...] + beta_ref[...]).astype(jnp.bfloat16)

        # --- fused q/k/v projection: single (HW, C) @ (C, 3C) MXU pass ---
        qkv = jnp.dot(h, wqkv_ref[...],
                      preferred_element_type=jnp.float32) + bqkv_ref[...]    # (HW, 3C)
        q_scr[...] = qkv[:, :C].astype(jnp.bfloat16)
        k_scr[...] = qkv[:, C:2 * C].astype(jnp.bfloat16)
        v_scr[...] = qkv[:, 2 * C:].astype(jnp.bfloat16)

    # --- attention for this query tile against the whole VMEM-resident K/V ---
    row = pl.multiple_of(i * tq, tq)
    q = q_scr[pl.ds(row, tq), :]                                              # (tq, C) bf16
    s = lax.dot_general(q, k_scr[...], (((1,), (1,)), ((), ())),
                        preferred_element_type=jnp.float32) * scale          # (tq, HW)
    p = jnp.exp(s - jnp.max(s, axis=-1, keepdims=True))
    attn = jnp.dot(p.astype(jnp.bfloat16), v_scr[...],
                   preferred_element_type=jnp.float32) / jnp.sum(p, axis=-1, keepdims=True)
    proj = jnp.dot(attn.astype(jnp.bfloat16), wp_ref[...],
                   preferred_element_type=jnp.float32) + bp_ref[...]
    xq = x_ref[pl.ds(row, tq), :].astype(jnp.float32)
    o_ref[...] = (xq + proj).astype(o_ref.dtype)


def fused_attn_block(xf, fold, fold_t, gamma, beta, wqkv, bqkv, wp, bp, *, scale, n, tq):
    B, HW, C = xf.shape
    C3 = wqkv.shape[1]
    const = lambda shape: pl.BlockSpec(shape, lambda b, i: (0, 0))
    return pl.pallas_call(
        functools.partial(_fused_kernel, scale=scale, n=n, eps=EPS, tq=tq),
        out_shape=jax.ShapeDtypeStruct((B, HW, C), jnp.float32),
        grid=(B, HW // tq),
        in_specs=[pl.BlockSpec((None, HW, C), lambda b, i: (b, 0, 0)),   # full per-batch x, resident
                  const((C, GROUPS)), const((GROUPS, C)),
                  const((1, C)), const((1, C)),
                  const((C, C3)), const((1, C3)),
                  const((C, C)), const((1, C))],
        out_specs=pl.BlockSpec((None, tq, C), lambda b, i: (b, i, 0)),
        scratch_shapes=[pltpu.VMEM((HW, C), jnp.bfloat16),
                        pltpu.VMEM((HW, C), jnp.bfloat16),
                        pltpu.VMEM((HW, C), jnp.bfloat16)],
        compiler_params=pltpu.CompilerParams(
            dimension_semantics=("parallel", "arbitrary"),
            vmem_limit_bytes=_VMEM_LIMIT),
    )(xf, fold, fold_t, gamma, beta, wqkv, bqkv, wp, bp)


# ----------------------------- split path (large HW fallback) ------------------------------

def _gn_stats_kernel(x_ref, fold_ref, foldt_ref, mean_ref, inv_ref,
                     sum_sc, sq_sc, *, n, eps):
    """Streaming GroupNorm stats over HW tiles; group fold finished in-kernel at the last tile."""
    t = pl.program_id(1)

    @pl.when(t == 0)
    def _():
        sum_sc[...] = jnp.zeros_like(sum_sc)
        sq_sc[...] = jnp.zeros_like(sq_sc)

    x = x_ref[...].astype(jnp.float32)
    sum_sc[...] += jnp.sum(x, axis=0, keepdims=True)
    sq_sc[...] += jnp.sum(x * x, axis=0, keepdims=True)

    @pl.when(t == pl.num_programs(1) - 1)
    def _():
        mean_g = jnp.dot(sum_sc[...], fold_ref[...],
                         preferred_element_type=jnp.float32) * (1.0 / n)      # (1, G)
        sq_g = jnp.dot(sq_sc[...], fold_ref[...],
                       preferred_element_type=jnp.float32) * (1.0 / n)
        # TODO(synk): E[x^2]-E[x]^2 can cancel for large-mean activations; the fused
        # path uses a two-pass variance instead.
        var_g = jnp.maximum(sq_g - mean_g * mean_g, 0.0)
        mean_ref[...] = jnp.dot(mean_g, foldt_ref[...], preferred_element_type=jnp.float32)
        inv_ref[...] = jnp.dot(lax.rsqrt(var_g + eps), foldt_ref[...],
                               preferred_element_type=jnp.float32)


def gn_stats(xf, fold, fold_t, tile, n):
    B, HW, C = xf.shape
    x_spec = pl.BlockSpec((None, tile, C), lambda b, t: (b, t, 0))
    stat_spec = pl.BlockSpec((None, 1, C), lambda b, t: (b, 0, 0))
    return pl.pallas_call(
        functools.partial(_gn_stats_kernel, n=n, eps=EPS),
        out_shape=(jax.ShapeDtypeStruct((B, 1, C), jnp.float32),
                   jax.ShapeDtypeStruct((B, 1, C), jnp.float32)),
        grid=(B, HW // tile),
        in_specs=[x_spec,
                  pl.BlockSpec((C, GROUPS), lambda b, t: (0, 0)),
                  pl.BlockSpec((GROUPS, C), lambda b, t: (0, 0))],
        out_specs=(stat_spec, stat_spec),
        scratch_shapes=[pltpu.VMEM((1, C), jnp.float32),
                        pltpu.VMEM((1, C), jnp.float32)],
        compiler_params=pltpu.CompilerParams(
            dimension_semantics=("parallel", "arbitrary"),
            vmem_limit_bytes=_VMEM_LIMIT),
    )(xf, fold, fold_t)


def _gn_qkv_kernel(x_ref, mean_ref, inv_ref, gamma_ref, beta_ref,
                   wqkv_ref, bqkv_ref, qkv_ref):
    """GN apply + single fused (C, 3C) q/k/v projection; lane-dense 3C store."""
    x = x_ref[...].astype(jnp.float32)
    h = ((x - mean_ref[...]) * inv_ref[...] * gamma_ref[...] + beta_ref[...]).astype(jnp.bfloat16)
    qkv = jnp.dot(h, wqkv_ref[...], preferred_element_type=jnp.float32) + bqkv_ref[...]
    qkv_ref[...] = qkv.astype(qkv_ref.dtype)


def gn_qkv(xf, mean, inv, gamma, beta, wqkv, bqkv, tile):
    B, HW, C = xf.shape
    C3 = wqkv.shape[1]
    x_spec = pl.BlockSpec((None, tile, C), lambda b, t: (b, t, 0))
    stat_spec = pl.BlockSpec((None, 1, C), lambda b, t: (b, 0, 0))
    const = lambda shape: pl.BlockSpec(shape, lambda b, t: (0, 0))
    return pl.pallas_call(
        _gn_qkv_kernel,
        out_shape=jax.ShapeDtypeStruct((B, HW, C3), jnp.bfloat16),
        grid=(B, HW // tile),
        in_specs=[x_spec, stat_spec, stat_spec,
                  const((1, C)), const((1, C)),
                  const((C, C3)), const((1, C3))],
        out_specs=pl.BlockSpec((None, tile, C3), lambda b, t: (b, t, 0)),
        compiler_params=pltpu.CompilerParams(
            dimension_semantics=("parallel", "parallel"),
            vmem_limit_bytes=_VMEM_LIMIT),
    )(xf, mean, inv, gamma, beta, wqkv, bqkv)


def _flash_attn_kernel(q_ref, k_ref, v_ref, x_ref, wp_ref, bp_ref, o_ref,
                       m_sc, l_sc, acc_sc, *, scale):
    """Flash attention over KV tiles + fused output projection + residual at the last step."""
    j = pl.program_id(2)

    @pl.when(j == 0)
    def _():
        m_sc[...] = jnp.full_like(m_sc, -jnp.inf)
        l_sc[...] = jnp.zeros_like(l_sc)
        acc_sc[...] = jnp.zeros_like(acc_sc)

    s = lax.dot_general(q_ref[...], k_ref[...], (((1,), (1,)), ((), ())),
                        preferred_element_type=jnp.float32) * scale          # (tq, tk)
    m_new = jnp.maximum(m_sc[...], jnp.max(s, axis=-1, keepdims=True))
    alpha = jnp.exp(m_sc[...] - m_new)
    p = jnp.exp(s - m_new)
    l_sc[...] = alpha * l_sc[...] + jnp.sum(p, axis=-1, keepdims=True)
    acc_sc[...] = alpha * acc_sc[...] + jnp.dot(p.astype(jnp.bfloat16), v_ref[...],
                                                preferred_element_type=jnp.float32)
    m_sc[...] = m_new

    @pl.when(j == pl.num_programs(2) - 1)
    def _():
        attn = acc_sc[...] / l_sc[...]
        proj = jnp.dot(attn.astype(jnp.bfloat16), wp_ref[...],
                       preferred_element_type=jnp.float32) + bp_ref[...]
        o_ref[...] = (x_ref[...].astype(jnp.float32) + proj).astype(o_ref.dtype)


def flash_attn_proj_res(qkv, xf, wp, bp, scale, tq, tk):
    B, HW, C = xf.shape
    q_spec = pl.BlockSpec((None, tq, C), lambda b, i, j: (b, i, 0))
    k_spec = pl.BlockSpec((None, tk, C), lambda b, i, j: (b, j, 1))   # lane-aligned slice of qkv
    v_spec = pl.BlockSpec((None, tk, C), lambda b, i, j: (b, j, 2))
    x_spec = pl.BlockSpec((None, tq, C), lambda b, i, j: (b, i, 0))
    return pl.pallas_call(
        functools.partial(_flash_attn_kernel, scale=scale),
        out_shape=jax.ShapeDtypeStruct((B, HW, C), jnp.float32),
        grid=(B, HW // tq, HW // tk),
        in_specs=[q_spec, k_spec, v_spec, x_spec,
                  pl.BlockSpec((C, C), lambda b, i, j: (0, 0)),
                  pl.BlockSpec((1, C), lambda b, i, j: (0, 0))],
        out_specs=x_spec,
        scratch_shapes=[pltpu.VMEM((tq, 1), jnp.float32),
                        pltpu.VMEM((tq, 1), jnp.float32),
                        pltpu.VMEM((tq, C), jnp.float32)],
        compiler_params=pltpu.CompilerParams(
            dimension_semantics=("parallel", "parallel", "arbitrary"),
            vmem_limit_bytes=_VMEM_LIMIT),
    )(qkv, qkv, qkv, xf, wp, bp)


# ------------------------------- forward (glue) ------------------------------

def attn_block_forward(x_nchw, prep, *, force_split=False):
    x = jnp.transpose(x_nchw, (0, 2, 3, 1))          # NCHW -> NHWC (C on lanes)
    B, H, W, C = x.shape
    assert C % GROUPS == 0, "GroupNorm(32, C) requires C % 32 == 0"
    HW = H * W
    cs = C // GROUPS
    xf = x.reshape(B, HW, C)

    # one-hot group-fold matrices (constant-folded under jit)
    gid = jnp.arange(C, dtype=jnp.int32) // cs
    fold = (gid[:, None] == jnp.arange(GROUPS, dtype=jnp.int32)[None, :]).astype(jnp.float32)
    fold_t = fold.T

    scale = float(C) ** (-0.5)
    n = float(HW * cs)
    tq = _pick_tile(HW, 256)

    if (not force_split) and _fused_vmem_bytes(HW, C, tq) <= _FUSED_VMEM_BUDGET:
        # Single kernel: GN + QKV + attention + proj + residual, K/V resident in VMEM.
        out = fused_attn_block(xf, fold, fold_t,
                               prep["gn_gamma"], prep["gn_beta"],
                               prep["w_qkv"], prep["b_qkv"],
                               prep["w_proj"], prep["b_proj"],
                               scale=scale, n=n, tq=tq)
    else:
        # Split path for large HW: streaming GN stats -> GN+QKV -> flash attention.
        gn_tile = _pick_tile(HW, 1024)
        mean, inv = gn_stats(xf, fold, fold_t, gn_tile, n)
        qkv = gn_qkv(xf, mean, inv, prep["gn_gamma"], prep["gn_beta"],
                     prep["w_qkv"], prep["b_qkv"], gn_tile)
        tk = _pick_tile(HW, 256)
        out = flash_attn_proj_res(qkv, xf, prep["w_proj"], prep["b_proj"], scale, tq, tk)

    return jnp.transpose(out.reshape(B, H, W, C), (0, 3, 1, 2))   # back to NCHW


# ------------------------- parameters & reference ---------------------------

def init_params(key, C):
    ks = jax.random.split(key, 4)

    def xavier(k, fan_in, fan_out, gain=1.0):
        bound = gain * math.sqrt(6.0 / (fan_in + fan_out))
        return jax.random.uniform(k, (fan_in, fan_out), jnp.float32, -bound, bound)

    # weights are (Cin, Cout) == conv.weight[:, :, 0, 0].T for the 1x1 convs.
    # NOTE: PyTorch re-inits proj with gain=1e-5; we use gain=1.0 for the test
    # weights so the numeric check actually exercises the attention path
    # (forward math is identical — init scale is just test data).
    return dict(
        gn_gamma=jnp.ones((1, C), jnp.float32),
        gn_beta=jnp.zeros((1, C), jnp.float32),
        wq=xavier(ks[0], C, C), bq=jnp.zeros((1, C), jnp.float32),
        wk=xavier(ks[1], C, C), bk=jnp.zeros((1, C), jnp.float32),
        wv=xavier(ks[2], C, C), bv=jnp.zeros((1, C), jnp.float32),
        wp=xavier(ks[3], C, C), bp=jnp.zeros((1, C), jnp.float32),
    )


def prepare_params(p):
    """Fuse q/k/v weights into one (C, 3C) bf16 matrix once (outside the jitted forward)."""
    return dict(
        gn_gamma=p["gn_gamma"], gn_beta=p["gn_beta"],
        w_qkv=jnp.concatenate([p["wq"], p["wk"], p["wv"]], axis=1).astype(jnp.bfloat16),
        b_qkv=jnp.concatenate([p["bq"], p["bk"], p["bv"]], axis=1),
        w_proj=p["wp"].astype(jnp.bfloat16), b_proj=p["bp"],
    )


def ref_forward(x_nchw, params):
    x = jnp.transpose(x_nchw, (0, 2, 3, 1))
    B, H, W, C = x.shape
    cs = C // GROUPS
    xg = x.reshape(B, H, W, GROUPS, cs)
    mean = xg.mean(axis=(1, 2, 4), keepdims=True)
    var = jnp.mean((xg - mean) ** 2, axis=(1, 2, 4), keepdims=True)
    hn = ((xg - mean) / jnp.sqrt(var + EPS)).reshape(B, H, W, C)
    hn = hn * params["gn_gamma"].reshape(1, 1, 1, C) + params["gn_beta"].reshape(1, 1, 1, C)
    hf = hn.reshape(B, H * W, C)
    q = hf @ params["wq"] + params["bq"]
    k = hf @ params["wk"] + params["bk"]
    v = hf @ params["wv"] + params["bv"]
    w = jax.nn.softmax((q @ jnp.swapaxes(k, 1, 2)) * (float(C) ** -0.5), axis=-1)
    h = w @ v
    h = h @ params["wp"] + params["bp"]
    out = x.reshape(B, H * W, C) + h
    return jnp.transpose(out.reshape(B, H, W, C), (0, 3, 1, 2))


# ---------------------------------- main -------------------------------------

if __name__ == "__main__":
    B, C, H, W = 2, 128, 16, 16          # GroupNorm(32, C) needs C % 32 == 0
    key = jax.random.PRNGKey(0)
    kx, kp = jax.random.split(key)

    x = jax.random.normal(kx, (B, C, H, W), jnp.float32)   # NCHW, like PyTorch
    raw = init_params(kp, C)
    prep = prepare_params(raw)

    fwd = jax.jit(attn_block_forward, static_argnames=("force_split",))

    out_fused = jax.block_until_ready(fwd(x, prep))                     # fully-fused path
    out_split = jax.block_until_ready(fwd(x, prep, force_split=True))   # split fallback path
    ref = ref_forward(x, raw)

    assert out_fused.shape == (B, C, H, W)
    assert bool(jnp.all(jnp.isfinite(out_fused)))
    assert bool(jnp.allclose(out_fused, ref, atol=5e-2, rtol=5e-2))
    assert bool(jnp.allclose(out_split, ref, atol=5e-2, rtol=5e-2))

    print("KERNEL_OK")
</pallas_src>

<mosaic_0001>
module attributes {stable_mosaic.version = 11 : i64} {
  func.func @_fused_kernel(%arg0: i32, %arg1: i32, %arg2: memref<1x256x128xf32, #tpu.memory_space<vmem>>, %arg3: memref<128x32xf32, #tpu.memory_space<vmem>>, %arg4: memref<32x128xf32, #tpu.memory_space<vmem>>, %arg5: memref<1x128xf32, #tpu.memory_space<vmem>>, %arg6: memref<1x128xf32, #tpu.memory_space<vmem>>, %arg7: memref<128x384xbf16, #tpu.memory_space<vmem>>, %arg8: memref<1x384xf32, #tpu.memory_space<vmem>>, %arg9: memref<128x128xbf16, #tpu.memory_space<vmem>>, %arg10: memref<1x128xf32, #tpu.memory_space<vmem>>, %arg11: memref<1x256x128xf32, #tpu.memory_space<vmem>>, %arg12: memref<256x128xbf16, #tpu.memory_space<vmem>>, %arg13: memref<256x128xbf16, #tpu.memory_space<vmem>>, %arg14: memref<256x128xbf16, #tpu.memory_space<vmem>>) attributes {dimension_semantics = [#tpu.dimension_semantics<parallel>, #tpu.dimension_semantics<arbitrary>], iteration_bounds = array<i64: 2, 1>, scalar_prefetch = 0 : i64, scratch_operands = 3 : i64, tpu.core_type = #tpu.core_type<tc>, window_params = [{transform_indices = @transform_0, window_bounds = array<i64: 1, 256, 128>}, {pipeline_mode = #tpu.pipeline_mode<synchronous>, transform_indices = @transform_1, window_bounds = array<i64: 128, 32>}, {pipeline_mode = #tpu.pipeline_mode<synchronous>, transform_indices = @transform_2, window_bounds = array<i64: 32, 128>}, {pipeline_mode = #tpu.pipeline_mode<synchronous>, transform_indices = @transform_3, window_bounds = array<i64: 1, 128>}, {pipeline_mode = #tpu.pipeline_mode<synchronous>, transform_indices = @transform_4, window_bounds = array<i64: 1, 128>}, {pipeline_mode = #tpu.pipeline_mode<synchronous>, transform_indices = @transform_5, window_bounds = array<i64: 128, 384>}, {pipeline_mode = #tpu.pipeline_mode<synchronous>, transform_indices = @transform_6, window_bounds = array<i64: 1, 384>}, {pipeline_mode = #tpu.pipeline_mode<synchronous>, transform_indices = @transform_7, window_bounds = array<i64: 128, 128>}, {pipeline_mode = #tpu.pipeline_mode<synchronous>, transform_indices = @transform_8, window_bounds = array<i64: 1, 128>}, {transform_indices = @transform_9, window_bounds = array<i64: 1, 256, 128>}]} {
    %c0_i32 = arith.constant 0 : i32
    %0 = arith.cmpi eq, %arg1, %c0_i32 : i32
    %1 = arith.extui %0 : i1 to i32
    %c0_i32_0 = arith.constant 0 : i32
    %2 = arith.cmpi ne, %1, %c0_i32_0 : i32
    scf.if %2 {
      %c0_19 = arith.constant 0 : index
      %c0_20 = arith.constant 0 : index
      %c0_21 = arith.constant 0 : index
      %36 = vector.load %arg2[%c0_19, %c0_20, %c0_21] : memref<1x256x128xf32, #tpu.memory_space<vmem>>, vector<1x256x128xf32>
      %37 = vector.shape_cast %36 : vector<1x256x128xf32> to vector<256x128xf32>
      %cst_22 = arith.constant dense<0.000000e+00> : vector<128xf32>
      %38 = vector.multi_reduction <add>, %37, %cst_22 [0] : vector<256x128xf32> to vector<128xf32>
      %39 = vector.shape_cast %38 : vector<128xf32> to vector<1x128xf32>
      %c0_23 = arith.constant 0 : index
      %c0_24 = arith.constant 0 : index
      %40 = vector.load %arg3[%c0_23, %c0_24] : memref<128x32xf32, #tpu.memory_space<vmem>>, vector<128x32xf32>
      %cst_25 = arith.constant dense<0.000000e+00> : vector<1x32xf32>
      %41 = tpu.matmul %39, %40, %cst_25 {dimension_numbers = #tpu.dot_dimension_numbers<[1], [0], [0], [1], [0, 0, 1, 1], [], []>} : vector<1x128xf32>, vector<128x32xf32>, vector<1x32xf32> -> vector<1x32xf32>
      %cst_26 = arith.constant 9.765625E-4 : f32
      %42 = vector.broadcast %cst_26 : f32 to vector<1x32xf32>
      %43 = arith.mulf %41, %42 : vector<1x32xf32>
      %c0_27 = arith.constant 0 : index
      %c0_28 = arith.constant 0 : index
      %44 = vector.load %arg4[%c0_27, %c0_28] : memref<32x128xf32, #tpu.memory_space<vmem>>, vector<32x128xf32>
      %cst_29 = arith.constant dense<0.000000e+00> : vector<1x128xf32>
      %45 = tpu.matmul %43, %44, %cst_29 {dimension_numbers = #tpu.dot_dimension_numbers<[1], [0], [0], [1], [0, 0, 1, 1], [], []>} : vector<1x32xf32>, vector<32x128xf32>, vector<1x128xf32> -> vector<1x128xf32>
      %46 = vector.broadcast %45 : vector<1x128xf32> to vector<256x128xf32>
      %47 = arith.subf %37, %46 : vector<256x128xf32>
      %48 = arith.mulf %47, %47 : vector<256x128xf32>
      %cst_30 = arith.constant dense<0.000000e+00> : vector<128xf32>
      %49 = vector.multi_reduction <add>, %48, %cst_30 [0] : vector<256x128xf32> to vector<128xf32>
      %50 = vector.shape_cast %49 : vector<128xf32> to vector<1x128xf32>
      %c0_31 = arith.constant 0 : index
      %c0_32 = arith.constant 0 : index
      %51 = vector.load %arg3[%c0_31, %c0_32] : memref<128x32xf32, #tpu.memory_space<vmem>>, vector<128x32xf32>
      %cst_33 = arith.constant dense<0.000000e+00> : vector<1x32xf32>
      %52 = tpu.matmul %50, %51, %cst_33 {dimension_numbers = #tpu.dot_dimension_numbers<[1], [0], [0], [1], [0, 0, 1, 1], [], []>} : vector<1x128xf32>, vector<128x32xf32>, vector<1x32xf32> -> vector<1x32xf32>
      %cst_34 = arith.constant 9.765625E-4 : f32
      %53 = vector.broadcast %cst_34 : f32 to vector<1x32xf32>
      %54 = arith.mulf %52, %53 : vector<1x32xf32>
      %cst_35 = arith.constant 9.99999974E-6 : f32
      %55 = vector.broadcast %cst_35 : f32 to vector<1x32xf32>
      %56 = arith.addf %54, %55 : vector<1x32xf32>
      %57 = math.rsqrt %56 : vector<1x32xf32>
      %c0_36 = arith.constant 0 : index
      %c0_37 = arith.constant 0 : index
      %58 = vector.load %arg4[%c0_36, %c0_37] : memref<32x128xf32, #tpu.memory_space<vmem>>, vector<32x128xf32>
      %cst_38 = arith.constant dense<0.000000e+00> : vector<1x128xf32>
      %59 = tpu.matmul %57, %58, %cst_38 {dimension_numbers = #tpu.dot_dimension_numbers<[1], [0], [0], [1], [0, 0, 1, 1], [], []>} : vector<1x32xf32>, vector<32x128xf32>, vector<1x128xf32> -> vector<1x128xf32>
      %60 = vector.broadcast %59 : vector<1x128xf32> to vector<256x128xf32>
      %61 = arith.mulf %47, %60 : vector<256x128xf32>
      %c0_39 = arith.constant 0 : index
      %c0_40 = arith.constant 0 : index
      %62 = vector.load %arg5[%c0_39, %c0_40] : memref<1x128xf32, #tpu.memory_space<vmem>>, vector<1x128xf32>
      %63 = vector.broadcast %62 : vector<1x128xf32> to vector<256x128xf32>
      %64 = arith.mulf %61, %63 : vector<256x128xf32>
      %c0_41 = arith.constant 0 : index
      %c0_42 = arith.constant 0 : index
      %65 = vector.load %arg6[%c0_41, %c0_42] : memref<1x128xf32, #tpu.memory_space<vmem>>, vector<1x128xf32>
      %66 = vector.broadcast %65 : vector<1x128xf32> to vector<256x128xf32>
      %67 = arith.addf %64, %66 : vector<256x128xf32>
      %68 = arith.truncf %67 : vector<256x128xf32> to vector<256x128xbf16>
      %c0_43 = arith.constant 0 : index
      %c0_44 = arith.constant 0 : index
      %69 = vector.load %arg7[%c0_43, %c0_44] : memref<128x384xbf16, #tpu.memory_space<vmem>>, vector<128x384xbf16>
      %cst_45 = arith.constant dense<0.000000e+00> : vector<256x384xf32>
      %70 = tpu.matmul %68, %69, %cst_45 {dimension_numbers = #tpu.dot_dimension_numbers<[1], [0], [0], [1], [0, 0, 1, 1], [], []>} : vector<256x128xbf16>, vector<128x384xbf16>, vector<256x384xf32> -> vector<256x384xf32>
      %c0_46 = arith.constant 0 : index
      %c0_47 = arith.constant 0 : index
      %71 = vector.load %arg8[%c0_46, %c0_47] : memref<1x384xf32, #tpu.memory_space<vmem>>, vector<1x384xf32>
      %72 = vector.broadcast %71 : vector<1x384xf32> to vector<256x384xf32>
      %73 = arith.addf %70, %72 : vector<256x384xf32>
      %74 = vector.extract_strided_slice %73 {offsets = [0, 0], sizes = [256, 128], strides = [1, 1]} : vector<256x384xf32> to vector<256x128xf32>
      %75 = arith.truncf %74 : vector<256x128xf32> to vector<256x128xbf16>
      %c0_48 = arith.constant 0 : index
      %c0_49 = arith.constant 0 : index
      %76 = vector.load %arg12[%c0_48, %c0_49] : memref<256x128xbf16, #tpu.memory_space<vmem>>, vector<256x128xbf16>
      tpu.vector_store %arg12[%c0_48, %c0_49], %75 {strides = array<i32>} : memref<256x128xbf16, #tpu.memory_space<vmem>>, vector<256x128xbf16>,
      %77 = vector.extract_strided_slice %73 {offsets = [0, 128], sizes = [256, 128], strides = [1, 1]} : vector<256x384xf32> to vector<256x128xf32>
      %78 = arith.truncf %77 : vector<256x128xf32> to vector<256x128xbf16>
      %c0_50 = arith.constant 0 : index
      %c0_51 = arith.constant 0 : index
      %79 = vector.load %arg13[%c0_50, %c0_51] : memref<256x128xbf16, #tpu.memory_space<vmem>>, vector<256x128xbf16>
      tpu.vector_store %arg13[%c0_50, %c0_51], %78 {strides = array<i32>} : memref<256x128xbf16, #tpu.memory_space<vmem>>, vector<256x128xbf16>,
      %80 = vector.extract_strided_slice %73 {offsets = [0, 256], sizes = [256, 128], strides = [1, 1]} : vector<256x384xf32> to vector<256x128xf32>
      %81 = arith.truncf %80 : vector<256x128xf32> to vector<256x128xbf16>
      %c0_52 = arith.constant 0 : index
      %c0_53 = arith.constant 0 : index
      %82 = vector.load %arg14[%c0_52, %c0_53] : memref<256x128xbf16, #tpu.memory_space<vmem>>, vector<256x128xbf16>
      tpu.vector_store %arg14[%c0_52, %c0_53], %81 {strides = array<i32>} : memref<256x128xbf16, #tpu.memory_space<vmem>>, vector<256x128xbf16>,
    } else {
    }
    %c256_i32 = arith.constant 256 : i32
    %3 = arith.muli %arg1, %c256_i32 : i32
    %4 = tpu.assume_multiple %3, 256 : i32
    %5 = arith.index_cast %4 : i32 to index
    %c0 = arith.constant 0 : index
    %6 = vector.load %arg12[%5, %c0] : memref<256x128xbf16, #tpu.memory_space<vmem>>, vector<256x128xbf16>
    %c0_1 = arith.constant 0 : index
    %c0_2 = arith.constant 0 : index
    %7 = vector.load %arg13[%c0_1, %c0_2] : memref<256x128xbf16, #tpu.memory_space<vmem>>, vector<256x128xbf16>
    %cst = arith.constant dense<0.000000e+00> : vector<256x256xf32>
    %8 = tpu.matmul %6, %7, %cst {dimension_numbers = #tpu.dot_dimension_numbers<[1], [1], [0], [0], [0, 0, 1, 0], [], []>} : vector<256x128xbf16>, vector<256x128xbf16>, vector<256x256xf32> -> vector<256x256xf32>
    %cst_3 = arith.constant 0.0883883461 : f32
    %9 = vector.broadcast %cst_3 : f32 to vector<256x256xf32>
    %10 = arith.mulf %8, %9 : vector<256x256xf32>
    %cst_4 = arith.constant dense<0xFF800000> : vector<256xf32>
    %11 = vector.multi_reduction <maximumf>, %10, %cst_4 [1] : vector<256x256xf32> to vector<256xf32>
    %12 = vector.shape_cast %11 : vector<256xf32> to vector<256x1xf32>
    %13 = vector.broadcast %12 : vector<256x1xf32> to vector<256x256xf32>
    %14 = arith.subf %10, %13 : vector<256x256xf32>
    %15 = math.exp %14 : vector<256x256xf32>
    %16 = arith.truncf %15 : vector<256x256xf32> to vector<256x256xbf16>
    %c0_5 = arith.constant 0 : index
    %c0_6 = arith.constant 0 : index
    %17 = vector.load %arg14[%c0_5, %c0_6] : memref<256x128xbf16, #tpu.memory_space<vmem>>, vector<256x128xbf16>
    %cst_7 = arith.constant dense<0.000000e+00> : vector<256x128xf32>
    %18 = tpu.matmul %16, %17, %cst_7 {dimension_numbers = #tpu.dot_dimension_numbers<[1], [0], [0], [1], [0, 0, 1, 1], [], []>} : vector<256x256xbf16>, vector<256x128xbf16>, vector<256x128xf32> -> vector<256x128xf32>
    %cst_8 = arith.constant dense<0.000000e+00> : vector<256xf32>
    %19 = vector.multi_reduction <add>, %15, %cst_8 [1] : vector<256x256xf32> to vector<256xf32>
    %20 = vector.shape_cast %19 : vector<256xf32> to vector<256x1xf32>
    %21 = vector.broadcast %20 : vector<256x1xf32> to vector<256x128xf32>
    %22 = arith.divf %18, %21 : vector<256x128xf32>
    %23 = arith.truncf %22 : vector<256x128xf32> to vector<256x128xbf16>
    %c0_9 = arith.constant 0 : index
    %c0_10 = arith.constant 0 : index
    %24 = vector.load %arg9[%c0_9, %c0_10] : memref<128x128xbf16, #tpu.memory_space<vmem>>, vector<128x128xbf16>
    %cst_11 = arith.constant dense<0.000000e+00> : vector<256x128xf32>
    %25 = tpu.matmul %23, %24, %cst_11 {dimension_numbers = #tpu.dot_dimension_numbers<[1], [0], [0], [1], [0, 0, 1, 1], [], []>} : vector<256x128xbf16>, vector<128x128xbf16>, vector<256x128xf32> -> vector<256x128xf32>
    %c0_12 = arith.constant 0 : index
    %c0_13 = arith.constant 0 : index
    %26 = vector.load %arg10[%c0_12, %c0_13] : memref<1x128xf32, #tpu.memory_space<vmem>>, vector<1x128xf32>
    %27 = vector.broadcast %26 : vector<1x128xf32> to vector<256x128xf32>
    %28 = arith.addf %25, %27 : vector<256x128xf32>
    %c0_14 = arith.constant 0 : index
    %29 = arith.index_cast %4 : i32 to index
    %c0_15 = arith.constant 0 : index
    %30 = vector.load %arg2[%c0_14, %29, %c0_15] : memref<1x256x128xf32, #tpu.memory_space<vmem>>, vector<1x256x128xf32>
    %31 = vector.shape_cast %30 : vector<1x256x128xf32> to vector<256x128xf32>
    %32 = arith.addf %31, %28 : vector<256x128xf32>
    %c0_16 = arith.constant 0 : index
    %c0_17 = arith.constant 0 : index
    %c0_18 = arith.constant 0 : index
    %33 = vector.load %arg11[%c0_16, %c0_17, %c0_18] : memref<1x256x128xf32, #tpu.memory_space<vmem>>, vector<1x256x128xf32>
    %34 = vector.shape_cast %33 : vector<1x256x128xf32> to vector<256x128xf32>
    %35 = vector.shape_cast %32 : vector<256x128xf32> to vector<1x256x128xf32>
    tpu.vector_store %arg11[%c0_16, %c0_17, %c0_18], %35 {strides = array<i32>} : memref<1x256x128xf32, #tpu.memory_space<vmem>>, vector<1x256x128xf32>,
    return
  }
  func.func @transform_0(%arg0: i32, %arg1: i32) -> (i32, i32, i32) {
    %c0_i32 = arith.constant 0 : i32
    %c0_i32_0 = arith.constant 0 : i32
    %c0_i32_1 = arith.constant 0 : i32
    return %arg0, %c0_i32, %c0_i32_0 : i32, i32, i32
  }
  func.func @transform_1(%arg0: i32, %arg1: i32) -> (i32, i32) {
    %c0_i32 = arith.constant 0 : i32
    %c0_i32_0 = arith.constant 0 : i32
    %c0_i32_1 = arith.constant 0 : i32
    return %c0_i32, %c0_i32_0 : i32, i32
  }
  func.func @transform_2(%arg0: i32, %arg1: i32) -> (i32, i32) {
    %c0_i32 = arith.constant 0 : i32
    %c0_i32_0 = arith.constant 0 : i32
    %c0_i32_1 = arith.constant 0 : i32
    return %c0_i32, %c0_i32_0 : i32, i32
  }
  func.func @transform_3(%arg0: i32, %arg1: i32) -> (i32, i32) {
    %c0_i32 = arith.constant 0 : i32
    %c0_i32_0 = arith.constant 0 : i32
    %c0_i32_1 = arith.constant 0 : i32
    return %c0_i32, %c0_i32_0 : i32, i32
  }
  func.func @transform_4(%arg0: i32, %arg1: i32) -> (i32, i32) {
    %c0_i32 = arith.constant 0 : i32
    %c0_i32_0 = arith.constant 0 : i32
    %c0_i32_1 = arith.constant 0 : i32
    return %c0_i32, %c0_i32_0 : i32, i32
  }
  func.func @transform_5(%arg0: i32, %arg1: i32) -> (i32, i32) {
    %c0_i32 = arith.constant 0 : i32
    %c0_i32_0 = arith.constant 0 : i32
    %c0_i32_1 = arith.constant 0 : i32
    return %c0_i32, %c0_i32_0 : i32, i32
  }
  func.func @transform_6(%arg0: i32, %arg1: i32) -> (i32, i32) {
    %c0_i32 = arith.constant 0 : i32
    %c0_i32_0 = arith.constant 0 : i32
    %c0_i32_1 = arith.constant 0 : i32
    return %c0_i32, %c0_i32_0 : i32, i32
  }
  func.func @transform_7(%arg0: i32, %arg1: i32) -> (i32, i32) {
    %c0_i32 = arith.constant 0 : i32
    %c0_i32_0 = arith.constant 0 : i32
    %c0_i32_1 = arith.constant 0 : i32
    return %c0_i32, %c0_i32_0 : i32, i32
  }
  func.func @transform_8(%arg0: i32, %arg1: i32) -> (i32, i32) {
    %c0_i32 = arith.constant 0 : i32
    %c0_i32_0 = arith.constant 0 : i32
    %c0_i32_1 = arith.constant 0 : i32
    return %c0_i32, %c0_i32_0 : i32, i32
  }
  func.func @transform_9(%arg0: i32, %arg1: i32) -> (i32, i32, i32) {
    %c0_i32 = arith.constant 0 : i32
    %c0_i32_0 = arith.constant 0 : i32
    return %arg0, %arg1, %c0_i32 : i32, i32, i32
  }
}

</mosaic_0001>

<llo_original>
// kernel: attn_block_forward.1
$region0: #{attn_block_forward.1}
  #allocation0 [shape = 'u32[]', space=smem, size = 0x4, offset = 0x4, fixed_abs, tag = 'smem constant byte address 0x4 - core index']
  #allocation1 [shape = 'u32[144,128]{1,0:T(1,128)}', space=vmem, size = 0x12000, scoped, tag = 'internal scratch']
  #allocation2 [shape = 'bf16[256,128]{1,0:T(16,128)(2,1)}', space=vmem, size = 0x10000, scoped, tag = 'scratch operand']
  #allocation3 [shape = 'bf16[256,128]{1,0:T(16,128)(2,1)}', space=vmem, size = 0x10000, scoped, tag = 'scratch operand']
  #allocation4 [shape = 'bf16[256,128]{1,0:T(16,128)(2,1)}', space=vmem, size = 0x10000, scoped, tag = 'scratch operand']
  %s0 = inlined_call_operand.hbm [shape: f32[2,256,128], index: 0, kind: input, shape index: {}]
  %s1 = inlined_call_operand.vmem [shape: f32[128,32], index: 1, kind: input, shape index: {}]
  %s2 = inlined_call_operand.vmem [shape: f32[32,128], index: 2, kind: input, shape index: {}]
  %s3 = inlined_call_operand.hbm [shape: f32[1,128], index: 3, kind: input, shape index: {}]
  %s4 = inlined_call_operand.hbm [shape: f32[1,128], index: 4, kind: input, shape index: {}]
  %s5 = inlined_call_operand.vmem [shape: bf16[128,384], index: 5, kind: input, shape index: {}]
  %s6 = inlined_call_operand.hbm [shape: f32[1,384], index: 6, kind: input, shape index: {}]
  %s7 = inlined_call_operand.hbm [shape: bf16[128,128], index: 7, kind: input, shape index: {}]
  %s8 = inlined_call_operand.hbm [shape: f32[1,128], index: 8, kind: input, shape index: {}]
  %s9 = inlined_call_operand.hbm [shape: f32[2,256,128], index: 9, kind: output, shape index: {}]
  %s10 = sld [smem:[#allocation0]]
  $region97: #{attn_block_forward.1} parent=0
    _
  %s12 = ssub.s32 1, %s10
  %s13 = scalar_select 0, %s12, %s10
  $region1: #{attn_block_forward.1} parent=0
    #allocation5 [shape = 'u8[262144]{0}', space=vmem, size = 0x40000, scoped, tag = 'input window, operand 0']
    #allocation6 [shape = 's32[2]{0}', space=sflag, size = 0x8, scoped, tag = 'scoped memory for attn_block_forward.1']
    #allocation7 [shape = 's32[2]{0}', space=sflag, size = 0x8, scoped, tag = 'scoped memory for attn_block_forward.1']
    #allocation8 [shape = 'u8[512]{0}', space=vmem, size = 0x400, scoped, tag = 'input window, operand 3, single buffered']
    #allocation9 [shape = 's32[1]{0}', space=sflag, size = 0x4, scoped, tag = 'scoped memory for attn_block_forward.1']
    #allocation10 [shape = 'u8[512]{0}', space=vmem, size = 0x400, scoped, tag = 'input window, operand 4, single buffered']
    #allocation11 [shape = 'u8[1536]{0}', space=vmem, size = 0x800, scoped, tag = 'input window, operand 6, single buffered']
    #allocation12 [shape = 's32[1]{0}', space=sflag, size = 0x4, scoped, tag = 'scoped memory for attn_block_forward.1']
    #allocation13 [shape = 'u8[32768]{0}', space=vmem, size = 0x8000, scoped, tag = 'input window, operand 7, single buffered']
    #allocation14 [shape = 'u8[512]{0}', space=vmem, size = 0x400, scoped, tag = 'input window, operand 8, single buffered']
    #allocation15 [shape = 's32[1]{0}', space=sflag, size = 0x4, scoped, tag = 'scoped memory for attn_block_forward.1']
    #allocation16 [shape = 'u8[262144]{0}', space=vmem, size = 0x40000, scoped, tag = 'output window, operand 0']
    %14 = vsyncpa [#allocation6], 0
    %s15 = scalar_lea.sflag [#allocation6], 1
    %16 = vsyncpa %s15, 0
    %17 = vsyncpa [#allocation9], 0
    %18 = vsyncpa [#allocation12], 0
    %19 = vsyncpa [#allocation15], 0
    %20 = vsyncpa [#allocation7], 0
    %s21 = scalar_lea.sflag [#allocation7], 1
    %22 = vsyncpa %s21, 0
    loop: start=0, step=1, limit=4
    $region2: #{attn_block_forward.1} parent=1 // loop_pre_header
      _
    $region3: #{attn_block_forward.1} parent=1 // loop_header
      %s24 = sphi 0, %s28
      %p25 = scmp.ge.s32.totalorder %s24, 4
      %s31 = sphi 0, %s43
      %s32 = sphi 0, %s39
      %s33 = sphi 0, %s31
      %s34 = sphi 0, %s32
      %s35 = sphi 0, %s33
      %s36 = sphi 0, %s34
      %s46 = sphi 0, %s48
      %s49 = sphi 0, %s46
      %s50 = sphi 0, %s49
      %s66 = sphi 0, %s50
      %s70 = sphi 0, %s70
      %s72 = sphi 0, %s70
      %s73 = sphi 0, %s72
      %s87 = sphi 0, %s73
      %s91 = sphi 0, %s91
      %s93 = sphi 0, %s91
      %s94 = sphi 0, %s93
      %s108 = sphi 0, %s94
      %s112 = sphi 0, %s112
      %s114 = sphi 0, %s112
      %s115 = sphi 0, %s114
      %s129 = sphi 0, %s115
      %s133 = sphi 0, %s133
      %s135 = sphi 0, %s133
      %s136 = sphi 0, %s135
      %s150 = sphi 0, %s136
      %s154 = sphi 0, %s154
      %s156 = sphi 0, %s154
      %s157 = sphi 0, %s156
      %s171 = sphi 0, %s157
      %s175 = sphi 0, %s175
      %s177 = sphi 0, %s175
      %s178 = sphi 0, %s177
      %s192 = sphi 0, %s178
      %s196 = sphi 0, %s196
      %s198 = sphi 0, %s196
      %s199 = sphi 0, %s198
      %s213 = sphi 0, %s199
      %s217 = sphi 0, %s217
      %s219 = sphi 0, %s217
      %s220 = sphi 0, %s219
      %s234 = sphi 0, %s220
      %s242 = sphi 0, %s244
      %s245 = sphi 0, %s242
      %s246 = sphi 0, %s245
      %s262 = sphi 0, %s246
    $region4: #{attn_block_forward.1} parent=1 // loop_header_branch
      %27 = sbr.rel (%p25) target = $region8
    $region5: #{attn_block_forward.1} parent=1 // loop_body
      %s29 = ssub.s32 %s24, 1
      %s30 = ssub.s32 %s24, 2
      %s37 = sadd.s32 1, %s32
      %p38 = scmp.ge.s32.totalorder %s37, 1
      %s39 = scalar_select %p38, 0, %s37
      %s40 = sadd.s32 1, %s31
      %s41 = scalar_select %p38, %s40, %s31
      %p42 = scmp.ge.s32.totalorder %s41, 2
      %s43 = scalar_select %p42, 0, %s41
      %s44 = ssub.s32 %s31, %s43
      %p45 = scmp.eq.s32.totalorder %s44, 0
      %s47 = sadd.s32 %s46, 1
      %s48 = scalar_select %p45, %s46, %s47
      %p51 = pneg %p45
      %p52 = scmp.eq.s32.totalorder %s24, 1
      %p53 = por %p51, %p52
      %p54 = scmp.ne.s32.totalorder %s46, %s49
      %p55 = scmp.eq.s32.totalorder %s24, 0
      %p56 = por %p54, %p55
      %p57 = scmp.ne.s32.totalorder %s46, %s49
      %p58 = scmp.eq.s32.totalorder %s29, 1
      %p59 = por %p57, %p58
      %p60 = scmp.ne.s32.totalorder %s49, %s50
      %p61 = scmp.eq.s32.totalorder %s29, 0
      %p62 = por %p60, %p61
      %p63 = scmp.ne.s32.totalorder %s49, %s50
      %p64 = scmp.eq.s32.totalorder %s30, 1
      %p65 = por %p63, %p64
      %p67 = scmp.ne.s32.totalorder %s50, %s66
      %p68 = scmp.eq.s32.totalorder %s30, 0
      %p69 = por %p67, %p68
      %s71 = sadd.s32 %s70, 1
      %p74 = scmp.eq.s32.totalorder %s24, 1
      %p75 = scmp.ne.s32.totalorder %s70, %s72
      %p76 = scmp.eq.s32.totalorder %s24, 0
      %p77 = por %p75, %p76
      %p78 = scmp.ne.s32.totalorder %s70, %s72
      %p79 = scmp.eq.s32.totalorder %s29, 1
      %p80 = por %p78, %p79
      %p81 = scmp.ne.s32.totalorder %s72, %s73
      %p82 = scmp.eq.s32.totalorder %s29, 0
      %p83 = por %p81, %p82
      %p84 = scmp.ne.s32.totalorder %s72, %s73
      %p85 = scmp.eq.s32.totalorder %s30, 1
      %p86 = por %p84, %p85
      %p88 = scmp.ne.s32.totalorder %s73, %s87
      %p89 = scmp.eq.s32.totalorder %s30, 0
      %p90 = por %p88, %p89
      %s92 = sadd.s32 %s91, 1
      %p95 = scmp.eq.s32.totalorder %s24, 1
      %p96 = scmp.ne.s32.totalorder %s91, %s93
      %p97 = scmp.eq.s32.totalorder %s24, 0
      %p98 = por %p96, %p97
      %p99 = scmp.ne.s32.totalorder %s91, %s93
      %p100 = scmp.eq.s32.totalorder %s29, 1
      %p101 = por %p99, %p100
      %p102 = scmp.ne.s32.totalorder %s93, %s94
      %p103 = scmp.eq.s32.totalorder %s29, 0
      %p104 = por %p102, %p103
      %p105 = scmp.ne.s32.totalorder %s93, %s94
      %p106 = scmp.eq.s32.totalorder %s30, 1
      %p107 = por %p105, %p106
      %p109 = scmp.ne.s32.totalorder %s94, %s108
      %p110 = scmp.eq.s32.totalorder %s30, 0
      %p111 = por %p109, %p110
      %s113 = sadd.s32 %s112, 1
      %p116 = scmp.eq.s32.totalorder %s24, 1
      %p117 = scmp.ne.s32.totalorder %s112, %s114
      %p118 = scmp.eq.s32.totalorder %s24, 0
      %p119 = por %p117, %p118
      %p120 = scmp.ne.s32.totalorder %s112, %s114
      %p121 = scmp.eq.s32.totalorder %s29, 1
      %p122 = por %p120, %p121
      %p123 = scmp.ne.s32.totalorder %s114, %s115
      %p124 = scmp.eq.s32.totalorder %s29, 0
      %p125 = por %p123, %p124
      %p126 = scmp.ne.s32.totalorder %s114, %s115
      %p127 = scmp.eq.s32.totalorder %s30, 1
      %p128 = por %p126, %p127
      %p130 = scmp.ne.s32.totalorder %s115, %s129
      %p131 = scmp.eq.s32.totalorder %s30, 0
      %p132 = por %p130, %p131
      %s134 = sadd.s32 %s133, 1
      %p137 = scmp.eq.s32.totalorder %s24, 1
      %p138 = scmp.ne.s32.totalorder %s133, %s135
      %p139 = scmp.eq.s32.totalorder %s24, 0
      %p140 = por %p138, %p139
      %p141 = scmp.ne.s32.totalorder %s133, %s135
      %p142 = scmp.eq.s32.totalorder %s29, 1
      %p143 = por %p141, %p142
      %p144 = scmp.ne.s32.totalorder %s135, %s136
      %p145 = scmp.eq.s32.totalorder %s29, 0
      %p146 = por %p144, %p145
      %p147 = scmp.ne.s32.totalorder %s135, %s136
      %p148 = scmp.eq.s32.totalorder %s30, 1
      %p149 = por %p147, %p148
      %p151 = scmp.ne.s32.totalorder %s136, %s150
      %p152 = scmp.eq.s32.totalorder %s30, 0
      %p153 = por %p151, %p152
      %s155 = sadd.s32 %s154, 1
      %p158 = scmp.eq.s32.totalorder %s24, 1
      %p159 = scmp.ne.s32.totalorder %s154, %s156
      %p160 = scmp.eq.s32.totalorder %s24, 0
      %p161 = por %p159, %p160
      %p162 = scmp.ne.s32.totalorder %s154, %s156
      %p163 = scmp.eq.s32.totalorder %s29, 1
      %p164 = por %p162, %p163
      %p165 = scmp.ne.s32.totalorder %s156, %s157
      %p166 = scmp.eq.s32.totalorder %s29, 0
      %p167 = por %p165, %p166
      %p168 = scmp.ne.s32.totalorder %s156, %s157
      %p169 = scmp.eq.s32.totalorder %s30, 1
      %p170 = por %p168, %p169
      %p172 = scmp.ne.s32.totalorder %s157, %s171
      %p173 = scmp.eq.s32.totalorder %s30, 0
      %p174 = por %p172, %p173
      %s176 = sadd.s32 %s175, 1
      %p179 = scmp.eq.s32.totalorder %s24, 1
      %p180 = scmp.ne.s32.totalorder %s175, %s177
      %p181 = scmp.eq.s32.totalorder %s24, 0
      %p182 = por %p180, %p181
      %p183 = scmp.ne.s32.totalorder %s175, %s177
      %p184 = scmp.eq.s32.totalorder %s29, 1
      %p185 = por %p183, %p184
      %p186 = scmp.ne.s32.totalorder %s177, %s178
      %p187 = scmp.eq.s32.totalorder %s29, 0
      %p188 = por %p186, %p187
      %p189 = scmp.ne.s32.totalorder %s177, %s178
      %p190 = scmp.eq.s32.totalorder %s30, 1
      %p191 = por %p189, %p190
      %p193 = scmp.ne.s32.totalorder %s178, %s192
      %p194 = scmp.eq.s32.totalorder %s30, 0
      %p195 = por %p193, %p194
      %s197 = sadd.s32 %s196, 1
      %p200 = scmp.eq.s32.totalorder %s24, 1
      %p201 = scmp.ne.s32.totalorder %s196, %s198
      %p202 = scmp.eq.s32.totalorder %s24, 0
      %p203 = por %p201, %p202
      %p204 = scmp.ne.s32.totalorder %s196, %s198
      %p205 = scmp.eq.s32.totalorder %s29, 1
      %p206 = por %p204, %p205
      %p207 = scmp.ne.s32.totalorder %s198, %s199
      %p208 = scmp.eq.s32.totalorder %s29, 0
      %p209 = por %p207, %p208
      %p210 = scmp.ne.s32.totalorder %s198, %s199
      %p211 = scmp.eq.s32.totalorder %s30, 1
      %p212 = por %p210, %p211
      %p214 = scmp.ne.s32.totalorder %s199, %s213
      %p215 = scmp.eq.s32.totalorder %s30, 0
      %p216 = por %p214, %p215
      %s218 = sadd.s32 %s217, 1
      %p221 = scmp.eq.s32.totalorder %s24, 1
      %p222 = scmp.ne.s32.totalorder %s217, %s219
      %p223 = scmp.eq.s32.totalorder %s24, 0
      %p224 = por %p222, %p223
      %p225 = scmp.ne.s32.totalorder %s217, %s219
      %p226 = scmp.eq.s32.totalorder %s29, 1
      %p227 = por %p225, %p226
      %p228 = scmp.ne.s32.totalorder %s219, %s220
      %p229 = scmp.eq.s32.totalorder %s29, 0
      %p230 = por %p228, %p229
      %p231 = scmp.ne.s32.totalorder %s219, %s220
      %p232 = scmp.eq.s32.totalorder %s30, 1
      %p233 = por %p231, %p232
      %p235 = scmp.ne.s32.totalorder %s220, %s234
      %p236 = scmp.eq.s32.totalorder %s30, 0
      %p237 = por %p235, %p236
      %s238 = ssub.s32 %s31, %s43
      %s239 = ssub.s32 %s32, %s39
      %s240 = sor.u32 %s238, %s239
      %p241 = scmp.eq.s32.totalorder %s240, 0
      %s243 = sadd.s32 %s242, 1
      %s244 = scalar_select %p241, %s242, %s243
      %p247 = pneg %p241
      %p248 = scmp.eq.s32.totalorder %s24, 1
      %p249 = por %p247, %p248
      %p250 = scmp.ne.s32.totalorder %s242, %s245
      %p251 = scmp.eq.s32.totalorder %s24, 0
      %p252 = por %p250, %p251
      %p253 = scmp.ne.s32.totalorder %s242, %s245
      %p254 = scmp.eq.s32.totalorder %s29, 1
      %p255 = por %p253, %p254
      %p256 = scmp.ne.s32.totalorder %s245, %s246
      %p257 = scmp.eq.s32.totalorder %s29, 0
      %p258 = por %p256, %p257
      %p259 = scmp.ne.s32.totalorder %s245, %s246
      %p260 = scmp.eq.s32.totalorder %s30, 1
      %p261 = por %p259, %p260
      %p263 = scmp.ne.s32.totalorder %s246, %s262
      %p264 = scmp.eq.s32.totalorder %s30, 0
      %p265 = por %p263, %p264
      %p266 = scmp.le.s32.totalorder 1, %s24
      %p267 = scmp.lt.s32.totalorder %s24, 3
      %p268 = pnand %p266, %p267
      %p269 = pneg %p268
      // Predicated region
      $region9: #{attn_block_forward.1} parent=5 // pred_check
        _
      $region10: #{attn_block_forward.1} parent=5 // pred_check_branch
        %271 = sbr.rel (%p268) target = $region12
      $region11: #{attn_block_forward.1} parent=5 // pred_region
        %s272 = ssub.s32 %s24, 1
        // Predicated region
        $region13: #{attn_block_forward.1} parent=11 // pred_check
          %p273 = pneg %p83
        $region14: #{attn_block_forward.1} parent=11 // pred_check_branch
          %275 = sbr.rel (%p273) target = $region16
        $region15: #{attn_block_forward.1} parent=11 // pred_region
          _
        $region16: #{attn_block_forward.1} parent=11 // pred_fallthru
          _
        // Predicated region
        $region17: #{attn_block_forward.1} parent=11 // pred_check
          %p276 = pneg %p104
        $region18: #{attn_block_forward.1} parent=11 // pred_check_branch
          %278 = sbr.rel (%p276) target = $region20
        $region19: #{attn_block_forward.1} parent=11 // pred_region
          _
        $region20: #{attn_block_forward.1} parent=11 // pred_fallthru
          _
        // Predicated region
        $region21: #{attn_block_forward.1} parent=11 // pred_check
          %p279 = pneg %p125
        $region22: #{attn_block_forward.1} parent=11 // pred_check_branch
          %281 = sbr.rel (%p279) target = $region24
        $region23: #{attn_block_forward.1} parent=11 // pred_region
          %s283 = ssub.s32 16, 16
          %284 = vsyncadd [#allocation9], %s283
          %s286 = sshll.u32 [#allocation8], 4
          %s287 = int_to_ptr.vmem [resolvable:$true] %s286
          %289 = dma.hbm_to_vmem [thread:$0]  %s3, 16, %s287, [#allocation9]
        $region24: #{attn_block_forward.1} parent=11 // pred_fallthru
          _
        // Predicated region
        $region25: #{attn_block_forward.1} parent=11 // pred_check
          %p290 = pneg %p146
        $region26: #{attn_block_forward.1} parent=11 // pred_check_branch
          %292 = sbr.rel (%p290) target = $region28
        $region27: #{attn_block_forward.1} parent=11 // pred_region
          %s294 = ssub.s32 16, 16
          %295 = vsyncadd [#allocation9], %s294
          %s297 = sshll.u32 [#allocation10], 4
          %s298 = int_to_ptr.vmem [resolvable:$true] %s297
          %300 = dma.hbm_to_vmem [thread:$0]  %s4, 16, %s298, [#allocation9]
        $region28: #{attn_block_forward.1} parent=11 // pred_fallthru
          _
        // Predicated region
        $region29: #{attn_block_forward.1} parent=11 // pred_check
          %p301 = pneg %p167
        $region30: #{attn_block_forward.1} parent=11 // pred_check_branch
          %303 = sbr.rel (%p301) target = $region32
        $region31: #{attn_block_forward.1} parent=11 // pred_region
          _
        $region32: #{attn_block_forward.1} parent=11 // pred_fallthru
          _
        // Predicated region
        $region33: #{attn_block_forward.1} parent=11 // pred_check
          %p304 = pneg %p188
        $region34: #{attn_block_forward.1} parent=11 // pred_check_branch
          %306 = sbr.rel (%p304) target = $region36
        $region35: #{attn_block_forward.1} parent=11 // pred_region
          %s308 = ssub.s32 48, 48
          %309 = vsyncadd [#allocation12], %s308
          %s311 = sshll.u32 [#allocation11], 4
          %s312 = int_to_ptr.vmem [resolvable:$true] %s311
          %314 = dma.hbm_to_vmem [thread:$0]  %s6, 48, %s312, [#allocation12]
        $region36: #{attn_block_forward.1} parent=11 // pred_fallthru
          _
        // Predicated region
        $region37: #{attn_block_forward.1} parent=11 // pred_check
          %p315 = pneg %p209
        $region38: #{attn_block_forward.1} parent=11 // pred_check_branch
          %317 = sbr.rel (%p315) target = $region40
        $region39: #{attn_block_forward.1} parent=11 // pred_region
          %s319 = ssub.s32 1024, 1024
          %320 = vsyncadd [#allocation12], %s319
          %s321 = sshll.u32 [#allocation13], 4
          %s322 = int_to_ptr.vmem [resolvable:$true] %s321
          %327 = dma.hbm_to_vmem [thread:$0]  %s7, 1024, %s322, [#allocation12], 64, 64, 4
        $region40: #{attn_block_forward.1} parent=11 // pred_fallthru
          _
        // Predicated region
        $region41: #{attn_block_forward.1} parent=11 // pred_check
          %p328 = pneg %p230
        $region42: #{attn_block_forward.1} parent=11 // pred_check_branch
          %330 = sbr.rel (%p328) target = $region44
        $region43: #{attn_block_forward.1} parent=11 // pred_region
          %s332 = ssub.s32 16, 16
          %333 = vsyncadd [#allocation15], %s332
          %s335 = sshll.u32 [#allocation14], 4
          %s336 = int_to_ptr.vmem [resolvable:$true] %s335
          %338 = dma.hbm_to_vmem [thread:$0]  %s8, 16, %s336, [#allocation15]
        $region44: #{attn_block_forward.1} parent=11 // pred_fallthru
          _
      $region12: #{attn_block_forward.1} parent=5 // pred_fallthru
        _
      %p339 = scmp.lt.s32.totalorder %s24, 2
      // Predicated region
      $region45: #{attn_block_forward.1} parent=5 // pred_check
        %p340 = pneg %p339
      $region46: #{attn_block_forward.1} parent=5 // pred_check_branch
        %342 = sbr.rel (%p340) target = $region48
      $region47: #{attn_block_forward.1} parent=5 // pred_region
        // Predicated region
        $region49: #{attn_block_forward.1} parent=47 // pred_check
          %p343 = pneg %p56
        $region50: #{attn_block_forward.1} parent=47 // pred_check_branch
          %345 = sbr.rel (%p343) target = $region52
        $region51: #{attn_block_forward.1} parent=47 // pred_region
          %s346 = sand.u32 %s46, 1
          %s347 = scalar_lea.sflag [#allocation6], %s346
          %s348 = sand.u32 %s46, 1
          %s349 = smul.addr %s348, 256
          %s350 = scalar_lea.vmem [#allocation5], %s349
          %s352 = ssub.s32 4096, 4096
          %353 = vsyncadd %s347, %s352
          %s354 = smul.addr %s31, 32
          %s355 = smul.addr %s354, 128
          %s356 = scalar_lea.hbm %s0, %s355
          %s357 = sshll.u32 %s350, 4
          %s358 = int_to_ptr.vmem [resolvable:$true] %s357
          %363 = dma.hbm_to_vmem [thread:$0]  %s356, 4096, %s358, %s347, 128, 128, 8
        $region52: #{attn_block_forward.1} parent=47 // pred_fallthru
          _
      $region48: #{attn_block_forward.1} parent=5 // pred_fallthru
        _
      %p364 = scmp.le.s32.totalorder 1, %s24
      %p365 = scmp.lt.s32.totalorder %s24, 3
      %p366 = pnand %p364, %p365
      %p367 = pneg %p366
      // Predicated region
      $region53: #{attn_block_forward.1} parent=5 // pred_check
        _
      $region54: #{attn_block_forward.1} parent=5 // pred_check_branch
        %369 = sbr.rel (%p366) target = $region56
      $region55: #{attn_block_forward.1} parent=5 // pred_region
        %s370 = ssub.s32 %s24, 1
        %s371 = sand.u32 %s49, 1
        %s372 = scalar_lea.sflag [#allocation6], %s371
        %s373 = sand.u32 %s49, 1
        %s374 = smul.addr %s373, 256
        %s375 = scalar_lea.vmem [#allocation5], %s374
        // Predicated region
        $region57: #{attn_block_forward.1} parent=55 // pred_check
          %p376 = pneg %p62
        $region58: #{attn_block_forward.1} parent=55 // pred_check_branch
          %378 = sbr.rel (%p376) target = $region60
        $region59: #{attn_block_forward.1} parent=55 // pred_region
          %379 = dma.done %s372, 4096
        $region60: #{attn_block_forward.1} parent=55 // pred_fallthru
          _
        // Predicated region
        $region61: #{attn_block_forward.1} parent=55 // pred_check
          %p380 = pneg %p125
        $region62: #{attn_block_forward.1} parent=55 // pred_check_branch
          %382 = sbr.rel (%p380) target = $region64
        $region63: #{attn_block_forward.1} parent=55 // pred_region
          %383 = dma.done [#allocation9], 16
        $region64: #{attn_block_forward.1} parent=55 // pred_fallthru
          _
        // Predicated region
        $region65: #{attn_block_forward.1} parent=55 // pred_check
          %p384 = pneg %p146
        $region66: #{attn_block_forward.1} parent=55 // pred_check_branch
          %386 = sbr.rel (%p384) target = $region68
        $region67: #{attn_block_forward.1} parent=55 // pred_region
          %387 = dma.done [#allocation9], 16
        $region68: #{attn_block_forward.1} parent=55 // pred_fallthru
          _
        // Predicated region
        $region69: #{attn_block_forward.1} parent=55 // pred_check
          %p388 = pneg %p188
        $region70: #{attn_block_forward.1} parent=55 // pred_check_branch
          %390 = sbr.rel (%p388) target = $region72
        $region71: #{attn_block_forward.1} parent=55 // pred_region
          %391 = dma.done [#allocation12], 48
        $region72: #{attn_block_forward.1} parent=55 // pred_fallthru
          _
        // Predicated region
        $region73: #{attn_block_forward.1} parent=55 // pred_check
          %p392 = pneg %p209
        $region74: #{attn_block_forward.1} parent=55 // pred_check_branch
          %394 = sbr.rel (%p392) target = $region76
        $region75: #{attn_block_forward.1} parent=55 // pred_region
          %395 = dma.done [#allocation12], 1024
        $region76: #{attn_block_forward.1} parent=55 // pred_fallthru
          _
        // Predicated region
        $region77: #{attn_block_forward.1} parent=55 // pred_check
          %p396 = pneg %p230
        $region78: #{attn_block_forward.1} parent=55 // pred_check_branch
          %398 = sbr.rel (%p396) target = $region80
        $region79: #{attn_block_forward.1} parent=55 // pred_region
          %399 = dma.done [#allocation15], 16
        $region80: #{attn_block_forward.1} parent=55 // pred_fallthru
          _
        %s400 = sand.u32 %s49, 1
        %s401 = scalar_lea.sflag [#allocation6], %s400
        %s402 = sand.u32 %s49, 1
        %s403 = smul.addr %s402, 256
        %s404 = scalar_lea.vmem [#allocation5], %s403
        %p405 = pneg %p62
        %p406 = pneg %p59
        %p407 = pneg %p83
        %p408 = pneg %p80
        %p409 = pneg %p104
        %p410 = pneg %p101
        %p411 = pneg %p125
        %p412 = pneg %p122
        %p413 = pneg %p146
        %p414 = pneg %p143
        %p415 = pneg %p167
        %p416 = pneg %p164
        %p417 = pneg %p188
        %p418 = pneg %p185
        %p419 = pneg %p209
        %p420 = pneg %p206
        %p421 = pneg %p230
        %p422 = pneg %p227
        %p423 = pneg %p258
        %p424 = pneg %p255
        %s425 = sand.u32 %s245, 1
        %s426 = scalar_lea.sflag [#allocation7], %s425
        %s427 = sand.u32 %s245, 1
        %s428 = smul.addr %s427, 256
        %s429 = scalar_lea.vmem [#allocation16], %s428
        %s430 = smul.u32 32, %s34
        %p432 = scmp.eq.s32.totalorder %s34, 0
        // Predicated region
        $region81: #{attn_block_forward.1} parent=55 // pred_check
          %p433 = pneg %p432
        $region82: #{attn_block_forward.1} parent=55 // pred_check_branch
          %435 = sbr.rel (%p433) target = $region84
        $region83: #{attn_block_forward.1} parent=55 // pred_region
          %v436 = vld [vmem:[%s375] sm:$0xff]
          %v437 = vld [vmem:[%s375 + $0x8] sm:$0xff]
          %v438 = vld [vmem:[%s375 + $0x10] sm:$0xff]
          %v439 = vld [vmem:[%s375 + $0x18] sm:$0xff]
          %v440 = vld [vmem:[%s375 + $0x20] sm:$0xff]
          %v441 = vld [vmem:[%s375 + $0x28] sm:$0xff]
          %v442 = vld [vmem:[%s375 + $0x30] sm:$0xff]
          %v443 = vld [vmem:[%s375 + $0x38] sm:$0xff]
          %v444 = vld [vmem:[%s375 + $0x40] sm:$0xff]
          %v445 = vld [vmem:[%s375 + $0x48] sm:$0xff]
          %v446 = vld [vmem:[%s375 + $0x50] sm:$0xff]
          %v447 = vld [vmem:[%s375 + $0x58] sm:$0xff]
          %v448 = vld [vmem:[%s375 + $0x60] sm:$0xff]
          %v449 = vld [vmem:[%s375 + $0x68] sm:$0xff]
          %v450 = vld [vmem:[%s375 + $0x70] sm:$0xff]
          %v451 = vld [vmem:[%s375 + $0x78] sm:$0xff]
          %v452 = vld [vmem:[%s375 + $0x80] sm:$0xff]
          %v453 = vld [vmem:[%s375 + $0x88] sm:$0xff]
          %v454 = vld [vmem:[%s375 + $0x90] sm:$0xff]
          %v455 = vld [vmem:[%s375 + $0x98] sm:$0xff]
          %v456 = vld [vmem:[%s375 + $0xa0] sm:$0xff]
          %v457 = vld [vmem:[%s375 + $0xa8] sm:$0xff]
          %v458 = vld [vmem:[%s375 + $0xb0] sm:$0xff]
          %v459 = vld [vmem:[%s375 + $0xb8] sm:$0xff]
          %v460 = vld [vmem:[%s375 + $0xc0] sm:$0xff]
          %v461 = vld [vmem:[%s375 + $0xc8] sm:$0xff]
          %v462 = vld [vmem:[%s375 + $0xd0] sm:$0xff]
          %v463 = vld [vmem:[%s375 + $0xd8] sm:$0xff]
          %v464 = vld [vmem:[%s375 + $0xe0] sm:$0xff]
          %v465 = vld [vmem:[%s375 + $0xe8] sm:$0xff]
          %v466 = vld [vmem:[%s375 + $0xf0] sm:$0xff]
          %v467 = vld [vmem:[%s375 + $0xf8] sm:$0xff]
          %v468 = vadd.f32 %v436, %v437
          %v469 = vadd.f32 %v468, %v438
          %v470 = vadd.f32 %v469, %v439
          %v471 = vadd.f32 %v470, %v440
          %v472 = vadd.f32 %v471, %v441
          %v473 = vadd.f32 %v472, %v442
          %v474 = vadd.f32 %v473, %v443
          %v475 = vadd.f32 %v474, %v444
          %v476 = vadd.f32 %v475, %v445
          %v477 = vadd.f32 %v476, %v446
          %v478 = vadd.f32 %v477, %v447
          %v479 = vadd.f32 %v478, %v448
          %v480 = vadd.f32 %v479, %v449
          %v481 = vadd.f32 %v480, %v450
          %v482 = vadd.f32 %v481, %v451
          %v483 = vadd.f32 %v482, %v452
          %v484 = vadd.f32 %v483, %v453
          %v485 = vadd.f32 %v484, %v454
          %v486 = vadd.f32 %v485, %v455
          %v487 = vadd.f32 %v486, %v456
          %v488 = vadd.f32 %v487, %v457
          %v489 = vadd.f32 %v488, %v458
          %v490 = vadd.f32 %v489, %v459
          %v491 = vadd.f32 %v490, %v460
          %v492 = vadd.f32 %v491, %v461
          %v493 = vadd.f32 %v492, %v462
          %v494 = vadd.f32 %v493, %v463
          %v495 = vadd.f32 %v494, %v464
          %v496 = vadd.f32 %v495, %v465
          %v497 = vadd.f32 %v496, %v466
          %v498 = vadd.f32 %v497, %v467
          %v499 = vrot.slane %v498, 4
          %v500 = vadd.f32 %v498, %v499
          %v501 = vrot.slane %v500, 2
          %v502 = vadd.f32 %v500, %v501
          %v503 = vrot.slane %v502, 1
          %v504 = vadd.f32 %v502, %v503
          %v505 = vld [vmem:[%s1] sm:$0xff]
          %v506 = vld [vmem:[%s1 + $0x8] sm:$0xff]
          %v507 = vld [vmem:[%s1 + $0x10] sm:$0xff]
          %v508 = vld [vmem:[%s1 + $0x18] sm:$0xff]
          %v509 = vld [vmem:[%s1 + $0x20] sm:$0xff]
          %v510 = vld [vmem:[%s1 + $0x28] sm:$0xff]
          %v511 = vld [vmem:[%s1 + $0x30] sm:$0xff]
          %v512 = vld [vmem:[%s1 + $0x38] sm:$0xff]
          %v513 = vld [vmem:[%s1 + $0x40] sm:$0xff]
          %v514 = vld [vmem:[%s1 + $0x48] sm:$0xff]
          %v515 = vld [vmem:[%s1 + $0x50] sm:$0xff]
          %v516 = vld [vmem:[%s1 + $0x58] sm:$0xff]
          %v517 = vld [vmem:[%s1 + $0x60] sm:$0xff]
          %v518 = vld [vmem:[%s1 + $0x68] sm:$0xff]
          %v519 = vld [vmem:[%s1 + $0x70] sm:$0xff]
          %v520 = vld [vmem:[%s1 + $0x78] sm:$0xff]
          %521 = vmatprep.subr.mxu0 0.0
          %522 = vmatpush1.msra.mxu0 %v505
          %523 = vmatprep.subr.mxu0 0.0
          %524 = vmatpush1.msra.mxu0 %v506
          %525 = vmatprep.subr.mxu0 0.0
          %526 = vmatpush1.msra.mxu0 %v507
          %527 = vmatprep.subr.mxu0 0.0
          %528 = vmatpush1.msra.mxu0 %v508
          %529 = vmatprep.subr.mxu0 0.0
          %530 = vmatpush1.msra.mxu0 %v509
          %531 = vmatprep.subr.mxu0 0.0
          %532 = vmatpush1.msra.mxu0 %v510
          %533 = vmatprep.subr.mxu0 0.0
          %534 = vmatpush1.msra.mxu0 %v511
          %535 = vmatprep.subr.mxu0 0.0
          %536 = vmatpush1.msra.mxu0 %v512
          %537 = vmatprep.subr.mxu0 0.0
          %538 = vmatpush1.msra.mxu0 %v513
          %539 = vmatprep.subr.mxu0 0.0
          %540 = vmatpush1.msra.mxu0 %v514
          %541 = vmatprep.subr.mxu0 0.0
          %542 = vmatpush1.msra.mxu0 %v515
          %543 = vmatprep.subr.mxu0 0.0
          %544 = vmatpush1.msra.mxu0 %v516
          %545 = vmatprep.subr.mxu0 0.0
          %546 = vmatpush1.msra.mxu0 %v517
          %547 = vmatprep.subr.mxu0 0.0
          %548 = vmatpush1.msra.mxu0 %v518
          %549 = vmatprep.subr.mxu0 0.0
          %550 = vmatpush1.msra.mxu0 %v519
          %551 = vmatprep.subr.mxu0 0.0
          %552 = vmatpush1.msra.mxu0 %v520
          %553 = vmatprep.subr.mxu0 0.0
          %554 = vmatpush1.msra.mxu0 0.0
          %555 = vmatprep.subr.mxu0 0.0
          %556 = vmatpush1.msra.mxu0 0.0
          %557 = vmatprep.subr.mxu0 0.0
          %558 = vmatpush1.msra.mxu0 0.0
          %559 = vmatprep.subr.mxu0 0.0
          %560 = vmatpush1.msra.mxu0 0.0
          %561 = vmatprep.subr.mxu0 0.0
          %562 = vmatpush1.msra.mxu0 0.0
          %563 = vmatprep.subr.mxu0 0.0
          %564 = vmatpush1.msra.mxu0 0.0
          %565 = vmatprep.subr.mxu0 0.0
          %566 = vmatpush1.msra.mxu0 0.0
          %567 = vmatprep.subr.mxu0 0.0
          %568 = vmatpush1.msra.mxu0 0.0
          %569 = vmatprep.subr.mxu0 0.0
          %570 = vmatpush1.msra.mxu0 0.0
          %571 = vmatprep.subr.mxu0 0.0
          %572 = vmatpush1.msra.mxu0 0.0
          %573 = vmatprep.subr.mxu0 0.0
          %574 = vmatpush1.msra.mxu0 0.0
          %575 = vmatprep.subr.mxu0 0.0
          %576 = vmatpush1.msra.mxu0 0.0
          %577 = vmatprep.subr.mxu0 0.0
          %578 = vmatpush1.msra.mxu0 0.0
          %579 = vmatprep.subr.mxu0 0.0
          %580 = vmatpush1.msra.mxu0 0.0
          %581 = vmatprep.subr.mxu0 0.0
          %582 = vmatpush1.msra.mxu0 0.0
          %583 = vmatprep.subr.mxu0 0.0
          %584 = vmatpush1.msra.mxu0 0.0
          %585 = vmatprep.mubr.f32.mxu0 0.0
          %586 = vmatmul.mubr.f32.gmra.mrb[0].mxu0 %v504
          %v587 = vpop.f32.mrb[0].mxu0
          %v588 = vadd.f32 0.0, %v587
          %v589 = vpop.f32.mrb[0].mxu0
          %590 = vdwg.mxu0
          %v591 = vmul.f32 %v588, 0.0009765625
          %v592 = vld [vmem:[%s2] sm:$0xff]
          %v593 = vld [vmem:[%s2 + $0x8] sm:$0xff]
          %v594 = vld [vmem:[%s2 + $0x10] sm:$0xff]
          %v595 = vld [vmem:[%s2 + $0x18] sm:$0xff]
          %vm596 = vcmask 261120
          %v598 = vsel %vm596, %v591, 0
          %600 = vmatprep.subr.mxu0 0.0
          %601 = vmatpush1.msra.mxu0 %v592
          %602 = vmatprep.subr.mxu0 0.0
          %603 = vmatpush1.msra.mxu0 %v593
          %604 = vmatprep.subr.mxu0 0.0
          %605 = vmatpush1.msra.mxu0 %v594
          %606 = vmatprep.subr.mxu0 0.0
          %607 = vmatpush1.msra.mxu0 %v595
          %608 = vmatprep.subr.mxu0 0.0
          %609 = vmatpush1.msra.mxu0 0.0
          %610 = vmatprep.subr.mxu0 0.0
          %611 = vmatpush1.msra.mxu0 0.0
          %612 = vmatprep.subr.mxu0 0.0
          %613 = vmatpush1.msra.mxu0 0.0
          %614 = vmatprep.subr.mxu0 0.0
          %615 = vmatpush1.msra.mxu0 0.0
          %616 = vmatprep.subr.mxu0 0.0
          %617 = vmatpush1.msra.mxu0 0.0
          %618 = vmatprep.subr.mxu0 0.0
          %619 = vmatpush1.msra.mxu0 0.0
          %620 = vmatprep.subr.mxu0 0.0
          %621 = vmatpush1.msra.mxu0 0.0
          %622 = vmatprep.subr.mxu0 0.0
          %623 = vmatpush1.msra.mxu0 0.0
          %624 = vmatprep.subr.mxu0 0.0
          %625 = vmatpush1.msra.mxu0 0.0
          %626 = vmatprep.subr.mxu0 0.0
          %627 = vmatpush1.msra.mxu0 0.0
          %628 = vmatprep.subr.mxu0 0.0
          %629 = vmatpush1.msra.mxu0 0.0
          %630 = vmatprep.subr.mxu0 0.0
          %631 = vmatpush1.msra.mxu0 0.0
          %632 = vmatprep.subr.mxu0 0.0
          %633 = vmatpush1.msra.mxu0 0.0
          %634 = vmatprep.subr.mxu0 0.0
          %635 = vmatpush1.msra.mxu0 0.0
          %636 = vmatprep.subr.mxu0 0.0
          %637 = vmatpush1.msra.mxu0 0.0
          %638 = vmatprep.subr.mxu0 0.0
          %639 = vmatpush1.msra.mxu0 0.0
          %640 = vmatprep.subr.mxu0 0.0
          %641 = vmatpush1.msra.mxu0 0.0
          %642 = vmatprep.subr.mxu0 0.0
          %643 = vmatpush1.msra.mxu0 0.0
          %644 = vmatprep.subr.mxu0 0.0
          %645 = vmatpush1.msra.mxu0 0.0
          %646 = vmatprep.subr.mxu0 0.0
          %647 = vmatpush1.msra.mxu0 0.0
          %648 = vmatprep.subr.mxu0 0.0
          %649 = vmatpush1.msra.mxu0 0.0
          %650 = vmatprep.subr.mxu0 0.0
          %651 = vmatpush1.msra.mxu0 0.0
          %652 = vmatprep.subr.mxu0 0.0
          %653 = vmatpush1.msra.mxu0 0.0
          %654 = vmatprep.subr.mxu0 0.0
          %655 = vmatpush1.msra.mxu0 0.0
          %656 = vmatprep.subr.mxu0 0.0
          %657 = vmatpush1.msra.mxu0 0.0
          %658 = vmatprep.subr.mxu0 0.0
          %659 = vmatpush1.msra.mxu0 0.0
          %660 = vmatprep.subr.mxu0 0.0
          %661 = vmatpush1.msra.mxu0 0.0
          %662 = vmatprep.subr.mxu0 0.0
          %663 = vmatpush1.msra.mxu0 0.0
          %664 = vmatprep.mubr.f32.mxu0 0.0
          %665 = vmatmul.mubr.f32.gmra.mrb[0].mxu0 %v598
          %v666 = vpop.f32.mrb[0].mxu0
          %v667 = vadd.f32 0.0, %v666
          %v668 = vpop.f32.mrb[0].mxu0
          %669 = vdwg.mxu0
          %v670 = vlaneseq
          %v671 = vshrl.u32 %v670, 7
          %v672 = vsub.s32 0, %v671
          %v673 = vrot.slane %v667, %v672
          %v674 = vsub.f32 %v436, %v673
          %v675 = vsub.f32 %v437, %v673
          %v676 = vsub.f32 %v438, %v673
          %v677 = vsub.f32 %v439, %v673
          %v678 = vsub.f32 %v440, %v673
          %v679 = vsub.f32 %v441, %v673
          %v680 = vsub.f32 %v442, %v673
          %v681 = vsub.f32 %v443, %v673
          %v682 = vsub.f32 %v444, %v673
          %v683 = vsub.f32 %v445, %v673
          %v684 = vsub.f32 %v446, %v673
          %v685 = vsub.f32 %v447, %v673
          %v686 = vsub.f32 %v448, %v673
          %v687 = vsub.f32 %v449, %v673
          %v688 = vsub.f32 %v450, %v673
          %v689 = vsub.f32 %v451, %v673
          %v690 = vsub.f32 %v452, %v673
          %v691 = vsub.f32 %v453, %v673
          %v692 = vsub.f32 %v454, %v673
          %v693 = vsub.f32 %v455, %v673
          %v694 = vsub.f32 %v456, %v673
          %v695 = vsub.f32 %v457, %v673
          %v696 = vsub.f32 %v458, %v673
          %v697 = vsub.f32 %v459, %v673
          %v698 = vsub.f32 %v460, %v673
          %v699 = vsub.f32 %v461, %v673
          %v700 = vsub.f32 %v462, %v673
          %v701 = vsub.f32 %v463, %v673
          %v702 = vsub.f32 %v464, %v673
          %v703 = vsub.f32 %v465, %v673
          %v704 = vsub.f32 %v466, %v673
          %v705 = vsub.f32 %v467, %v673
          %v706 = vmul.f32 %v674, %v674
          %v707 = vmul.f32 %v675, %v675
          %v708 = vmul.f32 %v676, %v676
          %v709 = vmul.f32 %v677, %v677
          %v710 = vmul.f32 %v678, %v678
          %v711 = vmul.f32 %v679, %v679
          %v712 = vmul.f32 %v680, %v680
          %v713 = vmul.f32 %v681, %v681
          %v714 = vmul.f32 %v682, %v682
          %v715 = vmul.f32 %v683, %v683
          %v716 = vmul.f32 %v684, %v684
          %v717 = vmul.f32 %v685, %v685
          %v718 = vmul.f32 %v686, %v686
          %v719 = vmul.f32 %v687, %v687
          %v720 = vmul.f32 %v688, %v688
          %v721 = vmul.f32 %v689, %v689
          %v722 = vmul.f32 %v690, %v690
          %v723 = vmul.f32 %v691, %v691
          %v724 = vmul.f32 %v692, %v692
          %v725 = vmul.f32 %v693, %v693
          %v726 = vmul.f32 %v694, %v694
          %v727 = vmul.f32 %v695, %v695
          %v728 = vmul.f32 %v696, %v696
          %v729 = vmul.f32 %v697, %v697
          %v730 = vmul.f32 %v698, %v698
          %v731 = vmul.f32 %v699, %v699
          %v732 = vmul.f32 %v700, %v700
          %v733 = vmul.f32 %v701, %v701
          %v734 = vmul.f32 %v702, %v702
          %v735 = vmul.f32 %v703, %v703
          %v736 = vmul.f32 %v704, %v704
          %v737 = vmul.f32 %v705, %v705
          %v738 = vadd.f32 %v706, %v707
          %v739 = vadd.f32 %v738, %v708
          %v740 = vadd.f32 %v739, %v709
          %v741 = vadd.f32 %v740, %v710
          %v742 = vadd.f32 %v741, %v711
          %v743 = vadd.f32 %v742, %v712
          %v744 = vadd.f32 %v743, %v713
          %v745 = vadd.f32 %v744, %v714
          %v746 = vadd.f32 %v745, %v715
          %v747 = vadd.f32 %v746, %v716
          %v748 = vadd.f32 %v747, %v717
          %v749 = vadd.f32 %v748, %v718
          %v750 = vadd.f32 %v749, %v719
          %v751 = vadd.f32 %v750, %v720
          %v752 = vadd.f32 %v751, %v721
          %v753 = vadd.f32 %v752, %v722
          %v754 = vadd.f32 %v753, %v723
          %v755 = vadd.f32 %v754, %v724
          %v756 = vadd.f32 %v755, %v725
          %v757 = vadd.f32 %v756, %v726
          %v758 = vadd.f32 %v757, %v727
          %v759 = vadd.f32 %v758, %v728
          %v760 = vadd.f32 %v759, %v729
          %v761 = vadd.f32 %v760, %v730
          %v762 = vadd.f32 %v761, %v731
          %v763 = vadd.f32 %v762, %v732
          %v764 = vadd.f32 %v763, %v733
          %v765 = vadd.f32 %v764, %v734
          %v766 = vadd.f32 %v765, %v735
          %v767 = vadd.f32 %v766, %v736
          %v768 = vadd.f32 %v767, %v737
          %v769 = vrot.slane %v768, 4
          %v770 = vadd.f32 %v768, %v769
          %v771 = vrot.slane %v770, 2
          %v772 = vadd.f32 %v770, %v771
          %v773 = vrot.slane %v772, 1
          %v774 = vadd.f32 %v772, %v773
          %775 = vmatprep.subr.mxu0 0.0
          %776 = vmatpush1.msra.mxu0 %v505
          %777 = vmatprep.subr.mxu0 0.0
          %778 = vmatpush1.msra.mxu0 %v506
          %779 = vmatprep.subr.mxu0 0.0
          %780 = vmatpush1.msra.mxu0 %v507
          %781 = vmatprep.subr.mxu0 0.0
          %782 = vmatpush1.msra.mxu0 %v508
          %783 = vmatprep.subr.mxu0 0.0
          %784 = vmatpush1.msra.mxu0 %v509
          %785 = vmatprep.subr.mxu0 0.0
          %786 = vmatpush1.msra.mxu0 %v510
          %787 = vmatprep.subr.mxu0 0.0
          %788 = vmatpush1.msra.mxu0 %v511
          %789 = vmatprep.subr.mxu0 0.0
          %790 = vmatpush1.msra.mxu0 %v512
          %791 = vmatprep.subr.mxu0 0.0
          %792 = vmatpush1.msra.mxu0 %v513
          %793 = vmatprep.subr.mxu0 0.0
          %794 = vmatpush1.msra.mxu0 %v514
          %795 = vmatprep.subr.mxu0 0.0
          %796 = vmatpush1.msra.mxu0 %v515
          %797 = vmatprep.subr.mxu0 0.0
          %798 = vmatpush1.msra.mxu0 %v516
          %799 = vmatprep.subr.mxu0 0.0
          %800 = vmatpush1.msra.mxu0 %v517
          %801 = vmatprep.subr.mxu0 0.0
          %802 = vmatpush1.msra.mxu0 %v518
          %803 = vmatprep.subr.mxu0 0.0
          %804 = vmatpush1.msra.mxu0 %v519
          %805 = vmatprep.subr.mxu0 0.0
          %806 = vmatpush1.msra.mxu0 %v520
          %807 = vmatprep.subr.mxu0 0.0
          %808 = vmatpush1.msra.mxu0 0.0
          %809 = vmatprep.subr.mxu0 0.0
          %810 = vmatpush1.msra.mxu0 0.0
          %811 = vmatprep.subr.mxu0 0.0
          %812 = vmatpush1.msra.mxu0 0.0
          %813 = vmatprep.subr.mxu0 0.0
          %814 = vmatpush1.msra.mxu0 0.0
          %815 = vmatprep.subr.mxu0 0.0
          %816 = vmatpush1.msra.mxu0 0.0
          %817 = vmatprep.subr.mxu0 0.0
          %818 = vmatpush1.msra.mxu0 0.0
          %819 = vmatprep.subr.mxu0 0.0
          %820 = vmatpush1.msra.mxu0 0.0
          %821 = vmatprep.subr.mxu0 0.0
          %822 = vmatpush1.msra.mxu0 0.0
          %823 = vmatprep.subr.mxu0 0.0
          %824 = vmatpush1.msra.mxu0 0.0
          %825 = vmatprep.subr.mxu0 0.0
          %826 = vmatpush1.msra.mxu0 0.0
          %827 = vmatprep.subr.mxu0 0.0
          %828 = vmatpush1.msra.mxu0 0.0
          %829 = vmatprep.subr.mxu0 0.0
          %830 = vmatpush1.msra.mxu0 0.0
          %831 = vmatprep.subr.mxu0 0.0
          %832 = vmatpush1.msra.mxu0 0.0
          %833 = vmatprep.subr.mxu0 0.0
          %834 = vmatpush1.msra.mxu0 0.0
          %835 = vmatprep.subr.mxu0 0.0
          %836 = vmatpush1.msra.mxu0 0.0
          %837 = vmatprep.subr.mxu0 0.0
          %838 = vmatpush1.msra.mxu0 0.0
          %839 = vmatprep.mubr.f32.mxu0 0.0
          %840 = vmatmul.mubr.f32.gmra.mrb[0].mxu0 %v774
          %v841 = vpop.f32.mrb[0].mxu0
          %v842 = vadd.f32 0.0, %v841
          %v843 = vpop.f32.mrb[0].mxu0
          %844 = vdwg.mxu0
          %v845 = vmul.f32 %v842, 0.0009765625
          %v846 = vadd.f32 %v845, 1e-05
          %v847 = vrsqrt.pop %v846
          %v849 = vsel %vm596, %v847, 0
          %851 = vmatprep.subr.mxu0 0.0
          %852 = vmatpush1.msra.mxu0 %v592
          %853 = vmatprep.subr.mxu0 0.0
          %854 = vmatpush1.msra.mxu0 %v593
          %855 = vmatprep.subr.mxu0 0.0
          %856 = vmatpush1.msra.mxu0 %v594
          %857 = vmatprep.subr.mxu0 0.0
          %858 = vmatpush1.msra.mxu0 %v595
          %859 = vmatprep.subr.mxu0 0.0
          %860 = vmatpush1.msra.mxu0 0.0
          %861 = vmatprep.subr.mxu0 0.0
          %862 = vmatpush1.msra.mxu0 0.0
          %863 = vmatprep.subr.mxu0 0.0
          %864 = vmatpush1.msra.mxu0 0.0
          %865 = vmatprep.subr.mxu0 0.0
          %866 = vmatpush1.msra.mxu0 0.0
          %867 = vmatprep.subr.mxu0 0.0
          %868 = vmatpush1.msra.mxu0 0.0
          %869 = vmatprep.subr.mxu0 0.0
          %870 = vmatpush1.msra.mxu0 0.0
          %871 = vmatprep.subr.mxu0 0.0
          %872 = vmatpush1.msra.mxu0 0.0
          %873 = vmatprep.subr.mxu0 0.0
          %874 = vmatpush1.msra.mxu0 0.0
          %875 = vmatprep.subr.mxu0 0.0
          %876 = vmatpush1.msra.mxu0 0.0
          %877 = vmatprep.subr.mxu0 0.0
          %878 = vmatpush1.msra.mxu0 0.0
          %879 = vmatprep.subr.mxu0 0.0
          %880 = vmatpush1.msra.mxu0 0.0
          %881 = vmatprep.subr.mxu0 0.0
          %882 = vmatpush1.msra.mxu0 0.0
          %883 = vmatprep.subr.mxu0 0.0
          %884 = vmatpush1.msra.mxu0 0.0
          %885 = vmatprep.subr.mxu0 0.0
          %886 = vmatpush1.msra.mxu0 0.0
          %887 = vmatprep.subr.mxu0 0.0
          %888 = vmatpush1.msra.mxu0 0.0
          %889 = vmatprep.subr.mxu0 0.0
          %890 = vmatpush1.msra.mxu0 0.0
          %891 = vmatprep.subr.mxu0 0.0
          %892 = vmatpush1.msra.mxu0 0.0
          %893 = vmatprep.subr.mxu0 0.0
          %894 = vmatpush1.msra.mxu0 0.0
          %895 = vmatprep.subr.mxu0 0.0
          %896 = vmatpush1.msra.mxu0 0.0
          %897 = vmatprep.subr.mxu0 0.0
          %898 = vmatpush1.msra.mxu0 0.0
          %899 = vmatprep.subr.mxu0 0.0
          %900 = vmatpush1.msra.mxu0 0.0
          %901 = vmatprep.subr.mxu0 0.0
          %902 = vmatpush1.msra.mxu0 0.0
          %903 = vmatprep.subr.mxu0 0.0
          %904 = vmatpush1.msra.mxu0 0.0
          %905 = vmatprep.subr.mxu0 0.0
          %906 = vmatpush1.msra.mxu0 0.0
          %907 = vmatprep.subr.mxu0 0.0
          %908 = vmatpush1.msra.mxu0 0.0
          %909 = vmatprep.subr.mxu0 0.0
          %910 = vmatpush1.msra.mxu0 0.0
          %911 = vmatprep.subr.mxu0 0.0
          %912 = vmatpush1.msra.mxu0 0.0
          %913 = vmatprep.subr.mxu0 0.0
          %914 = vmatpush1.msra.mxu0 0.0
          %915 = vmatprep.mubr.f32.mxu0 0.0
          %916 = vmatmul.mubr.f32.gmra.mrb[0].mxu0 %v849
          %v917 = vpop.f32.mrb[0].mxu0
          %v918 = vadd.f32 0.0, %v917
          %v919 = vpop.f32.mrb[0].mxu0
          %920 = vdwg.mxu0
          %v921 = vlaneseq
          %v922 = vshrl.u32 %v921, 7
          %v923 = vsub.s32 0, %v922
          %v924 = vrot.slane %v918, %v923
          %v925 = vmul.f32 %v674, %v924
          %v926 = vmul.f32 %v675, %v924
          %v927 = vmul.f32 %v676, %v924
          %v928 = vmul.f32 %v677, %v924
          %v929 = vmul.f32 %v678, %v924
          %v930 = vmul.f32 %v679, %v924
          %v931 = vmul.f32 %v680, %v924
          %v932 = vmul.f32 %v681, %v924
          %v933 = vmul.f32 %v682, %v924
          %v934 = vmul.f32 %v683, %v924
          %v935 = vmul.f32 %v684, %v924
          %v936 = vmul.f32 %v685, %v924
          %v937 = vmul.f32 %v686, %v924
          %v938 = vmul.f32 %v687, %v924
          %v939 = vmul.f32 %v688, %v924
          %v940 = vmul.f32 %v689, %v924
          %v941 = vmul.f32 %v690, %v924
          %v942 = vmul.f32 %v691, %v924
          %v943 = vmul.f32 %v692, %v924
          %v944 = vmul.f32 %v693, %v924
          %v945 = vmul.f32 %v694, %v924
          %v946 = vmul.f32 %v695, %v924
          %v947 = vmul.f32 %v696, %v924
          %v948 = vmul.f32 %v697, %v924
          %v949 = vmul.f32 %v698, %v924
          %v950 = vmul.f32 %v699, %v924
          %v951 = vmul.f32 %v700, %v924
          %v952 = vmul.f32 %v701, %v924
          %v953 = vmul.f32 %v702, %v924
          %v954 = vmul.f32 %v703, %v924
          %v955 = vmul.f32 %v704, %v924
          %v956 = vmul.f32 %v705, %v924
          %v957 = vld [vmem:[#allocation8] sm:$0x1]
          %v959 = vlaneseq
          %v960 = vshrl.u32 %v959, 7
          %v961 = vsub.s32 0, %v960
          %v962 = vrot.slane %v957, %v961
          %v964 = vmul.f32 %v925, %v962
          %v965 = vmul.f32 %v926, %v962
          %v966 = vmul.f32 %v927, %v962
          %v967 = vmul.f32 %v928, %v962
          %v968 = vmul.f32 %v929, %v962
          %v969 = vmul.f32 %v930, %v962
          %v970 = vmul.f32 %v931, %v962
          %v971 = vmul.f32 %v932, %v962
          %v972 = vmul.f32 %v933, %v962
          %v973 = vmul.f32 %v934, %v962
          %v974 = vmul.f32 %v935, %v962
          %v975 = vmul.f32 %v936, %v962
          %v976 = vmul.f32 %v937, %v962
          %v977 = vmul.f32 %v938, %v962
          %v978 = vmul.f32 %v939, %v962
          %v979 = vmul.f32 %v940, %v962
          %v980 = vmul.f32 %v941, %v962
          %v981 = vmul.f32 %v942, %v962
          %v982 = vmul.f32 %v943, %v962
          %v983 = vmul.f32 %v944, %v962
          %v984 = vmul.f32 %v945, %v962
          %v985 = vmul.f32 %v946, %v962
          %v986 = vmul.f32 %v947, %v962
          %v987 = vmul.f32 %v948, %v962
          %v988 = vmul.f32 %v949, %v962
          %v989 = vmul.f32 %v950, %v962
          %v990 = vmul.f32 %v951, %v962
          %v991 = vmul.f32 %v952, %v962
          %v992 = vmul.f32 %v953, %v962
          %v993 = vmul.f32 %v954, %v962
          %v994 = vmul.f32 %v955, %v962
          %v995 = vmul.f32 %v956, %v962
          %v996 = vld [vmem:[#allocation10] sm:$0x1]
          %v998 = vlaneseq
          %v999 = vshrl.u32 %v998, 7
          %v1000 = vsub.s32 0, %v999
          %v1001 = vrot.slane %v996, %v1000
          %v1003 = vadd.f32 %v964, %v1001
          %v1004 = vadd.f32 %v965, %v1001
          %v1005 = vadd.f32 %v966, %v1001
          %v1006 = vadd.f32 %v967, %v1001
          %v1007 = vadd.f32 %v968, %v1001
          %v1008 = vadd.f32 %v969, %v1001
          %v1009 = vadd.f32 %v970, %v1001
          %v1010 = vadd.f32 %v971, %v1001
          %v1011 = vadd.f32 %v972, %v1001
          %v1012 = vadd.f32 %v973, %v1001
          %v1013 = vadd.f32 %v974, %v1001
          %v1014 = vadd.f32 %v975, %v1001
          %v1015 = vadd.f32 %v976, %v1001
          %v1016 = vadd.f32 %v977, %v1001
          %v1017 = vadd.f32 %v978, %v1001
          %v1018 = vadd.f32 %v979, %v1001
          %v1019 = vadd.f32 %v980, %v1001
          %v1020 = vadd.f32 %v981, %v1001
          %v1021 = vadd.f32 %v982, %v1001
          %v1022 = vadd.f32 %v983, %v1001
          %v1023 = vadd.f32 %v984, %v1001
          %v1024 = vadd.f32 %v985, %v1001
          %v1025 = vadd.f32 %v986, %v1001
          %v1026 = vadd.f32 %v987, %v1001
          %v1027 = vadd.f32 %v988, %v1001
          %v1028 = vadd.f32 %v989, %v1001
          %v1029 = vadd.f32 %v990, %v1001
          %v1030 = vadd.f32 %v991, %v1001
          %v1031 = vadd.f32 %v992, %v1001
          %v1032 = vadd.f32 %v993, %v1001
          %v1033 = vadd.f32 %v994, %v1001
          %v1034 = vadd.f32 %v995, %v1001
          %v1035 = vpack.c.bf16 %v1004, %v1003
          %v1036 = vpack.c.bf16 %v1006, %v1005
          %v1037 = vpack.c.bf16 %v1008, %v1007
          %v1038 = vpack.c.bf16 %v1010, %v1009
          %v1039 = vpack.c.bf16 %v1012, %v1011
          %v1040 = vpack.c.bf16 %v1014, %v1013
          %v1041 = vpack.c.bf16 %v1016, %v1015
          %v1042 = vpack.c.bf16 %v1018, %v1017
          %v1043 = vpack.c.bf16 %v1020, %v1019
          %v1044 = vpack.c.bf16 %v1022, %v1021
          %v1045 = vpack.c.bf16 %v1024, %v1023
          %v1046 = vpack.c.bf16 %v1026, %v1025
          %v1047 = vpack.c.bf16 %v1028, %v1027
          %v1048 = vpack.c.bf16 %v1030, %v1029
          %v1049 = vpack.c.bf16 %v1032, %v1031
          %v1050 = vpack.c.bf16 %v1034, %v1033
          %v1051 = vld [vmem:[%s5] sm:$0xff]
          %v1052 = vld [vmem:[%s5 + $0x8] sm:$0xf]
          %v1053 = vld [vmem:[%s5 + $0xc] sm:$0xff]
          %v1054 = vld [vmem:[%s5 + $0x14] sm:$0xf]
          %v1055 = vld [vmem:[%s5 + $0x18] sm:$0xff]
          %v1056 = vld [vmem:[%s5 + $0x20] sm:$0xf]
          %v1057 = vld [vmem:[%s5 + $0x24] sm:$0xff]
          %v1058 = vld [vmem:[%s5 + $0x2c] sm:$0xf]
          %v1059 = vld [vmem:[%s5 + $0x30] sm:$0xff]
          %v1060 = vld [vmem:[%s5 + $0x38] sm:$0xf]
          %v1061 = vld [vmem:[%s5 + $0x3c] sm:$0xff]
          %v1062 = vld [vmem:[%s5 + $0x44] sm:$0xf]
          %v1063 = vld [vmem:[%s5 + $0x48] sm:$0xff]
          %v1064 = vld [vmem:[%s5 + $0x50] sm:$0xf]
          %v1065 = vld [vmem:[%s5 + $0x54] sm:$0xff]
          %v1066 = vld [vmem:[%s5 + $0x5c] sm:$0xf]
          %v1067 = vld [vmem:[%s5 + $0x60] sm:$0xff]
          %v1068 = vld [vmem:[%s5 + $0x68] sm:$0xf]
          %v1069 = vld [vmem:[%s5 + $0x6c] sm:$0xff]
          %v1070 = vld [vmem:[%s5 + $0x74] sm:$0xf]
          %v1071 = vld [vmem:[%s5 + $0x78] sm:$0xff]
          %v1072 = vld [vmem:[%s5 + $0x80] sm:$0xf]
          %v1073 = vld [vmem:[%s5 + $0x84] sm:$0xff]
          %v1074 = vld [vmem:[%s5 + $0x8c] sm:$0xf]
          %v1075 = vld [vmem:[%s5 + $0x90] sm:$0xff]
          %v1076 = vld [vmem:[%s5 + $0x98] sm:$0xf]
          %v1077 = vld [vmem:[%s5 + $0x9c] sm:$0xff]
          %v1078 = vld [vmem:[%s5 + $0xa4] sm:$0xf]
          %v1079 = vld [vmem:[%s5 + $0xa8] sm:$0xff]
          %v1080 = vld [vmem:[%s5 + $0xb0] sm:$0xf]
          %v1081 = vld [vmem:[%s5 + $0xb4] sm:$0xff]
          %v1082 = vld [vmem:[%s5 + $0xbc] sm:$0xf]
          %v1083 = vld [vmem:[#allocation11] sm:$0x7]
          %v1085 = vlaneseq
          %v1086 = vshrl.u32 %v1085, 7
          %v1087 = vsub.s32 0, %v1086
          %v1088 = vrot.slane %v1083, %v1087
          %v1089 = vlaneseq
          %v1090 = vshrl.u32 %v1089, 7
          %v1091 = vsub.s32 1, %v1090
          %v1092 = vrot.slane %v1083, %v1091
          %v1093 = vlaneseq
          %v1094 = vshrl.u32 %v1093, 7
          %v1095 = vsub.s32 2, %v1094
          %v1096 = vrot.slane %v1083, %v1095
          %v1132 = vunpack.c.l.b16 %v1051
          %v1133 = vunpack.c.h.b16 %v1051
          %v1134 = vunpack.c.l.b16 %v1052
          %v1135 = vunpack.c.l.b16 %v1053
          %v1136 = vunpack.c.h.b16 %v1053
          %v1137 = vunpack.c.l.b16 %v1054
          %v1138 = vunpack.c.l.b16 %v1055
          %v1139 = vunpack.c.h.b16 %v1055
          %v1140 = vunpack.c.l.b16 %v1056
          %v1141 = vunpack.c.l.b16 %v1057
          %v1142 = vunpack.c.h.b16 %v1057
          %v1143 = vunpack.c.l.b16 %v1058
          %v1144 = vunpack.c.l.b16 %v1059
          %v1145 = vunpack.c.h.b16 %v1059
          %v1146 = vunpack.c.l.b16 %v1060
          %v1147 = vunpack.c.l.b16 %v1061
          %v1148 = vunpack.c.h.b16 %v1061
          %v1149 = vunpack.c.l.b16 %v1062
          %v1150 = vunpack.c.l.b16 %v1063
          %v1151 = vunpack.c.h.b16 %v1063
          %v1152 = vunpack.c.l.b16 %v1064
          %v1153 = vunpack.c.l.b16 %v1065
          %v1154 = vunpack.c.h.b16 %v1065
          %v1155 = vunpack.c.l.b16 %v1066
          %v1156 = vunpack.c.l.b16 %v1067
          %v1157 = vunpack.c.h.b16 %v1067
          %v1158 = vunpack.c.l.b16 %v1068
          %v1159 = vunpack.c.l.b16 %v1069
          %v1160 = vunpack.c.h.b16 %v1069
          %v1161 = vunpack.c.l.b16 %v1070
          %v1162 = vunpack.c.l.b16 %v1071
          %v1163 = vunpack.c.h.b16 %v1071
          %v1164 = vunpack.c.l.b16 %v1072
          %v1165 = vunpack.c.l.b16 %v1073
          %v1166 = vunpack.c.h.b16 %v1073
          %v1167 = vunpack.c.l.b16 %v1074
          %v1168 = vunpack.c.l.b16 %v1075
          %v1169 = vunpack.c.h.b16 %v1075
          %v1170 = vunpack.c.l.b16 %v1076
          %v1171 = vunpack.c.l.b16 %v1077
          %v1172 = vunpack.c.h.b16 %v1077
          %v1173 = vunpack.c.l.b16 %v1078
          %v1174 = vunpack.c.l.b16 %v1079
          %v1175 = vunpack.c.h.b16 %v1079
          %v1176 = vunpack.c.l.b16 %v1080
          %v1177 = vunpack.c.l.b16 %v1081
          %v1178 = vunpack.c.h.b16 %v1081
          %v1179 = vunpack.c.l.b16 %v1082
          %v1180 = vpack.c.b16 %v1135, %v1132
          %v1181 = vpack.c.b16 %v1136, %v1133
          %v1182 = vpack.c.b16 %v1137, %v1134
          %v1183 = vpack.c.b16 %v1141, %v1138
          %v1184 = vpack.c.b16 %v1142, %v1139
          %v1185 = vpack.c.b16 %v1143, %v1140
          %v1186 = vpack.c.b16 %v1147, %v1144
          %v1187 = vpack.c.b16 %v1148, %v1145
          %v1188 = vpack.c.b16 %v1149, %v1146
          %v1189 = vpack.c.b16 %v1153, %v1150
          %v1190 = vpack.c.b16 %v1154, %v1151
          %v1191 = vpack.c.b16 %v1155, %v1152
          %v1192 = vpack.c.b16 %v1159, %v1156
          %v1193 = vpack.c.b16 %v1160, %v1157
          %v1194 = vpack.c.b16 %v1161, %v1158
          %v1195 = vpack.c.b16 %v1165, %v1162
          %v1196 = vpack.c.b16 %v1166, %v1163
          %v1197 = vpack.c.b16 %v1167, %v1164
          %v1198 = vpack.c.b16 %v1171, %v1168
          %v1199 = vpack.c.b16 %v1172, %v1169
          %v1200 = vpack.c.b16 %v1173, %v1170
          %v1201 = vpack.c.b16 %v1177, %v1174
          %v1202 = vpack.c.b16 %v1178, %v1175
          %v1203 = vpack.c.b16 %v1179, %v1176
          %1228 = vmatprep.subr.bf16.mxu0 %v1181
          %1229 = vmatpush1.bf16.msra.mxu0 %v1180
          %1230 = vmatprep.subr.bf16.mxu0 %v1184
          %1231 = vmatpush1.bf16.msra.mxu0 %v1183
          %1232 = vmatprep.subr.bf16.mxu0 %v1187
          %1233 = vmatpush1.bf16.msra.mxu0 %v1186
          %1234 = vmatprep.subr.bf16.mxu0 %v1190
          %1235 = vmatpush1.bf16.msra.mxu0 %v1189
          %1236 = vmatprep.subr.bf16.mxu0 %v1193
          %1237 = vmatpush1.bf16.msra.mxu0 %v1192
          %1238 = vmatprep.subr.bf16.mxu0 %v1196
          %1239 = vmatpush1.bf16.msra.mxu0 %v1195
          %1240 = vmatprep.subr.bf16.mxu0 %v1199
          %1241 = vmatpush1.bf16.msra.mxu0 %v1198
          %1242 = vmatprep.subr.bf16.mxu0 %v1202
          %1243 = vmatpush1.bf16.msra.mxu0 %v1201
          %1244 = vmatprep.subr.bf16.mxu0 0
          %1245 = vmatpush1.bf16.msra.mxu0 0
          %1246 = vmatprep.subr.bf16.mxu0 0
          %1247 = vmatpush1.bf16.msra.mxu0 0
          %1248 = vmatprep.subr.bf16.mxu0 0
          %1249 = vmatpush1.bf16.msra.mxu0 0
          %1250 = vmatprep.subr.bf16.mxu0 0
          %1251 = vmatpush1.bf16.msra.mxu0 0
          %1252 = vmatprep.subr.bf16.mxu0 0
          %1253 = vmatpush1.bf16.msra.mxu0 0
          %1254 = vmatprep.subr.bf16.mxu0 0
          %1255 = vmatpush1.bf16.msra.mxu0 0
          %1256 = vmatprep.subr.bf16.mxu0 0
          %1257 = vmatpush1.bf16.msra.mxu0 0
          %1258 = vmatprep.subr.bf16.mxu0 0
          %1259 = vmatpush1.bf16.msra.mxu0 0
          %1260 = vmatprep.mubr.bf16.mxu0 0
          %1261 = vmatmul.mubr.bf16.gmra.mrb[0].mxu0 %v1035
          %v1262 = vpop.f32.mrb[0].mxu0
          %v1263 = vadd.f32 %v1088, %v1262
          %v1264 = vpop.f32.mrb[0].mxu0
          %v1265 = vadd.f32 %v1092, %v1264
          %v1266 = vpop.f32.mrb[0].mxu0
          %v1267 = vadd.f32 %v1088, %v1266
          %v1268 = vpop.f32.mrb[0].mxu0
          %v1269 = vadd.f32 %v1092, %v1268
          %1270 = vmatprep.mubr.bf16.mxu0 0
          %1271 = vmatmul.mubr.bf16.gmra.mrb[0].mxu0 %v1036
          %v1272 = vpop.f32.mrb[0].mxu0
          %v1273 = vadd.f32 %v1088, %v1272
          %v1274 = vpop.f32.mrb[0].mxu0
          %v1275 = vadd.f32 %v1092, %v1274
          %v1276 = vpop.f32.mrb[0].mxu0
          %v1277 = vadd.f32 %v1088, %v1276
          %v1278 = vpop.f32.mrb[0].mxu0
          %v1279 = vadd.f32 %v1092, %v1278
          %1280 = vmatprep.mubr.bf16.mxu0 0
          %1281 = vmatmul.mubr.bf16.gmra.mrb[0].mxu0 %v1037
          %v1282 = vpop.f32.mrb[0].mxu0
          %v1283 = vadd.f32 %v1088, %v1282
          %v1284 = vpop.f32.mrb[0].mxu0
          %v1285 = vadd.f32 %v1092, %v1284
          %v1286 = vpop.f32.mrb[0].mxu0
          %v1287 = vadd.f32 %v1088, %v1286
          %v1288 = vpop.f32.mrb[0].mxu0
          %v1289 = vadd.f32 %v1092, %v1288
          %1290 = vmatprep.mubr.bf16.mxu0 0
          %1291 = vmatmul.mubr.bf16.gmra.mrb[0].mxu0 %v1038
          %v1292 = vpop.f32.mrb[0].mxu0
          %v1293 = vadd.f32 %v1088, %v1292
          %v1294 = vpop.f32.mrb[0].mxu0
          %v1295 = vadd.f32 %v1092, %v1294
          %v1296 = vpop.f32.mrb[0].mxu0
          %v1297 = vadd.f32 %v1088, %v1296
          %v1298 = vpop.f32.mrb[0].mxu0
          %v1299 = vadd.f32 %v1092, %v1298
          %1300 = vmatprep.mubr.bf16.mxu0 0
          %1301 = vmatmul.mubr.bf16.gmra.mrb[0].mxu0 %v1039
          %v1302 = vpop.f32.mrb[0].mxu0
          %v1303 = vadd.f32 %v1088, %v1302
          %v1304 = vpop.f32.mrb[0].mxu0
          %v1305 = vadd.f32 %v1092, %v1304
          %v1306 = vpop.f32.mrb[0].mxu0
          %v1307 = vadd.f32 %v1088, %v1306
          %v1308 = vpop.f32.mrb[0].mxu0
          %v1309 = vadd.f32 %v1092, %v1308
          %1310 = vmatprep.mubr.bf16.mxu0 0
          %1311 = vmatmul.mubr.bf16.gmra.mrb[0].mxu0 %v1040
          %v1312 = vpop.f32.mrb[0].mxu0
          %v1313 = vadd.f32 %v1088, %v1312
          %v1314 = vpop.f32.mrb[0].mxu0
          %v1315 = vadd.f32 %v1092, %v1314
          %v1316 = vpop.f32.mrb[0].mxu0
          %v1317 = vadd.f32 %v1088, %v1316
          %v1318 = vpop.f32.mrb[0].mxu0
          %v1319 = vadd.f32 %v1092, %v1318
          %1320 = vmatprep.mubr.bf16.mxu0 0
          %1321 = vmatmul.mubr.bf16.gmra.mrb[0].mxu0 %v1041
          %v1322 = vpop.f32.mrb[0].mxu0
          %v1323 = vadd.f32 %v1088, %v1322
          %v1324 = vpop.f32.mrb[0].mxu0
          %v1325 = vadd.f32 %v1092, %v1324
          %v1326 = vpop.f32.mrb[0].mxu0
          %v1327 = vadd.f32 %v1088, %v1326
          %v1328 = vpop.f32.mrb[0].mxu0
          %v1329 = vadd.f32 %v1092, %v1328
          %1330 = vmatprep.mubr.bf16.mxu0 0
          %1331 = vmatmul.mubr.bf16.gmra.mrb[0].mxu0 %v1042
          %v1332 = vpop.f32.mrb[0].mxu0
          %v1333 = vadd.f32 %v1088, %v1332
          %v1334 = vpop.f32.mrb[0].mxu0
          %v1335 = vadd.f32 %v1092, %v1334
          %v1336 = vpop.f32.mrb[0].mxu0
          %v1337 = vadd.f32 %v1088, %v1336
          %v1338 = vpop.f32.mrb[0].mxu0
          %v1339 = vadd.f32 %v1092, %v1338
          %1340 = vmatprep.mubr.bf16.mxu0 0
          %1341 = vmatmul.mubr.bf16.gmra.mrb[0].mxu0 %v1043
          %v1342 = vpop.f32.mrb[0].mxu0
          %v1343 = vadd.f32 %v1088, %v1342
          %v1344 = vpop.f32.mrb[0].mxu0
          %v1345 = vadd.f32 %v1092, %v1344
          %v1346 = vpop.f32.mrb[0].mxu0
          %v1347 = vadd.f32 %v1088, %v1346
          %v1348 = vpop.f32.mrb[0].mxu0
          %v1349 = vadd.f32 %v1092, %v1348
          %1350 = vmatprep.mubr.bf16.mxu0 0
          %1351 = vmatmul.mubr.bf16.gmra.mrb[0].mxu0 %v1044
          %v1352 = vpop.f32.mrb[0].mxu0
          %v1353 = vadd.f32 %v1088, %v1352
          %v1354 = vpop.f32.mrb[0].mxu0
          %v1355 = vadd.f32 %v1092, %v1354
          %v1356 = vpop.f32.mrb[0].mxu0
          %v1357 = vadd.f32 %v1088, %v1356
          %v1358 = vpop.f32.mrb[0].mxu0
          %v1359 = vadd.f32 %v1092, %v1358
          %1360 = vmatprep.mubr.bf16.mxu0 0
          %1361 = vmatmul.mubr.bf16.gmra.mrb[0].mxu0 %v1045
          %v1362 = vpop.f32.mrb[0].mxu0
          %v1363 = vadd.f32 %v1088, %v1362
          %v1364 = vpop.f32.mrb[0].mxu0
          %v1365 = vadd.f32 %v1092, %v1364
          %v1366 = vpop.f32.mrb[0].mxu0
          %v1367 = vadd.f32 %v1088, %v1366
          %v1368 = vpop.f32.mrb[0].mxu0
          %v1369 = vadd.f32 %v1092, %v1368
          %1370 = vmatprep.mubr.bf16.mxu0 0
          %1371 = vmatmul.mubr.bf16.gmra.mrb[0].mxu0 %v1046
          %v1372 = vpop.f32.mrb[0].mxu0
          %v1373 = vadd.f32 %v1088, %v1372
          %v1374 = vpop.f32.mrb[0].mxu0
          %v1375 = vadd.f32 %v1092, %v1374
          %v1376 = vpop.f32.mrb[0].mxu0
          %v1377 = vadd.f32 %v1088, %v1376
          %v1378 = vpop.f32.mrb[0].mxu0
          %v1379 = vadd.f32 %v1092, %v1378
          %1380 = vmatprep.mubr.bf16.mxu0 0
          %1381 = vmatmul.mubr.bf16.gmra.mrb[0].mxu0 %v1047
          %v1382 = vpop.f32.mrb[0].mxu0
          %v1383 = vadd.f32 %v1088, %v1382
          %v1384 = vpop.f32.mrb[0].mxu0
          %v1385 = vadd.f32 %v1092, %v1384
          %v1386 = vpop.f32.mrb[0].mxu0
          %v1387 = vadd.f32 %v1088, %v1386
          %v1388 = vpop.f32.mrb[0].mxu0
          %v1389 = vadd.f32 %v1092, %v1388
          %1390 = vmatprep.mubr.bf16.mxu0 0
          %1391 = vmatmul.mubr.bf16.gmra.mrb[0].mxu0 %v1048
          %v1392 = vpop.f32.mrb[0].mxu0
          %v1393 = vadd.f32 %v1088, %v1392
          %v1394 = vpop.f32.mrb[0].mxu0
          %v1395 = vadd.f32 %v1092, %v1394
          %v1396 = vpop.f32.mrb[0].mxu0
          %v1397 = vadd.f32 %v1088, %v1396
          %v1398 = vpop.f32.mrb[0].mxu0
          %v1399 = vadd.f32 %v1092, %v1398
          %1400 = vmatprep.mubr.bf16.mxu0 0
          %1401 = vmatmul.mubr.bf16.gmra.mrb[0].mxu0 %v1049
          %v1402 = vpop.f32.mrb[0].mxu0
          %v1403 = vadd.f32 %v1088, %v1402
          %v1404 = vpop.f32.mrb[0].mxu0
          %v1405 = vadd.f32 %v1092, %v1404
          %v1406 = vpop.f32.mrb[0].mxu0
          %v1407 = vadd.f32 %v1088, %v1406
          %v1408 = vpop.f32.mrb[0].mxu0
          %v1409 = vadd.f32 %v1092, %v1408
          %1410 = vmatprep.mubr.bf16.mxu0 0
          %1411 = vmatmul.mubr.bf16.gmra.mrb[0].mxu0 %v1050
          %v1412 = vpop.f32.mrb[0].mxu0
          %v1413 = vadd.f32 %v1088, %v1412
          %v1414 = vpop.f32.mrb[0].mxu0
          %v1415 = vadd.f32 %v1092, %v1414
          %v1416 = vpop.f32.mrb[0].mxu0
          %v1417 = vadd.f32 %v1088, %v1416
          %v1418 = vpop.f32.mrb[0].mxu0
          %v1419 = vadd.f32 %v1092, %v1418
          %1420 = vdwg.mxu0
          %1421 = vmatprep.subr.bf16.mxu0 0
          %1422 = vmatpush1.bf16.msra.mxu0 %v1182
          %1423 = vmatprep.subr.bf16.mxu0 0
          %1424 = vmatpush1.bf16.msra.mxu0 %v1185
          %1425 = vmatprep.subr.bf16.mxu0 0
          %1426 = vmatpush1.bf16.msra.mxu0 %v1188
          %1427 = vmatprep.subr.bf16.mxu0 0
          %1428 = vmatpush1.bf16.msra.mxu0 %v1191
          %1429 = vmatprep.subr.bf16.mxu0 0
          %1430 = vmatpush1.bf16.msra.mxu0 %v1194
          %1431 = vmatprep.subr.bf16.mxu0 0
          %1432 = vmatpush1.bf16.msra.mxu0 %v1197
          %1433 = vmatprep.subr.bf16.mxu0 0
          %1434 = vmatpush1.bf16.msra.mxu0 %v1200
          %1435 = vmatprep.subr.bf16.mxu0 0
          %1436 = vmatpush1.bf16.msra.mxu0 %v1203
          %1437 = vmatprep.subr.bf16.mxu0 0
          %1438 = vmatpush1.bf16.msra.mxu0 0
          %1439 = vmatprep.subr.bf16.mxu0 0
          %1440 = vmatpush1.bf16.msra.mxu0 0
          %1441 = vmatprep.subr.bf16.mxu0 0
          %1442 = vmatpush1.bf16.msra.mxu0 0
          %1443 = vmatprep.subr.bf16.mxu0 0
          %1444 = vmatpush1.bf16.msra.mxu0 0
          %1445 = vmatprep.subr.bf16.mxu0 0
          %1446 = vmatpush1.bf16.msra.mxu0 0
          %1447 = vmatprep.subr.bf16.mxu0 0
          %1448 = vmatpush1.bf16.msra.mxu0 0
          %1449 = vmatprep.subr.bf16.mxu0 0
          %1450 = vmatpush1.bf16.msra.mxu0 0
          %1451 = vmatprep.subr.bf16.mxu0 0
          %1452 = vmatpush1.bf16.msra.mxu0 0
          %1453 = vmatprep.mubr.bf16.mxu0 0
          %1454 = vmatmul.mubr.bf16.gmra.mrb[0].mxu0 %v1035
          %v1455 = vpop.f32.mrb[0].mxu0
          %v1456 = vadd.f32 %v1096, %v1455
          %v1457 = vpop.f32.mrb[0].mxu0
          %v1458 = vpop.f32.mrb[0].mxu0
          %v1459 = vadd.f32 %v1096, %v1458
          %v1460 = vpop.f32.mrb[0].mxu0
          %1461 = vmatprep.mubr.bf16.mxu0 0
          %1462 = vmatmul.mubr.bf16.gmra.mrb[0].mxu0 %v1036
          %v1463 = vpop.f32.mrb[0].mxu0
          %v1464 = vadd.f32 %v1096, %v1463
          %v1465 = vpop.f32.mrb[0].mxu0
          %v1466 = vpop.f32.mrb[0].mxu0
          %v1467 = vadd.f32 %v1096, %v1466
          %v1468 = vpop.f32.mrb[0].mxu0
          %1469 = vmatprep.mubr.bf16.mxu0 0
          %1470 = vmatmul.mubr.bf16.gmra.mrb[0].mxu0 %v1037
          %v1471 = vpop.f32.mrb[0].mxu0
          %v1472 = vadd.f32 %v1096, %v1471
          %v1473 = vpop.f32.mrb[0].mxu0
          %v1474 = vpop.f32.mrb[0].mxu0
          %v1475 = vadd.f32 %v1096, %v1474
          %v1476 = vpop.f32.mrb[0].mxu0
          %1477 = vmatprep.mubr.bf16.mxu0 0
          %1478 = vmatmul.mubr.bf16.gmra.mrb[0].mxu0 %v1038
          %v1479 = vpop.f32.mrb[0].mxu0
          %v1480 = vadd.f32 %v1096, %v1479
          %v1481 = vpop.f32.mrb[0].mxu0
          %v1482 = vpop.f32.mrb[0].mxu0
          %v1483 = vadd.f32 %v1096, %v1482
          %v1484 = vpop.f32.mrb[0].mxu0
          %1485 = vmatprep.mubr.bf16.mxu0 0
          %1486 = vmatmul.mubr.bf16.gmra.mrb[0].mxu0 %v1039
          %v1487 = vpop.f32.mrb[0].mxu0
          %v1488 = vadd.f32 %v1096, %v1487
          %v1489 = vpop.f32.mrb[0].mxu0
          %v1490 = vpop.f32.mrb[0].mxu0
          %v1491 = vadd.f32 %v1096, %v1490
          %v1492 = vpop.f32.mrb[0].mxu0
          %1493 = vmatprep.mubr.bf16.mxu0 0
          %1494 = vmatmul.mubr.bf16.gmra.mrb[0].mxu0 %v1040
          %v1495 = vpop.f32.mrb[0].mxu0
          %v1496 = vadd.f32 %v1096, %v1495
          %v1497 = vpop.f32.mrb[0].mxu0
          %v1498 = vpop.f32.mrb[0].mxu0
          %v1499 = vadd.f32 %v1096, %v1498
          %v1500 = vpop.f32.mrb[0].mxu0
          %1501 = vmatprep.mubr.bf16.mxu0 0
          %1502 = vmatmul.mubr.bf16.gmra.mrb[0].mxu0 %v1041
          %v1503 = vpop.f32.mrb[0].mxu0
          %v1504 = vadd.f32 %v1096, %v1503
          %v1505 = vpop.f32.mrb[0].mxu0
          %v1506 = vpop.f32.mrb[0].mxu0
          %v1507 = vadd.f32 %v1096, %v1506
          %v1508 = vpop.f32.mrb[0].mxu0
          %1509 = vmatprep.mubr.bf16.mxu0 0
          %1510 = vmatmul.mubr.bf16.gmra.mrb[0].mxu0 %v1042
          %v1511 = vpop.f32.mrb[0].mxu0
          %v1512 = vadd.f32 %v1096, %v1511
          %v1513 = vpop.f32.mrb[0].mxu0
          %v1514 = vpop.f32.mrb[0].mxu0
          %v1515 = vadd.f32 %v1096, %v1514
          %v1516 = vpop.f32.mrb[0].mxu0
          %1517 = vmatprep.mubr.bf16.mxu0 0
          %1518 = vmatmul.mubr.bf16.gmra.mrb[0].mxu0 %v1043
          %v1519 = vpop.f32.mrb[0].mxu0
          %v1520 = vadd.f32 %v1096, %v1519
          %v1521 = vpop.f32.mrb[0].mxu0
          %v1522 = vpop.f32.mrb[0].mxu0
          %v1523 = vadd.f32 %v1096, %v1522
          %v1524 = vpop.f32.mrb[0].mxu0
          %1525 = vmatprep.mubr.bf16.mxu0 0
          %1526 = vmatmul.mubr.bf16.gmra.mrb[0].mxu0 %v1044
          %v1527 = vpop.f32.mrb[0].mxu0
          %v1528 = vadd.f32 %v1096, %v1527
          %v1529 = vpop.f32.mrb[0].mxu0
          %v1530 = vpop.f32.mrb[0].mxu0
          %v1531 = vadd.f32 %v1096, %v1530
          %v1532 = vpop.f32.mrb[0].mxu0
          %1533 = vmatprep.mubr.bf16.mxu0 0
          %1534 = vmatmul.mubr.bf16.gmra.mrb[0].mxu0 %v1045
          %v1535 = vpop.f32.mrb[0].mxu0
          %v1536 = vadd.f32 %v1096, %v1535
          %v1537 = vpop.f32.mrb[0].mxu0
          %v1538 = vpop.f32.mrb[0].mxu0
          %v1539 = vadd.f32 %v1096, %v1538
          %v1540 = vpop.f32.mrb[0].mxu0
          %1541 = vmatprep.mubr.bf16.mxu0 0
          %1542 = vmatmul.mubr.bf16.gmra.mrb[0].mxu0 %v1046
          %v1543 = vpop.f32.mrb[0].mxu0
          %v1544 = vadd.f32 %v1096, %v1543
          %v1545 = vpop.f32.mrb[0].mxu0
          %v1546 = vpop.f32.mrb[0].mxu0
          %v1547 = vadd.f32 %v1096, %v1546
          %v1548 = vpop.f32.mrb[0].mxu0
          %1549 = vmatprep.mubr.bf16.mxu0 0
          %1550 = vmatmul.mubr.bf16.gmra.mrb[0].mxu0 %v1047
          %v1551 = vpop.f32.mrb[0].mxu0
          %v1552 = vadd.f32 %v1096, %v1551
          %v1553 = vpop.f32.mrb[0].mxu0
          %v1554 = vpop.f32.mrb[0].mxu0
          %v1555 = vadd.f32 %v1096, %v1554
          %v1556 = vpop.f32.mrb[0].mxu0
          %1557 = vmatprep.mubr.bf16.mxu0 0
          %1558 = vmatmul.mubr.bf16.gmra.mrb[0].mxu0 %v1048
          %v1559 = vpop.f32.mrb[0].mxu0
          %v1560 = vadd.f32 %v1096, %v1559
          %v1561 = vpop.f32.mrb[0].mxu0
          %v1562 = vpop.f32.mrb[0].mxu0
          %v1563 = vadd.f32 %v1096, %v1562
          %v1564 = vpop.f32.mrb[0].mxu0
          %1565 = vmatprep.mubr.bf16.mxu0 0
          %1566 = vmatmul.mubr.bf16.gmra.mrb[0].mxu0 %v1049
          %v1567 = vpop.f32.mrb[0].mxu0
          %v1568 = vadd.f32 %v1096, %v1567
          %v1569 = vpop.f32.mrb[0].mxu0
          %v1570 = vpop.f32.mrb[0].mxu0
          %v1571 = vadd.f32 %v1096, %v1570
          %v1572 = vpop.f32.mrb[0].mxu0
          %1573 = vmatprep.mubr.bf16.mxu0 0
          %1574 = vmatmul.mubr.bf16.gmra.mrb[0].mxu0 %v1050
          %v1575 = vpop.f32.mrb[0].mxu0
          %v1576 = vadd.f32 %v1096, %v1575
          %v1577 = vpop.f32.mrb[0].mxu0
          %v1578 = vpop.f32.mrb[0].mxu0
          %v1579 = vadd.f32 %v1096, %v1578
          %v1580 = vpop.f32.mrb[0].mxu0
          %1581 = vdwg.mxu0
          %v1582 = vpack.c.bf16 %v1267, %v1263
          %v1583 = vpack.c.bf16 %v1277, %v1273
          %v1584 = vpack.c.bf16 %v1287, %v1283
          %v1585 = vpack.c.bf16 %v1297, %v1293
          %v1586 = vpack.c.bf16 %v1307, %v1303
          %v1587 = vpack.c.bf16 %v1317, %v1313
          %v1588 = vpack.c.bf16 %v1327, %v1323
          %v1589 = vpack.c.bf16 %v1337, %v1333
          %v1590 = vpack.c.bf16 %v1347, %v1343
          %v1591 = vpack.c.bf16 %v1357, %v1353
          %v1592 = vpack.c.bf16 %v1367, %v1363
          %v1593 = vpack.c.bf16 %v1377, %v1373
          %v1594 = vpack.c.bf16 %v1387, %v1383
          %v1595 = vpack.c.bf16 %v1397, %v1393
          %v1596 = vpack.c.bf16 %v1407, %v1403
          %v1597 = vpack.c.bf16 %v1417, %v1413
          %1598 = vst [vmem:[#allocation2] sm:$0xff] %v1582
          %1599 = vst [vmem:[#allocation2 + $0x8] sm:$0xff] %v1583
          %1600 = vst [vmem:[#allocation2 + $0x10] sm:$0xff] %v1584
          %1601 = vst [vmem:[#allocation2 + $0x18] sm:$0xff] %v1585
          %1602 = vst [vmem:[#allocation2 + $0x20] sm:$0xff] %v1586
          %1603 = vst [vmem:[#allocation2 + $0x28] sm:$0xff] %v1587
          %1604 = vst [vmem:[#allocation2 + $0x30] sm:$0xff] %v1588
          %1605 = vst [vmem:[#allocation2 + $0x38] sm:$0xff] %v1589
          %1606 = vst [vmem:[#allocation2 + $0x40] sm:$0xff] %v1590
          %1607 = vst [vmem:[#allocation2 + $0x48] sm:$0xff] %v1591
          %1608 = vst [vmem:[#allocation2 + $0x50] sm:$0xff] %v1592
          %1609 = vst [vmem:[#allocation2 + $0x58] sm:$0xff] %v1593
          %1610 = vst [vmem:[#allocation2 + $0x60] sm:$0xff] %v1594
          %1611 = vst [vmem:[#allocation2 + $0x68] sm:$0xff] %v1595
          %1612 = vst [vmem:[#allocation2 + $0x70] sm:$0xff] %v1596
          %1613 = vst [vmem:[#allocation2 + $0x78] sm:$0xff] %v1597
          %v1614 = vpack.c.bf16 %v1269, %v1265
          %v1615 = vpack.c.bf16 %v1279, %v1275
          %v1616 = vpack.c.bf16 %v1289, %v1285
          %v1617 = vpack.c.bf16 %v1299, %v1295
          %v1618 = vpack.c.bf16 %v1309, %v1305
          %v1619 = vpack.c.bf16 %v1319, %v1315
          %v1620 = vpack.c.bf16 %v1329, %v1325
          %v1621 = vpack.c.bf16 %v1339, %v1335
          %v1622 = vpack.c.bf16 %v1349, %v1345
          %v1623 = vpack.c.bf16 %v1359, %v1355
          %v1624 = vpack.c.bf16 %v1369, %v1365
          %v1625 = vpack.c.bf16 %v1379, %v1375
          %v1626 = vpack.c.bf16 %v1389, %v1385
          %v1627 = vpack.c.bf16 %v1399, %v1395
          %v1628 = vpack.c.bf16 %v1409, %v1405
          %v1629 = vpack.c.bf16 %v1419, %v1415
          %1630 = vst [vmem:[#allocation3] sm:$0xff] %v1614
          %1631 = vst [vmem:[#allocation3 + $0x8] sm:$0xff] %v1615
          %1632 = vst [vmem:[#allocation3 + $0x10] sm:$0xff] %v1616
          %1633 = vst [vmem:[#allocation3 + $0x18] sm:$0xff] %v1617
          %1634 = vst [vmem:[#allocation3 + $0x20] sm:$0xff] %v1618
          %1635 = vst [vmem:[#allocation3 + $0x28] sm:$0xff] %v1619
          %1636 = vst [vmem:[#allocation3 + $0x30] sm:$0xff] %v1620
          %1637 = vst [vmem:[#allocation3 + $0x38] sm:$0xff] %v1621
          %1638 = vst [vmem:[#allocation3 + $0x40] sm:$0xff] %v1622
          %1639 = vst [vmem:[#allocation3 + $0x48] sm:$0xff] %v1623
          %1640 = vst [vmem:[#allocation3 + $0x50] sm:$0xff] %v1624
          %1641 = vst [vmem:[#allocation3 + $0x58] sm:$0xff] %v1625
          %1642 = vst [vmem:[#allocation3 + $0x60] sm:$0xff] %v1626
          %1643 = vst [vmem:[#allocation3 + $0x68] sm:$0xff] %v1627
          %1644 = vst [vmem:[#allocation3 + $0x70] sm:$0xff] %v1628
          %1645 = vst [vmem:[#allocation3 + $0x78] sm:$0xff] %v1629
          %v1646 = vpack.c.bf16 %v1459, %v1456
          %v1647 = vpack.c.bf16 %v1467, %v1464
          %v1648 = vpack.c.bf16 %v1475, %v1472
          %v1649 = vpack.c.bf16 %v1483, %v1480
          %v1650 = vpack.c.bf16 %v1491, %v1488
          %v1651 = vpack.c.bf16 %v1499, %v1496
          %v1652 = vpack.c.bf16 %v1507, %v1504
          %v1653 = vpack.c.bf16 %v1515, %v1512
          %v1654 = vpack.c.bf16 %v1523, %v1520
          %v1655 = vpack.c.bf16 %v1531, %v1528
          %v1656 = vpack.c.bf16 %v1539, %v1536
          %v1657 = vpack.c.bf16 %v1547, %v1544
          %v1658 = vpack.c.bf16 %v1555, %v1552
          %v1659 = vpack.c.bf16 %v1563, %v1560
          %v1660 = vpack.c.bf16 %v1571, %v1568
          %v1661 = vpack.c.bf16 %v1579, %v1576
          %1662 = vst [vmem:[#allocation4] sm:$0xff] %v1646
          %1663 = vst [vmem:[#allocation4 + $0x8] sm:$0xff] %v1647
          %1664 = vst [vmem:[#allocation4 + $0x10] sm:$0xff] %v1648
          %1665 = vst [vmem:[#allocation4 + $0x18] sm:$0xff] %v1649
          %1666 = vst [vmem:[#allocation4 + $0x20] sm:$0xff] %v1650
          %1667 = vst [vmem:[#allocation4 + $0x28] sm:$0xff] %v1651
          %1668 = vst [vmem:[#allocation4 + $0x30] sm:$0xff] %v1652
          %1669 = vst [vmem:[#allocation4 + $0x38] sm:$0xff] %v1653
          %1670 = vst [vmem:[#allocation4 + $0x40] sm:$0xff] %v1654
          %1671 = vst [vmem:[#allocation4 + $0x48] sm:$0xff] %v1655
          %1672 = vst [vmem:[#allocation4 + $0x50] sm:$0xff] %v1656
          %1673 = vst [vmem:[#allocation4 + $0x58] sm:$0xff] %v1657
          %1674 = vst [vmem:[#allocation4 + $0x60] sm:$0xff] %v1658
          %1675 = vst [vmem:[#allocation4 + $0x68] sm:$0xff] %v1659
          %1676 = vst [vmem:[#allocation4 + $0x70] sm:$0xff] %v1660
          %1677 = vst [vmem:[#allocation4 + $0x78] sm:$0xff] %v1661
        $region84: #{attn_block_forward.1} parent=55 // pred_fallthru
          _
        %s1678 = smul.u32 %s34, 256
        %s1679 = sshra.s32 %s1678, 4
        %s1680 = sand.u32 %s1678, 15
        %s1681 = smul.addr %s1679, 8
        %s1682 = scalar_lea.vmem [#allocation2], %s1681
        %v1683 = vld [vmem:[%s1682] sm:$0xff]
        %v1684 = vld [vmem:[%s1682 + $0x8] sm:$0xff]
        %v1685 = vld [vmem:[%s1682 + $0x10] sm:$0xff]
        %v1686 = vld [vmem:[%s1682 + $0x18] sm:$0xff]
        %v1687 = vld [vmem:[%s1682 + $0x20] sm:$0xff]
        %v1688 = vld [vmem:[%s1682 + $0x28] sm:$0xff]
        %v1689 = vld [vmem:[%s1682 + $0x30] sm:$0xff]
        %v1690 = vld [vmem:[%s1682 + $0x38] sm:$0xff]
        %v1691 = vld [vmem:[%s1682 + $0x40] sm:$0xff]
        %v1692 = vld [vmem:[%s1682 + $0x48] sm:$0xff]
        %v1693 = vld [vmem:[%s1682 + $0x50] sm:$0xff]
        %v1694 = vld [vmem:[%s1682 + $0x58] sm:$0xff]
        %v1695 = vld [vmem:[%s1682 + $0x60] sm:$0xff]
        %v1696 = vld [vmem:[%s1682 + $0x68] sm:$0xff]
        %v1697 = vld [vmem:[%s1682 + $0x70] sm:$0xff]
        %v1698 = vld [vmem:[%s1682 + $0x78] sm:$0xff]
        %v1699 = vld [vmem:[#allocation3] sm:$0xff]
        %v1700 = vld [vmem:[#allocation3 + $0x8] sm:$0xff]
        %v1701 = vld [vmem:[#allocation3 + $0x10] sm:$0xff]
        %v1702 = vld [vmem:[#allocation3 + $0x18] sm:$0xff]
        %v1703 = vld [vmem:[#allocation3 + $0x20] sm:$0xff]
        %v1704 = vld [vmem:[#allocation3 + $0x28] sm:$0xff]
        %v1705 = vld [vmem:[#allocation3 + $0x30] sm:$0xff]
        %v1706 = vld [vmem:[#allocation3 + $0x38] sm:$0xff]
        %v1707 = vld [vmem:[#allocation3 + $0x40] sm:$0xff]
        %v1708 = vld [vmem:[#allocation3 + $0x48] sm:$0xff]
        %v1709 = vld [vmem:[#allocation3 + $0x50] sm:$0xff]
        %v1710 = vld [vmem:[#allocation3 + $0x58] sm:$0xff]
        %v1711 = vld [vmem:[#allocation3 + $0x60] sm:$0xff]
        %v1712 = vld [vmem:[#allocation3 + $0x68] sm:$0xff]
        %v1713 = vld [vmem:[#allocation3 + $0x70] sm:$0xff]
        %v1714 = vld [vmem:[#allocation3 + $0x78] sm:$0xff]
        %1715 = vmatprep.subr.bf16.mxu0 0
        %1716 = vmatpush1.bf16.xpose.msra.mxu0 %v1699
        %1717 = vmatprep.subr.bf16.mxu0 0
        %1718 = vmatpush1.bf16.xpose.msra.mxu0 %v1700
        %1719 = vmatprep.subr.bf16.mxu0 0
        %1720 = vmatpush1.bf16.xpose.msra.mxu0 %v1701
        %1721 = vmatprep.subr.bf16.mxu0 0
        %1722 = vmatpush1.bf16.xpose.msra.mxu0 %v1702
        %1723 = vmatprep.subr.bf16.mxu0 0
        %1724 = vmatpush1.bf16.xpose.msra.mxu0 %v1703
        %1725 = vmatprep.subr.bf16.mxu0 0
        %1726 = vmatpush1.bf16.xpose.msra.mxu0 %v1704
        %1727 = vmatprep.subr.bf16.mxu0 0
        %1728 = vmatpush1.bf16.xpose.msra.mxu0 %v1705
        %1729 = vmatprep.subr.bf16.mxu0 0
        %1730 = vmatpush1.bf16.xpose.msra.mxu0 %v1706
        %1731 = vmatprep.subr.bf16.mxu0 0
        %1732 = vmatpush1.bf16.xpose.msra.mxu0 %v1707
        %1733 = vmatprep.subr.bf16.mxu0 0
        %1734 = vmatpush1.bf16.xpose.msra.mxu0 %v1708
        %1735 = vmatprep.subr.bf16.mxu0 0
        %1736 = vmatpush1.bf16.xpose.msra.mxu0 %v1709
        %1737 = vmatprep.subr.bf16.mxu0 0
        %1738 = vmatpush1.bf16.xpose.msra.mxu0 %v1710
        %1739 = vmatprep.subr.bf16.mxu0 0
        %1740 = vmatpush1.bf16.xpose.msra.mxu0 %v1711
        %1741 = vmatprep.subr.bf16.mxu0 0
        %1742 = vmatpush1.bf16.xpose.msra.mxu0 %v1712
        %1743 = vmatprep.subr.bf16.mxu0 0
        %1744 = vmatpush1.bf16.xpose.msra.mxu0 %v1713
        %1745 = vmatprep.subr.bf16.mxu0 0
        %1746 = vmatpush1.bf16.xpose.msra.mxu0 %v1714
        %1747 = vmatprep.mubr.bf16.mxu0 0
        %1748 = vmatmul.mubr.bf16.gmra.mrb[0].mxu0 %v1683
        %v1749 = vpop.f32.mrb[0].mxu0
        %v1750 = vadd.f32 0.0, %v1749
        %v1751 = vpop.f32.mrb[0].mxu0
        %v1752 = vadd.f32 0.0, %v1751
        %v1753 = vpop.f32.mrb[0].mxu0
        %v1754 = vadd.f32 0.0, %v1753
        %v1755 = vpop.f32.mrb[0].mxu0
        %v1756 = vadd.f32 0.0, %v1755
        %1757 = vmatprep.mubr.bf16.mxu0 0
        %1758 = vmatmul.mubr.bf16.gmra.mrb[0].mxu0 %v1684
        %v1759 = vpop.f32.mrb[0].mxu0
        %v1760 = vadd.f32 0.0, %v1759
        %v1761 = vpop.f32.mrb[0].mxu0
        %v1762 = vadd.f32 0.0, %v1761
        %v1763 = vpop.f32.mrb[0].mxu0
        %v1764 = vadd.f32 0.0, %v1763
        %v1765 = vpop.f32.mrb[0].mxu0
        %v1766 = vadd.f32 0.0, %v1765
        %1767 = vmatprep.mubr.bf16.mxu0 0
        %1768 = vmatmul.mubr.bf16.gmra.mrb[0].mxu0 %v1685
        %v1769 = vpop.f32.mrb[0].mxu0
        %v1770 = vadd.f32 0.0, %v1769
        %v1771 = vpop.f32.mrb[0].mxu0
        %v1772 = vadd.f32 0.0, %v1771
        %v1773 = vpop.f32.mrb[0].mxu0
        %v1774 = vadd.f32 0.0, %v1773
        %v1775 = vpop.f32.mrb[0].mxu0
        %v1776 = vadd.f32 0.0, %v1775
        %1777 = vmatprep.mubr.bf16.mxu0 0
        %1778 = vmatmul.mubr.bf16.gmra.mrb[0].mxu0 %v1686
        %v1779 = vpop.f32.mrb[0].mxu0
        %v1780 = vadd.f32 0.0, %v1779
        %v1781 = vpop.f32.mrb[0].mxu0
        %v1782 = vadd.f32 0.0, %v1781
        %v1783 = vpop.f32.mrb[0].mxu0
        %v1784 = vadd.f32 0.0, %v1783
        %v1785 = vpop.f32.mrb[0].mxu0
        %v1786 = vadd.f32 0.0, %v1785
        %1787 = vmatprep.mubr.bf16.mxu0 0
        %1788 = vmatmul.mubr.bf16.gmra.mrb[0].mxu0 %v1687
        %v1789 = vpop.f32.mrb[0].mxu0
        %v1790 = vadd.f32 0.0, %v1789
        %v1791 = vpop.f32.mrb[0].mxu0
        %v1792 = vadd.f32 0.0, %v1791
        %v1793 = vpop.f32.mrb[0].mxu0
        %v1794 = vadd.f32 0.0, %v1793
        %v1795 = vpop.f32.mrb[0].mxu0
        %v1796 = vadd.f32 0.0, %v1795
        %1797 = vmatprep.mubr.bf16.mxu0 0
        %1798 = vmatmul.mubr.bf16.gmra.mrb[0].mxu0 %v1688
        %v1799 = vpop.f32.mrb[0].mxu0
        %v1800 = vadd.f32 0.0, %v1799
        %v1801 = vpop.f32.mrb[0].mxu0
        %v1802 = vadd.f32 0.0, %v1801
        %v1803 = vpop.f32.mrb[0].mxu0
        %v1804 = vadd.f32 0.0, %v1803
        %v1805 = vpop.f32.mrb[0].mxu0
        %v1806 = vadd.f32 0.0, %v1805
        %1807 = vmatprep.mubr.bf16.mxu0 0
        %1808 = vmatmul.mubr.bf16.gmra.mrb[0].mxu0 %v1689
        %v1809 = vpop.f32.mrb[0].mxu0
        %v1810 = vadd.f32 0.0, %v1809
        %v1811 = vpop.f32.mrb[0].mxu0
        %v1812 = vadd.f32 0.0, %v1811
        %v1813 = vpop.f32.mrb[0].mxu0
        %v1814 = vadd.f32 0.0, %v1813
        %v1815 = vpop.f32.mrb[0].mxu0
        %v1816 = vadd.f32 0.0, %v1815
        %1817 = vmatprep.mubr.bf16.mxu0 0
        %1818 = vmatmul.mubr.bf16.gmra.mrb[0].mxu0 %v1690
        %v1819 = vpop.f32.mrb[0].mxu0
        %v1820 = vadd.f32 0.0, %v1819
        %v1821 = vpop.f32.mrb[0].mxu0
        %v1822 = vadd.f32 0.0, %v1821
        %v1823 = vpop.f32.mrb[0].mxu0
        %v1824 = vadd.f32 0.0, %v1823
        %v1825 = vpop.f32.mrb[0].mxu0
        %v1826 = vadd.f32 0.0, %v1825
        %1827 = vmatprep.mubr.bf16.mxu0 0
        %1828 = vmatmul.mubr.bf16.gmra.mrb[0].mxu0 %v1691
        %v1829 = vpop.f32.mrb[0].mxu0
        %v1830 = vadd.f32 0.0, %v1829
        %v1831 = vpop.f32.mrb[0].mxu0
        %v1832 = vadd.f32 0.0, %v1831
        %v1833 = vpop.f32.mrb[0].mxu0
        %v1834 = vadd.f32 0.0, %v1833
        %v1835 = vpop.f32.mrb[0].mxu0
        %v1836 = vadd.f32 0.0, %v1835
        %1837 = vmatprep.mubr.bf16.mxu0 0
        %1838 = vmatmul.mubr.bf16.gmra.mrb[0].mxu0 %v1692
        %v1839 = vpop.f32.mrb[0].mxu0
        %v1840 = vadd.f32 0.0, %v1839
        %v1841 = vpop.f32.mrb[0].mxu0
        %v1842 = vadd.f32 0.0, %v1841
        %v1843 = vpop.f32.mrb[0].mxu0
        %v1844 = vadd.f32 0.0, %v1843
        %v1845 = vpop.f32.mrb[0].mxu0
        %v1846 = vadd.f32 0.0, %v1845
        %1847 = vmatprep.mubr.bf16.mxu0 0
        %1848 = vmatmul.mubr.bf16.gmra.mrb[0].mxu0 %v1693
        %v1849 = vpop.f32.mrb[0].mxu0
        %v1850 = vadd.f32 0.0, %v1849
        %v1851 = vpop.f32.mrb[0].mxu0
        %v1852 = vadd.f32 0.0, %v1851
        %v1853 = vpop.f32.mrb[0].mxu0
        %v1854 = vadd.f32 0.0, %v1853
        %v1855 = vpop.f32.mrb[0].mxu0
        %v1856 = vadd.f32 0.0, %v1855
        %1857 = vmatprep.mubr.bf16.mxu0 0
        %1858 = vmatmul.mubr.bf16.gmra.mrb[0].mxu0 %v1694
        %v1859 = vpop.f32.mrb[0].mxu0
        %v1860 = vadd.f32 0.0, %v1859
        %v1861 = vpop.f32.mrb[0].mxu0
        %v1862 = vadd.f32 0.0, %v1861
        %v1863 = vpop.f32.mrb[0].mxu0
        %v1864 = vadd.f32 0.0, %v1863
        %v1865 = vpop.f32.mrb[0].mxu0
        %v1866 = vadd.f32 0.0, %v1865
        %1867 = vmatprep.mubr.bf16.mxu0 0
        %1868 = vmatmul.mubr.bf16.gmra.mrb[0].mxu0 %v1695
        %v1869 = vpop.f32.mrb[0].mxu0
        %v1870 = vadd.f32 0.0, %v1869
        %v1871 = vpop.f32.mrb[0].mxu0
        %v1872 = vadd.f32 0.0, %v1871
        %v1873 = vpop.f32.mrb[0].mxu0
        %v1874 = vadd.f32 0.0, %v1873
        %v1875 = vpop.f32.mrb[0].mxu0
        %v1876 = vadd.f32 0.0, %v1875
        %1877 = vmatprep.mubr.bf16.mxu0 0
        %1878 = vmatmul.mubr.bf16.gmra.mrb[0].mxu0 %v1696
        %v1879 = vpop.f32.mrb[0].mxu0
        %v1880 = vadd.f32 0.0, %v1879
        %v1881 = vpop.f32.mrb[0].mxu0
        %v1882 = vadd.f32 0.0, %v1881
        %v1883 = vpop.f32.mrb[0].mxu0
        %v1884 = vadd.f32 0.0, %v1883
        %v1885 = vpop.f32.mrb[0].mxu0
        %v1886 = vadd.f32 0.0, %v1885
        %1887 = vmatprep.mubr.bf16.mxu0 0
        %1888 = vmatmul.mubr.bf16.gmra.mrb[0].mxu0 %v1697
        %v1889 = vpop.f32.mrb[0].mxu0
        %v1890 = vadd.f32 0.0, %v1889
        %v1891 = vpop.f32.mrb[0].mxu0
        %v1892 = vadd.f32 0.0, %v1891
        %v1893 = vpop.f32.mrb[0].mxu0
        %v1894 = vadd.f32 0.0, %v1893
        %v1895 = vpop.f32.mrb[0].mxu0
        %v1896 = vadd.f32 0.0, %v1895
        %1897 = vmatprep.mubr.bf16.mxu0 0
        %1898 = vmatmul.mubr.bf16.gmra.mrb[0].mxu0 %v1698
        %v1899 = vpop.f32.mrb[0].mxu0
        %v1900 = vadd.f32 0.0, %v1899
        %v1901 = vpop.f32.mrb[0].mxu0
        %v1902 = vadd.f32 0.0, %v1901
        %v1903 = vpop.f32.mrb[0].mxu0
        %v1904 = vadd.f32 0.0, %v1903
        %v1905 = vpop.f32.mrb[0].mxu0
        %v1906 = vadd.f32 0.0, %v1905
        %1907 = vdwg.mxu0
        %v1908 = vmul.f32 %v1750, 0.088388346
        %v1909 = vmul.f32 %v1752, 0.088388346
        %v1910 = vmul.f32 %v1754, 0.088388346
        %v1911 = vmul.f32 %v1756, 0.088388346
        %v1912 = vmul.f32 %v1760, 0.088388346
        %v1913 = vmul.f32 %v1762, 0.088388346
        %v1914 = vmul.f32 %v1764, 0.088388346
        %v1915 = vmul.f32 %v1766, 0.088388346
        %v1916 = vmul.f32 %v1770, 0.088388346
        %v1917 = vmul.f32 %v1772, 0.088388346
        %v1918 = vmul.f32 %v1774, 0.088388346
        %v1919 = vmul.f32 %v1776, 0.088388346
        %v1920 = vmul.f32 %v1780, 0.088388346
        %v1921 = vmul.f32 %v1782, 0.088388346
        %v1922 = vmul.f32 %v1784, 0.088388346
        %v1923 = vmul.f32 %v1786, 0.088388346
        %v1924 = vmul.f32 %v1790, 0.088388346
        %v1925 = vmul.f32 %v1792, 0.088388346
        %v1926 = vmul.f32 %v1794, 0.088388346
        %v1927 = vmul.f32 %v1796, 0.088388346
        %v1928 = vmul.f32 %v1800, 0.088388346
        %v1929 = vmul.f32 %v1802, 0.088388346
        %v1930 = vmul.f32 %v1804, 0.088388346
        %v1931 = vmul.f32 %v1806, 0.088388346
        %v1932 = vmul.f32 %v1810, 0.088388346
        %v1933 = vmul.f32 %v1812, 0.088388346
        %v1934 = vmul.f32 %v1814, 0.088388346
        %v1935 = vmul.f32 %v1816, 0.088388346
        %v1936 = vmul.f32 %v1820, 0.088388346
        %v1937 = vmul.f32 %v1822, 0.088388346
        %v1938 = vmul.f32 %v1824, 0.088388346
        %v1939 = vmul.f32 %v1826, 0.088388346
        %v1940 = vmul.f32 %v1830, 0.088388346
        %v1941 = vmul.f32 %v1832, 0.088388346
        %v1942 = vmul.f32 %v1834, 0.088388346
        %v1943 = vmul.f32 %v1836, 0.088388346
        %v1944 = vmul.f32 %v1840, 0.088388346
        %v1945 = vmul.f32 %v1842, 0.088388346
        %v1946 = vmul.f32 %v1844, 0.088388346
        %v1947 = vmul.f32 %v1846, 0.088388346
        %v1948 = vmul.f32 %v1850, 0.088388346
        %v1949 = vmul.f32 %v1852, 0.088388346
        %v1950 = vmul.f32 %v1854, 0.088388346
        %v1951 = vmul.f32 %v1856, 0.088388346
        %v1952 = vmul.f32 %v1860, 0.088388346
        %v1953 = vmul.f32 %v1862, 0.088388346
        %v1954 = vmul.f32 %v1864, 0.088388346
        %v1955 = vmul.f32 %v1866, 0.088388346
        %v1956 = vmul.f32 %v1870, 0.088388346
        %v1957 = vmul.f32 %v1872, 0.088388346
        %v1958 = vmul.f32 %v1874, 0.088388346
        %v1959 = vmul.f32 %v1876, 0.088388346
        %v1960 = vmul.f32 %v1880, 0.088388346
        %v1961 = vmul.f32 %v1882, 0.088388346
        %v1962 = vmul.f32 %v1884, 0.088388346
        %v1963 = vmul.f32 %v1886, 0.088388346
        %v1964 = vmul.f32 %v1890, 0.088388346
        %v1965 = vmul.f32 %v1892, 0.088388346
        %v1966 = vmul.f32 %v1894, 0.088388346
        %v1967 = vmul.f32 %v1896, 0.088388346
        %v1968 = vmul.f32 %v1900, 0.088388346
        %v1969 = vmul.f32 %v1902, 0.088388346
        %v1970 = vmul.f32 %v1904, 0.088388346
        %v1971 = vmul.f32 %v1906, 0.088388346
        %v1972 = vmax.f32 %v1908, %v1909
        %1973 = vmax.xlane.f32.xlu0 %v1972
        %v1974 = vpop.xlane.xlu0 %1973
        %v1975 = vmax.f32 %v1910, %v1911
        %1976 = vmax.xlane.f32.xlu0 %v1975
        %v1977 = vpop.xlane.xlu0 %1976
        %v1978 = vmax.f32 %v1912, %v1913
        %1979 = vmax.xlane.f32.xlu0 %v1978
        %v1980 = vpop.xlane.xlu0 %1979
        %v1981 = vmax.f32 %v1914, %v1915
        %1982 = vmax.xlane.f32.xlu0 %v1981
        %v1983 = vpop.xlane.xlu0 %1982
        %v1984 = vmax.f32 %v1916, %v1917
        %1985 = vmax.xlane.f32.xlu0 %v1984
        %v1986 = vpop.xlane.xlu0 %1985
        %v1987 = vmax.f32 %v1918, %v1919
        %1988 = vmax.xlane.f32.xlu0 %v1987
        %v1989 = vpop.xlane.xlu0 %1988
        %v1990 = vmax.f32 %v1920, %v1921
        %1991 = vmax.xlane.f32.xlu0 %v1990
        %v1992 = vpop.xlane.xlu0 %1991
        %v1993 = vmax.f32 %v1922, %v1923
        %1994 = vmax.xlane.f32.xlu0 %v1993
        %v1995 = vpop.xlane.xlu0 %1994
        %v1996 = vmax.f32 %v1924, %v1925
        %1997 = vmax.xlane.f32.xlu0 %v1996
        %v1998 = vpop.xlane.xlu0 %1997
        %v1999 = vmax.f32 %v1926, %v1927
        %2000 = vmax.xlane.f32.xlu0 %v1999
        %v2001 = vpop.xlane.xlu0 %2000
        %v2002 = vmax.f32 %v1928, %v1929
        %2003 = vmax.xlane.f32.xlu0 %v2002
        %v2004 = vpop.xlane.xlu0 %2003
        %v2005 = vmax.f32 %v1930, %v1931
        %2006 = vmax.xlane.f32.xlu0 %v2005
        %v2007 = vpop.xlane.xlu0 %2006
        %v2008 = vmax.f32 %v1932, %v1933
        %2009 = vmax.xlane.f32.xlu0 %v2008
        %v2010 = vpop.xlane.xlu0 %2009
        %v2011 = vmax.f32 %v1934, %v1935
        %2012 = vmax.xlane.f32.xlu0 %v2011
        %v2013 = vpop.xlane.xlu0 %2012
        %v2014 = vmax.f32 %v1936, %v1937
        %2015 = vmax.xlane.f32.xlu0 %v2014
        %v2016 = vpop.xlane.xlu0 %2015
        %v2017 = vmax.f32 %v1938, %v1939
        %2018 = vmax.xlane.f32.xlu0 %v2017
        %v2019 = vpop.xlane.xlu0 %2018
        %v2020 = vmax.f32 %v1940, %v1941
        %2021 = vmax.xlane.f32.xlu0 %v2020
        %v2022 = vpop.xlane.xlu0 %2021
        %v2023 = vmax.f32 %v1942, %v1943
        %2024 = vmax.xlane.f32.xlu0 %v2023
        %v2025 = vpop.xlane.xlu0 %2024
        %v2026 = vmax.f32 %v1944, %v1945
        %2027 = vmax.xlane.f32.xlu0 %v2026
        %v2028 = vpop.xlane.xlu0 %2027
        %v2029 = vmax.f32 %v1946, %v1947
        %2030 = vmax.xlane.f32.xlu0 %v2029
        %v2031 = vpop.xlane.xlu0 %2030
        %v2032 = vmax.f32 %v1948, %v1949
        %2033 = vmax.xlane.f32.xlu0 %v2032
        %v2034 = vpop.xlane.xlu0 %2033
        %v2035 = vmax.f32 %v1950, %v1951
        %2036 = vmax.xlane.f32.xlu0 %v2035
        %v2037 = vpop.xlane.xlu0 %2036
        %v2038 = vmax.f32 %v1952, %v1953
        %2039 = vmax.xlane.f32.xlu0 %v2038
        %v2040 = vpop.xlane.xlu0 %2039
        %v2041 = vmax.f32 %v1954, %v1955
        %2042 = vmax.xlane.f32.xlu0 %v2041
        %v2043 = vpop.xlane.xlu0 %2042
        %v2044 = vmax.f32 %v1956, %v1957
        %2045 = vmax.xlane.f32.xlu0 %v2044
        %v2046 = vpop.xlane.xlu0 %2045
        %v2047 = vmax.f32 %v1958, %v1959
        %2048 = vmax.xlane.f32.xlu0 %v2047
        %v2049 = vpop.xlane.xlu0 %2048
        %v2050 = vmax.f32 %v1960, %v1961
        %2051 = vmax.xlane.f32.xlu0 %v2050
        %v2052 = vpop.xlane.xlu0 %2051
        %v2053 = vmax.f32 %v1962, %v1963
        %2054 = vmax.xlane.f32.xlu0 %v2053
        %v2055 = vpop.xlane.xlu0 %2054
        %v2056 = vmax.f32 %v1964, %v1965
        %2057 = vmax.xlane.f32.xlu0 %v2056
        %v2058 = vpop.xlane.xlu0 %2057
        %v2059 = vmax.f32 %v1966, %v1967
        %2060 = vmax.xlane.f32.xlu0 %v2059
        %v2061 = vpop.xlane.xlu0 %2060
        %v2062 = vmax.f32 %v1968, %v1969
        %2063 = vmax.xlane.f32.xlu0 %v2062
        %v2064 = vpop.xlane.xlu0 %2063
        %v2065 = vmax.f32 %v1970, %v1971
        %2066 = vmax.xlane.f32.xlu0 %v2065
        %v2067 = vpop.xlane.xlu0 %2066
        %v2068 = vsub.f32 %v1908, %v1974
        %v2069 = vsub.f32 %v1909, %v1974
        %v2070 = vsub.f32 %v1910, %v1977
        %v2071 = vsub.f32 %v1911, %v1977
        %v2072 = vsub.f32 %v1912, %v1980
        %v2073 = vsub.f32 %v1913, %v1980
        %v2074 = vsub.f32 %v1914, %v1983
        %v2075 = vsub.f32 %v1915, %v1983
        %v2076 = vsub.f32 %v1916, %v1986
        %v2077 = vsub.f32 %v1917, %v1986
        %v2078 = vsub.f32 %v1918, %v1989
        %v2079 = vsub.f32 %v1919, %v1989
        %v2080 = vsub.f32 %v1920, %v1992
        %v2081 = vsub.f32 %v1921, %v1992
        %v2082 = vsub.f32 %v1922, %v1995
        %v2083 = vsub.f32 %v1923, %v1995
        %v2084 = vsub.f32 %v1924, %v1998
        %v2085 = vsub.f32 %v1925, %v1998
        %v2086 = vsub.f32 %v1926, %v2001
        %v2087 = vsub.f32 %v1927, %v2001
        %v2088 = vsub.f32 %v1928, %v2004
        %v2089 = vsub.f32 %v1929, %v2004
        %v2090 = vsub.f32 %v1930, %v2007
        %v2091 = vsub.f32 %v1931, %v2007
        %v2092 = vsub.f32 %v1932, %v2010
        %v2093 = vsub.f32 %v1933, %v2010
        %v2094 = vsub.f32 %v1934, %v2013
        %v2095 = vsub.f32 %v1935, %v2013
        %v2096 = vsub.f32 %v1936, %v2016
        %v2097 = vsub.f32 %v1937, %v2016
        %v2098 = vsub.f32 %v1938, %v2019
        %v2099 = vsub.f32 %v1939, %v2019
        %v2100 = vsub.f32 %v1940, %v2022
        %v2101 = vsub.f32 %v1941, %v2022
        %v2102 = vsub.f32 %v1942, %v2025
        %v2103 = vsub.f32 %v1943, %v2025
        %v2104 = vsub.f32 %v1944, %v2028
        %v2105 = vsub.f32 %v1945, %v2028
        %v2106 = vsub.f32 %v1946, %v2031
        %v2107 = vsub.f32 %v1947, %v2031
        %v2108 = vsub.f32 %v1948, %v2034
        %v2109 = vsub.f32 %v1949, %v2034
        %v2110 = vsub.f32 %v1950, %v2037
        %v2111 = vsub.f32 %v1951, %v2037
        %v2112 = vsub.f32 %v1952, %v2040
        %v2113 = vsub.f32 %v1953, %v2040
        %v2114 = vsub.f32 %v1954, %v2043
        %v2115 = vsub.f32 %v1955, %v2043
        %v2116 = vsub.f32 %v1956, %v2046
        %v2117 = vsub.f32 %v1957, %v2046
        %v2118 = vsub.f32 %v1958, %v2049
        %v2119 = vsub.f32 %v1959, %v2049
        %v2120 = vsub.f32 %v1960, %v2052
        %v2121 = vsub.f32 %v1961, %v2052
        %v2122 = vsub.f32 %v1962, %v2055
        %v2123 = vsub.f32 %v1963, %v2055
        %v2124 = vsub.f32 %v1964, %v2058
        %v2125 = vsub.f32 %v1965, %v2058
        %v2126 = vsub.f32 %v1966, %v2061
        %v2127 = vsub.f32 %v1967, %v2061
        %v2128 = vsub.f32 %v1968, %v2064
        %v2129 = vsub.f32 %v1969, %v2064
        %v2130 = vsub.f32 %v1970, %v2067
        %v2131 = vsub.f32 %v1971, %v2067
        %v2132 = vmul.f32 %v2068, 1.442695
        %v2133 = vpow.pop %v2132
        %v2134 = vmul.f32 %v2069, 1.442695
        %v2135 = vpow.pop %v2134
        %v2136 = vmul.f32 %v2070, 1.442695
        %v2137 = vpow.pop %v2136
        %v2138 = vmul.f32 %v2071, 1.442695
        %v2139 = vpow.pop %v2138
        %v2140 = vmul.f32 %v2072, 1.442695
        %v2141 = vpow.pop %v2140
        %v2142 = vmul.f32 %v2073, 1.442695
        %v2143 = vpow.pop %v2142
        %v2144 = vmul.f32 %v2074, 1.442695
        %v2145 = vpow.pop %v2144
        %v2146 = vmul.f32 %v2075, 1.442695
        %v2147 = vpow.pop %v2146
        %v2148 = vmul.f32 %v2076, 1.442695
        %v2149 = vpow.pop %v2148
        %v2150 = vmul.f32 %v2077, 1.442695
        %v2151 = vpow.pop %v2150
        %v2152 = vmul.f32 %v2078, 1.442695
        %v2153 = vpow.pop %v2152
        %v2154 = vmul.f32 %v2079, 1.442695
        %v2155 = vpow.pop %v2154
        %v2156 = vmul.f32 %v2080, 1.442695
        %v2157 = vpow.pop %v2156
        %v2158 = vmul.f32 %v2081, 1.442695
        %v2159 = vpow.pop %v2158
        %v2160 = vmul.f32 %v2082, 1.442695
        %v2161 = vpow.pop %v2160
        %v2162 = vmul.f32 %v2083, 1.442695
        %v2163 = vpow.pop %v2162
        %v2164 = vmul.f32 %v2084, 1.442695
        %v2165 = vpow.pop %v2164
        %v2166 = vmul.f32 %v2085, 1.442695
        %v2167 = vpow.pop %v2166
        %v2168 = vmul.f32 %v2086, 1.442695
        %v2169 = vpow.pop %v2168
        %v2170 = vmul.f32 %v2087, 1.442695
        %v2171 = vpow.pop %v2170
        %v2172 = vmul.f32 %v2088, 1.442695
        %v2173 = vpow.pop %v2172
        %v2174 = vmul.f32 %v2089, 1.442695
        %v2175 = vpow.pop %v2174
        %v2176 = vmul.f32 %v2090, 1.442695
        %v2177 = vpow.pop %v2176
        %v2178 = vmul.f32 %v2091, 1.442695
        %v2179 = vpow.pop %v2178
        %v2180 = vmul.f32 %v2092, 1.442695
        %v2181 = vpow.pop %v2180
        %v2182 = vmul.f32 %v2093, 1.442695
        %v2183 = vpow.pop %v2182
        %v2184 = vmul.f32 %v2094, 1.442695
        %v2185 = vpow.pop %v2184
        %v2186 = vmul.f32 %v2095, 1.442695
        %v2187 = vpow.pop %v2186
        %v2188 = vmul.f32 %v2096, 1.442695
        %v2189 = vpow.pop %v2188
        %v2190 = vmul.f32 %v2097, 1.442695
        %v2191 = vpow.pop %v2190
        %v2192 = vmul.f32 %v2098, 1.442695
        %v2193 = vpow.pop %v2192
        %v2194 = vmul.f32 %v2099, 1.442695
        %v2195 = vpow.pop %v2194
        %v2196 = vmul.f32 %v2100, 1.442695
        %v2197 = vpow.pop %v2196
        %v2198 = vmul.f32 %v2101, 1.442695
        %v2199 = vpow.pop %v2198
        %v2200 = vmul.f32 %v2102, 1.442695
        %v2201 = vpow.pop %v2200
        %v2202 = vmul.f32 %v2103, 1.442695
        %v2203 = vpow.pop %v2202
        %v2204 = vmul.f32 %v2104, 1.442695
        %v2205 = vpow.pop %v2204
        %v2206 = vmul.f32 %v2105, 1.442695
        %v2207 = vpow.pop %v2206
        %v2208 = vmul.f32 %v2106, 1.442695
        %v2209 = vpow.pop %v2208
        %v2210 = vmul.f32 %v2107, 1.442695
        %v2211 = vpow.pop %v2210
        %v2212 = vmul.f32 %v2108, 1.442695
        %v2213 = vpow.pop %v2212
        %v2214 = vmul.f32 %v2109, 1.442695
        %v2215 = vpow.pop %v2214
        %v2216 = vmul.f32 %v2110, 1.442695
        %v2217 = vpow.pop %v2216
        %v2218 = vmul.f32 %v2111, 1.442695
        %v2219 = vpow.pop %v2218
        %v2220 = vmul.f32 %v2112, 1.442695
        %v2221 = vpow.pop %v2220
        %v2222 = vmul.f32 %v2113, 1.442695
        %v2223 = vpow.pop %v2222
        %v2224 = vmul.f32 %v2114, 1.442695
        %v2225 = vpow.pop %v2224
        %v2226 = vmul.f32 %v2115, 1.442695
        %v2227 = vpow.pop %v2226
        %v2228 = vmul.f32 %v2116, 1.442695
        %v2229 = vpow.pop %v2228
        %v2230 = vmul.f32 %v2117, 1.442695
        %v2231 = vpow.pop %v2230
        %v2232 = vmul.f32 %v2118, 1.442695
        %v2233 = vpow.pop %v2232
        %v2234 = vmul.f32 %v2119, 1.442695
        %v2235 = vpow.pop %v2234
        %v2236 = vmul.f32 %v2120, 1.442695
        %v2237 = vpow.pop %v2236
        %v2238 = vmul.f32 %v2121, 1.442695
        %v2239 = vpow.pop %v2238
        %v2240 = vmul.f32 %v2122, 1.442695
        %v2241 = vpow.pop %v2240
        %v2242 = vmul.f32 %v2123, 1.442695
        %v2243 = vpow.pop %v2242
        %v2244 = vmul.f32 %v2124, 1.442695
        %v2245 = vpow.pop %v2244
        %v2246 = vmul.f32 %v2125, 1.442695
        %v2247 = vpow.pop %v2246
        %v2248 = vmul.f32 %v2126, 1.442695
        %v2249 = vpow.pop %v2248
        %v2250 = vmul.f32 %v2127, 1.442695
        %v2251 = vpow.pop %v2250
        %v2252 = vmul.f32 %v2128, 1.442695
        %v2253 = vpow.pop %v2252
        %v2254 = vmul.f32 %v2129, 1.442695
        %v2255 = vpow.pop %v2254
        %v2256 = vmul.f32 %v2130, 1.442695
        %v2257 = vpow.pop %v2256
        %v2258 = vmul.f32 %v2131, 1.442695
        %v2259 = vpow.pop %v2258
        %v2260 = vpack.c.bf16 %v2137, %v2133
        %v2261 = vpack.c.bf16 %v2139, %v2135
        %v2262 = vpack.c.bf16 %v2145, %v2141
        %v2263 = vpack.c.bf16 %v2147, %v2143
        %v2264 = vpack.c.bf16 %v2153, %v2149
        %v2265 = vpack.c.bf16 %v2155, %v2151
        %v2266 = vpack.c.bf16 %v2161, %v2157
        %v2267 = vpack.c.bf16 %v2163, %v2159
        %v2268 = vpack.c.bf16 %v2169, %v2165
        %v2269 = vpack.c.bf16 %v2171, %v2167
        %v2270 = vpack.c.bf16 %v2177, %v2173
        %v2271 = vpack.c.bf16 %v2179, %v2175
        %v2272 = vpack.c.bf16 %v2185, %v2181
        %v2273 = vpack.c.bf16 %v2187, %v2183
        %v2274 = vpack.c.bf16 %v2193, %v2189
        %v2275 = vpack.c.bf16 %v2195, %v2191
        %v2276 = vpack.c.bf16 %v2201, %v2197
        %v2277 = vpack.c.bf16 %v2203, %v2199
        %v2278 = vpack.c.bf16 %v2209, %v2205
        %v2279 = vpack.c.bf16 %v2211, %v2207
        %v2280 = vpack.c.bf16 %v2217, %v2213
        %v2281 = vpack.c.bf16 %v2219, %v2215
        %v2282 = vpack.c.bf16 %v2225, %v2221
        %v2283 = vpack.c.bf16 %v2227, %v2223
        %v2284 = vpack.c.bf16 %v2233, %v2229
        %v2285 = vpack.c.bf16 %v2235, %v2231
        %v2286 = vpack.c.bf16 %v2241, %v2237
        %v2287 = vpack.c.bf16 %v2243, %v2239
        %v2288 = vpack.c.bf16 %v2249, %v2245
        %v2289 = vpack.c.bf16 %v2251, %v2247
        %v2290 = vpack.c.bf16 %v2257, %v2253
        %v2291 = vpack.c.bf16 %v2259, %v2255
        %v2292 = vld [vmem:[#allocation4] sm:$0xff]
        %v2293 = vld [vmem:[#allocation4 + $0x8] sm:$0xff]
        %v2294 = vld [vmem:[#allocation4 + $0x10] sm:$0xff]
        %v2295 = vld [vmem:[#allocation4 + $0x18] sm:$0xff]
        %v2296 = vld [vmem:[#allocation4 + $0x20] sm:$0xff]
        %v2297 = vld [vmem:[#allocation4 + $0x28] sm:$0xff]
        %v2298 = vld [vmem:[#allocation4 + $0x30] sm:$0xff]
        %v2299 = vld [vmem:[#allocation4 + $0x38] sm:$0xff]
        %v2300 = vld [vmem:[#allocation4 + $0x40] sm:$0xff]
        %v2301 = vld [vmem:[#allocation4 + $0x48] sm:$0xff]
        %v2302 = vld [vmem:[#allocation4 + $0x50] sm:$0xff]
        %v2303 = vld [vmem:[#allocation4 + $0x58] sm:$0xff]
        %v2304 = vld [vmem:[#allocation4 + $0x60] sm:$0xff]
        %v2305 = vld [vmem:[#allocation4 + $0x68] sm:$0xff]
        %v2306 = vld [vmem:[#allocation4 + $0x70] sm:$0xff]
        %v2307 = vld [vmem:[#allocation4 + $0x78] sm:$0xff]
        %2308 = vmatprep.subr.bf16.mxu0 0
        %2309 = vmatpush1.bf16.msra.mxu0 %v2292
        %2310 = vmatprep.subr.bf16.mxu0 0
        %2311 = vmatpush1.bf16.msra.mxu0 %v2293
        %2312 = vmatprep.subr.bf16.mxu0 0
        %2313 = vmatpush1.bf16.msra.mxu0 %v2294
        %2314 = vmatprep.subr.bf16.mxu0 0
        %2315 = vmatpush1.bf16.msra.mxu0 %v2295
        %2316 = vmatprep.subr.bf16.mxu0 0
        %2317 = vmatpush1.bf16.msra.mxu0 %v2296
        %2318 = vmatprep.subr.bf16.mxu0 0
        %2319 = vmatpush1.bf16.msra.mxu0 %v2297
        %2320 = vmatprep.subr.bf16.mxu0 0
        %2321 = vmatpush1.bf16.msra.mxu0 %v2298
        %2322 = vmatprep.subr.bf16.mxu0 0
        %2323 = vmatpush1.bf16.msra.mxu0 %v2299
        %2324 = vmatprep.subr.bf16.mxu0 0
        %2325 = vmatpush1.bf16.msra.mxu0 %v2300
        %2326 = vmatprep.subr.bf16.mxu0 0
        %2327 = vmatpush1.bf16.msra.mxu0 %v2301
        %2328 = vmatprep.subr.bf16.mxu0 0
        %2329 = vmatpush1.bf16.msra.mxu0 %v2302
        %2330 = vmatprep.subr.bf16.mxu0 0
        %2331 = vmatpush1.bf16.msra.mxu0 %v2303
        %2332 = vmatprep.subr.bf16.mxu0 0
        %2333 = vmatpush1.bf16.msra.mxu0 %v2304
        %2334 = vmatprep.subr.bf16.mxu0 0
        %2335 = vmatpush1.bf16.msra.mxu0 %v2305
        %2336 = vmatprep.subr.bf16.mxu0 0
        %2337 = vmatpush1.bf16.msra.mxu0 %v2306
        %2338 = vmatprep.subr.bf16.mxu0 0
        %2339 = vmatpush1.bf16.msra.mxu0 %v2307
        %2340 = vmatprep.mubr.bf16.mxu0 %v2261
        %2341 = vmatmul.mubr.bf16.gmra.mrb[0].mxu0 %v2260
        %v2342 = vpop.f32.mrb[0].mxu0
        %v2343 = vadd.f32 0.0, %v2342
        %v2344 = vpop.f32.mrb[0].mxu0
        %v2345 = vpop.f32.mrb[0].mxu0
        %v2346 = vadd.f32 0.0, %v2345
        %v2347 = vpop.f32.mrb[0].mxu0
        %2348 = vmatprep.mubr.bf16.mxu0 %v2263
        %2349 = vmatmul.mubr.bf16.gmra.mrb[0].mxu0 %v2262
        %v2350 = vpop.f32.mrb[0].mxu0
        %v2351 = vadd.f32 0.0, %v2350
        %v2352 = vpop.f32.mrb[0].mxu0
        %v2353 = vpop.f32.mrb[0].mxu0
        %v2354 = vadd.f32 0.0, %v2353
        %v2355 = vpop.f32.mrb[0].mxu0
        %2356 = vmatprep.mubr.bf16.mxu0 %v2265
        %2357 = vmatmul.mubr.bf16.gmra.mrb[0].mxu0 %v2264
        %v2358 = vpop.f32.mrb[0].mxu0
        %v2359 = vadd.f32 0.0, %v2358
        %v2360 = vpop.f32.mrb[0].mxu0
        %v2361 = vpop.f32.mrb[0].mxu0
        %v2362 = vadd.f32 0.0, %v2361
        %v2363 = vpop.f32.mrb[0].mxu0
        %2364 = vmatprep.mubr.bf16.mxu0 %v2267
        %2365 = vmatmul.mubr.bf16.gmra.mrb[0].mxu0 %v2266
        %v2366 = vpop.f32.mrb[0].mxu0
        %v2367 = vadd.f32 0.0, %v2366
        %v2368 = vpop.f32.mrb[0].mxu0
        %v2369 = vpop.f32.mrb[0].mxu0
        %v2370 = vadd.f32 0.0, %v2369
        %v2371 = vpop.f32.mrb[0].mxu0
        %2372 = vmatprep.mubr.bf16.mxu0 %v2269
        %2373 = vmatmul.mubr.bf16.gmra.mrb[0].mxu0 %v2268
        %v2374 = vpop.f32.mrb[0].mxu0
        %v2375 = vadd.f32 0.0, %v2374
        %v2376 = vpop.f32.mrb[0].mxu0
        %v2377 = vpop.f32.mrb[0].mxu0
        %v2378 = vadd.f32 0.0, %v2377
        %v2379 = vpop.f32.mrb[0].mxu0
        %2380 = vmatprep.mubr.bf16.mxu0 %v2271
        %2381 = vmatmul.mubr.bf16.gmra.mrb[0].mxu0 %v2270
        %v2382 = vpop.f32.mrb[0].mxu0
        %v2383 = vadd.f32 0.0, %v2382
        %v2384 = vpop.f32.mrb[0].mxu0
        %v2385 = vpop.f32.mrb[0].mxu0
        %v2386 = vadd.f32 0.0, %v2385
        %v2387 = vpop.f32.mrb[0].mxu0
        %2388 = vmatprep.mubr.bf16.mxu0 %v2273
        %2389 = vmatmul.mubr.bf16.gmra.mrb[0].mxu0 %v2272
        %v2390 = vpop.f32.mrb[0].mxu0
        %v2391 = vadd.f32 0.0, %v2390
        %v2392 = vpop.f32.mrb[0].mxu0
        %v2393 = vpop.f32.mrb[0].mxu0
        %v2394 = vadd.f32 0.0, %v2393
        %v2395 = vpop.f32.mrb[0].mxu0
        %2396 = vmatprep.mubr.bf16.mxu0 %v2275
        %2397 = vmatmul.mubr.bf16.gmra.mrb[0].mxu0 %v2274
        %v2398 = vpop.f32.mrb[0].mxu0
        %v2399 = vadd.f32 0.0, %v2398
        %v2400 = vpop.f32.mrb[0].mxu0
        %v2401 = vpop.f32.mrb[0].mxu0
        %v2402 = vadd.f32 0.0, %v2401
        %v2403 = vpop.f32.mrb[0].mxu0
        %2404 = vmatprep.mubr.bf16.mxu0 %v2277
        %2405 = vmatmul.mubr.bf16.gmra.mrb[0].mxu0 %v2276
        %v2406 = vpop.f32.mrb[0].mxu0
        %v2407 = vadd.f32 0.0, %v2406
        %v2408 = vpop.f32.mrb[0].mxu0
        %v2409 = vpop.f32.mrb[0].mxu0
        %v2410 = vadd.f32 0.0, %v2409
        %v2411 = vpop.f32.mrb[0].mxu0
        %2412 = vmatprep.mubr.bf16.mxu0 %v2279
        %2413 = vmatmul.mubr.bf16.gmra.mrb[0].mxu0 %v2278
        %v2414 = vpop.f32.mrb[0].mxu0
        %v2415 = vadd.f32 0.0, %v2414
        %v2416 = vpop.f32.mrb[0].mxu0
        %v2417 = vpop.f32.mrb[0].mxu0
        %v2418 = vadd.f32 0.0, %v2417
        %v2419 = vpop.f32.mrb[0].mxu0
        %2420 = vmatprep.mubr.bf16.mxu0 %v2281
        %2421 = vmatmul.mubr.bf16.gmra.mrb[0].mxu0 %v2280
        %v2422 = vpop.f32.mrb[0].mxu0
        %v2423 = vadd.f32 0.0, %v2422
        %v2424 = vpop.f32.mrb[0].mxu0
        %v2425 = vpop.f32.mrb[0].mxu0
        %v2426 = vadd.f32 0.0, %v2425
        %v2427 = vpop.f32.mrb[0].mxu0
        %2428 = vmatprep.mubr.bf16.mxu0 %v2283
        %2429 = vmatmul.mubr.bf16.gmra.mrb[0].mxu0 %v2282
        %v2430 = vpop.f32.mrb[0].mxu0
        %v2431 = vadd.f32 0.0, %v2430
        %v2432 = vpop.f32.mrb[0].mxu0
        %v2433 = vpop.f32.mrb[0].mxu0
        %v2434 = vadd.f32 0.0, %v2433
        %v2435 = vpop.f32.mrb[0].mxu0
        %2436 = vmatprep.mubr.bf16.mxu0 %v2285
        %2437 = vmatmul.mubr.bf16.gmra.mrb[0].mxu0 %v2284
        %v2438 = vpop.f32.mrb[0].mxu0
        %v2439 = vadd.f32 0.0, %v2438
        %v2440 = vpop.f32.mrb[0].mxu0
        %v2441 = vpop.f32.mrb[0].mxu0
        %v2442 = vadd.f32 0.0, %v2441
        %v2443 = vpop.f32.mrb[0].mxu0
        %2444 = vmatprep.mubr.bf16.mxu0 %v2287
        %2445 = vmatmul.mubr.bf16.gmra.mrb[0].mxu0 %v2286
        %v2446 = vpop.f32.mrb[0].mxu0
        %v2447 = vadd.f32 0.0, %v2446
        %v2448 = vpop.f32.mrb[0].mxu0
        %v2449 = vpop.f32.mrb[0].mxu0
        %v2450 = vadd.f32 0.0, %v2449
        %v2451 = vpop.f32.mrb[0].mxu0
        %2452 = vmatprep.mubr.bf16.mxu0 %v2289
        %2453 = vmatmul.mubr.bf16.gmra.mrb[0].mxu0 %v2288
        %v2454 = vpop.f32.mrb[0].mxu0
        %v2455 = vadd.f32 0.0, %v2454
        %v2456 = vpop.f32.mrb[0].mxu0
        %v2457 = vpop.f32.mrb[0].mxu0
        %v2458 = vadd.f32 0.0, %v2457
        %v2459 = vpop.f32.mrb[0].mxu0
        %2460 = vmatprep.mubr.bf16.mxu0 %v2291
        %2461 = vmatmul.mubr.bf16.gmra.mrb[0].mxu0 %v2290
        %v2462 = vpop.f32.mrb[0].mxu0
        %v2463 = vadd.f32 0.0, %v2462
        %v2464 = vpop.f32.mrb[0].mxu0
        %v2465 = vpop.f32.mrb[0].mxu0
        %v2466 = vadd.f32 0.0, %v2465
        %v2467 = vpop.f32.mrb[0].mxu0
        %2468 = vdwg.mxu0
        %v2469 = vadd.f32 %v2133, %v2135
        %2470 = vadd.xlane.f32.xlu0 %v2469
        %v2471 = vpop.xlane.xlu0 %2470
        %v2472 = vadd.f32 %v2137, %v2139
        %2473 = vadd.xlane.f32.xlu0 %v2472
        %v2474 = vpop.xlane.xlu0 %2473
        %v2475 = vadd.f32 %v2141, %v2143
        %2476 = vadd.xlane.f32.xlu0 %v2475
        %v2477 = vpop.xlane.xlu0 %2476
        %v2478 = vadd.f32 %v2145, %v2147
        %2479 = vadd.xlane.f32.xlu0 %v2478
        %v2480 = vpop.xlane.xlu0 %2479
        %v2481 = vadd.f32 %v2149, %v2151
        %2482 = vadd.xlane.f32.xlu0 %v2481
        %v2483 = vpop.xlane.xlu0 %2482
        %v2484 = vadd.f32 %v2153, %v2155
        %2485 = vadd.xlane.f32.xlu0 %v2484
        %v2486 = vpop.xlane.xlu0 %2485
        %v2487 = vadd.f32 %v2157, %v2159
        %2488 = vadd.xlane.f32.xlu0 %v2487
        %v2489 = vpop.xlane.xlu0 %2488
        %v2490 = vadd.f32 %v2161, %v2163
        %2491 = vadd.xlane.f32.xlu0 %v2490
        %v2492 = vpop.xlane.xlu0 %2491
        %v2493 = vadd.f32 %v2165, %v2167
        %2494 = vadd.xlane.f32.xlu0 %v2493
        %v2495 = vpop.xlane.xlu0 %2494
        %v2496 = vadd.f32 %v2169, %v2171
        %2497 = vadd.xlane.f32.xlu0 %v2496
        %v2498 = vpop.xlane.xlu0 %2497
        %v2499 = vadd.f32 %v2173, %v2175
        %2500 = vadd.xlane.f32.xlu0 %v2499
        %v2501 = vpop.xlane.xlu0 %2500
        %v2502 = vadd.f32 %v2177, %v2179
        %2503 = vadd.xlane.f32.xlu0 %v2502
        %v2504 = vpop.xlane.xlu0 %2503
        %v2505 = vadd.f32 %v2181, %v2183
        %2506 = vadd.xlane.f32.xlu0 %v2505
        %v2507 = vpop.xlane.xlu0 %2506
        %v2508 = vadd.f32 %v2185, %v2187
        %2509 = vadd.xlane.f32.xlu0 %v2508
        %v2510 = vpop.xlane.xlu0 %2509
        %v2511 = vadd.f32 %v2189, %v2191
        %2512 = vadd.xlane.f32.xlu0 %v2511
        %v2513 = vpop.xlane.xlu0 %2512
        %v2514 = vadd.f32 %v2193, %v2195
        %2515 = vadd.xlane.f32.xlu0 %v2514
        %v2516 = vpop.xlane.xlu0 %2515
        %v2517 = vadd.f32 %v2197, %v2199
        %2518 = vadd.xlane.f32.xlu0 %v2517
        %v2519 = vpop.xlane.xlu0 %2518
        %v2520 = vadd.f32 %v2201, %v2203
        %2521 = vadd.xlane.f32.xlu0 %v2520
        %v2522 = vpop.xlane.xlu0 %2521
        %v2523 = vadd.f32 %v2205, %v2207
        %2524 = vadd.xlane.f32.xlu0 %v2523
        %v2525 = vpop.xlane.xlu0 %2524
        %v2526 = vadd.f32 %v2209, %v2211
        %2527 = vadd.xlane.f32.xlu0 %v2526
        %v2528 = vpop.xlane.xlu0 %2527
        %v2529 = vadd.f32 %v2213, %v2215
        %2530 = vadd.xlane.f32.xlu0 %v2529
        %v2531 = vpop.xlane.xlu0 %2530
        %v2532 = vadd.f32 %v2217, %v2219
        %2533 = vadd.xlane.f32.xlu0 %v2532
        %v2534 = vpop.xlane.xlu0 %2533
        %v2535 = vadd.f32 %v2221, %v2223
        %2536 = vadd.xlane.f32.xlu0 %v2535
        %v2537 = vpop.xlane.xlu0 %2536
        %v2538 = vadd.f32 %v2225, %v2227
        %2539 = vadd.xlane.f32.xlu0 %v2538
        %v2540 = vpop.xlane.xlu0 %2539
        %v2541 = vadd.f32 %v2229, %v2231
        %2542 = vadd.xlane.f32.xlu0 %v2541
        %v2543 = vpop.xlane.xlu0 %2542
        %v2544 = vadd.f32 %v2233, %v2235
        %2545 = vadd.xlane.f32.xlu0 %v2544
        %v2546 = vpop.xlane.xlu0 %2545
        %v2547 = vadd.f32 %v2237, %v2239
        %2548 = vadd.xlane.f32.xlu0 %v2547
        %v2549 = vpop.xlane.xlu0 %2548
        %v2550 = vadd.f32 %v2241, %v2243
        %2551 = vadd.xlane.f32.xlu0 %v2550
        %v2552 = vpop.xlane.xlu0 %2551
        %v2553 = vadd.f32 %v2245, %v2247
        %2554 = vadd.xlane.f32.xlu0 %v2553
        %v2555 = vpop.xlane.xlu0 %2554
        %v2556 = vadd.f32 %v2249, %v2251
        %2557 = vadd.xlane.f32.xlu0 %v2556
        %v2558 = vpop.xlane.xlu0 %2557
        %v2559 = vadd.f32 %v2253, %v2255
        %2560 = vadd.xlane.f32.xlu0 %v2559
        %v2561 = vpop.xlane.xlu0 %2560
        %v2562 = vadd.f32 %v2257, %v2259
        %2563 = vadd.xlane.f32.xlu0 %v2562
        %v2564 = vpop.xlane.xlu0 %2563
        %v2565 = vrcp.pop %v2471
        %v2566 = vmul.f32 %v2343, %v2565
        %v2567 = vrcp.pop %v2474
        %v2568 = vmul.f32 %v2346, %v2567
        %v2569 = vrcp.pop %v2477
        %v2570 = vmul.f32 %v2351, %v2569
        %v2571 = vrcp.pop %v2480
        %v2572 = vmul.f32 %v2354, %v2571
        %v2573 = vrcp.pop %v2483
        %v2574 = vmul.f32 %v2359, %v2573
        %v2575 = vrcp.pop %v2486
        %v2576 = vmul.f32 %v2362, %v2575
        %v2577 = vrcp.pop %v2489
        %v2578 = vmul.f32 %v2367, %v2577
        %v2579 = vrcp.pop %v2492
        %v2580 = vmul.f32 %v2370, %v2579
        %v2581 = vrcp.pop %v2495
        %v2582 = vmul.f32 %v2375, %v2581
        %v2583 = vrcp.pop %v2498
        %v2584 = vmul.f32 %v2378, %v2583
        %v2585 = vrcp.pop %v2501
        %v2586 = vmul.f32 %v2383, %v2585
        %v2587 = vrcp.pop %v2504
        %v2588 = vmul.f32 %v2386, %v2587
        %v2589 = vrcp.pop %v2507
        %v2590 = vmul.f32 %v2391, %v2589
        %v2591 = vrcp.pop %v2510
        %v2592 = vmul.f32 %v2394, %v2591
        %v2593 = vrcp.pop %v2513
        %v2594 = vmul.f32 %v2399, %v2593
        %v2595 = vrcp.pop %v2516
        %v2596 = vmul.f32 %v2402, %v2595
        %v2597 = vrcp.pop %v2519
        %v2598 = vmul.f32 %v2407, %v2597
        %v2599 = vrcp.pop %v2522
        %v2600 = vmul.f32 %v2410, %v2599
        %v2601 = vrcp.pop %v2525
        %v2602 = vmul.f32 %v2415, %v2601
        %v2603 = vrcp.pop %v2528
        %v2604 = vmul.f32 %v2418, %v2603
        %v2605 = vrcp.pop %v2531
        %v2606 = vmul.f32 %v2423, %v2605
        %v2607 = vrcp.pop %v2534
        %v2608 = vmul.f32 %v2426, %v2607
        %v2609 = vrcp.pop %v2537
        %v2610 = vmul.f32 %v2431, %v2609
        %v2611 = vrcp.pop %v2540
        %v2612 = vmul.f32 %v2434, %v2611
        %v2613 = vrcp.pop %v2543
        %v2614 = vmul.f32 %v2439, %v2613
        %v2615 = vrcp.pop %v2546
        %v2616 = vmul.f32 %v2442, %v2615
        %v2617 = vrcp.pop %v2549
        %v2618 = vmul.f32 %v2447, %v2617
        %v2619 = vrcp.pop %v2552
        %v2620 = vmul.f32 %v2450, %v2619
        %v2621 = vrcp.pop %v2555
        %v2622 = vmul.f32 %v2455, %v2621
        %v2623 = vrcp.pop %v2558
        %v2624 = vmul.f32 %v2458, %v2623
        %v2625 = vrcp.pop %v2561
        %v2626 = vmul.f32 %v2463, %v2625
        %v2627 = vrcp.pop %v2564
        %v2628 = vmul.f32 %v2466, %v2627
        %v2629 = vpack.c.bf16 %v2568, %v2566
        %v2630 = vpack.c.bf16 %v2572, %v2570
        %v2631 = vpack.c.bf16 %v2576, %v2574
        %v2632 = vpack.c.bf16 %v2580, %v2578
        %v2633 = vpack.c.bf16 %v2584, %v2582
        %v2634 = vpack.c.bf16 %v2588, %v2586
        %v2635 = vpack.c.bf16 %v2592, %v2590
        %v2636 = vpack.c.bf16 %v2596, %v2594
        %v2637 = vpack.c.bf16 %v2600, %v2598
        %v2638 = vpack.c.bf16 %v2604, %v2602
        %v2639 = vpack.c.bf16 %v2608, %v2606
        %v2640 = vpack.c.bf16 %v2612, %v2610
        %v2641 = vpack.c.bf16 %v2616, %v2614
        %v2642 = vpack.c.bf16 %v2620, %v2618
        %v2643 = vpack.c.bf16 %v2624, %v2622
        %v2644 = vpack.c.bf16 %v2628, %v2626
        %v2645 = vld [vmem:[#allocation13] sm:$0xf]
        %v2646 = vld [vmem:[#allocation13 + $0x4] sm:$0xf]
        %v2647 = vld [vmem:[#allocation13 + $0x8] sm:$0xf]
        %v2648 = vld [vmem:[#allocation13 + $0xc] sm:$0xf]
        %v2649 = vld [vmem:[#allocation13 + $0x10] sm:$0xf]
        %v2650 = vld [vmem:[#allocation13 + $0x14] sm:$0xf]
        %v2651 = vld [vmem:[#allocation13 + $0x18] sm:$0xf]
        %v2652 = vld [vmem:[#allocation13 + $0x1c] sm:$0xf]
        %v2653 = vld [vmem:[#allocation13 + $0x20] sm:$0xf]
        %v2654 = vld [vmem:[#allocation13 + $0x24] sm:$0xf]
        %v2655 = vld [vmem:[#allocation13 + $0x28] sm:$0xf]
        %v2656 = vld [vmem:[#allocation13 + $0x2c] sm:$0xf]
        %v2657 = vld [vmem:[#allocation13 + $0x30] sm:$0xf]
        %v2658 = vld [vmem:[#allocation13 + $0x34] sm:$0xf]
        %v2659 = vld [vmem:[#allocation13 + $0x38] sm:$0xf]
        %v2660 = vld [vmem:[#allocation13 + $0x3c] sm:$0xf]
        %v2661 = vld [vmem:[#allocation14] sm:$0x1]
        %v2663 = vlaneseq
        %v2664 = vshrl.u32 %v2663, 7
        %v2665 = vsub.s32 0, %v2664
        %v2666 = vrot.slane %v2661, %v2665
        %v2684 = vunpack.c.l.b16 %v2645
        %v2685 = vunpack.c.l.b16 %v2646
        %v2686 = vunpack.c.l.b16 %v2647
        %v2687 = vunpack.c.l.b16 %v2648
        %v2688 = vunpack.c.l.b16 %v2649
        %v2689 = vunpack.c.l.b16 %v2650
        %v2690 = vunpack.c.l.b16 %v2651
        %v2691 = vunpack.c.l.b16 %v2652
        %v2692 = vunpack.c.l.b16 %v2653
        %v2693 = vunpack.c.l.b16 %v2654
        %v2694 = vunpack.c.l.b16 %v2655
        %v2695 = vunpack.c.l.b16 %v2656
        %v2696 = vunpack.c.l.b16 %v2657
        %v2697 = vunpack.c.l.b16 %v2658
        %v2698 = vunpack.c.l.b16 %v2659
        %v2699 = vunpack.c.l.b16 %v2660
        %v2700 = vpack.c.b16 %v2685, %v2684
        %v2701 = vpack.c.b16 %v2687, %v2686
        %v2702 = vpack.c.b16 %v2689, %v2688
        %v2703 = vpack.c.b16 %v2691, %v2690
        %v2704 = vpack.c.b16 %v2693, %v2692
        %v2705 = vpack.c.b16 %v2695, %v2694
        %v2706 = vpack.c.b16 %v2697, %v2696
        %v2707 = vpack.c.b16 %v2699, %v2698
        %2716 = vmatprep.subr.bf16.mxu0 0
        %2717 = vmatpush1.bf16.msra.mxu0 %v2700
        %2718 = vmatprep.subr.bf16.mxu0 0
        %2719 = vmatpush1.bf16.msra.mxu0 %v2701
        %2720 = vmatprep.subr.bf16.mxu0 0
        %2721 = vmatpush1.bf16.msra.mxu0 %v2702
        %2722 = vmatprep.subr.bf16.mxu0 0
        %2723 = vmatpush1.bf16.msra.mxu0 %v2703
        %2724 = vmatprep.subr.bf16.mxu0 0
        %2725 = vmatpush1.bf16.msra.mxu0 %v2704
        %2726 = vmatprep.subr.bf16.mxu0 0
        %2727 = vmatpush1.bf16.msra.mxu0 %v2705
        %2728 = vmatprep.subr.bf16.mxu0 0
        %2729 = vmatpush1.bf16.msra.mxu0 %v2706
        %2730 = vmatprep.subr.bf16.mxu0 0
        %2731 = vmatpush1.bf16.msra.mxu0 %v2707
        %2732 = vmatprep.subr.bf16.mxu0 0
        %2733 = vmatpush1.bf16.msra.mxu0 0
        %2734 = vmatprep.subr.bf16.mxu0 0
        %2735 = vmatpush1.bf16.msra.mxu0 0
        %2736 = vmatprep.subr.bf16.mxu0 0
        %2737 = vmatpush1.bf16.msra.mxu0 0
        %2738 = vmatprep.subr.bf16.mxu0 0
        %2739 = vmatpush1.bf16.msra.mxu0 0
        %2740 = vmatprep.subr.bf16.mxu0 0
        %2741 = vmatpush1.bf16.msra.mxu0 0
        %2742 = vmatprep.subr.bf16.mxu0 0
        %2743 = vmatpush1.bf16.msra.mxu0 0
        %2744 = vmatprep.subr.bf16.mxu0 0
        %2745 = vmatpush1.bf16.msra.mxu0 0
        %2746 = vmatprep.subr.bf16.mxu0 0
        %2747 = vmatpush1.bf16.msra.mxu0 0
        %2748 = vmatprep.mubr.bf16.mxu0 0
        %2749 = vmatmul.mubr.bf16.gmra.mrb[0].mxu0 %v2629
        %v2750 = vpop.f32.mrb[0].mxu0
        %v2751 = vadd.f32 %v2666, %v2750
        %v2752 = vpop.f32.mrb[0].mxu0
        %v2753 = vpop.f32.mrb[0].mxu0
        %v2754 = vadd.f32 %v2666, %v2753
        %v2755 = vpop.f32.mrb[0].mxu0
        %2756 = vmatprep.mubr.bf16.mxu0 0
        %2757 = vmatmul.mubr.bf16.gmra.mrb[0].mxu0 %v2630
        %v2758 = vpop.f32.mrb[0].mxu0
        %v2759 = vadd.f32 %v2666, %v2758
        %v2760 = vpop.f32.mrb[0].mxu0
        %v2761 = vpop.f32.mrb[0].mxu0
        %v2762 = vadd.f32 %v2666, %v2761
        %v2763 = vpop.f32.mrb[0].mxu0
        %2764 = vmatprep.mubr.bf16.mxu0 0
        %2765 = vmatmul.mubr.bf16.gmra.mrb[0].mxu0 %v2631
        %v2766 = vpop.f32.mrb[0].mxu0
        %v2767 = vadd.f32 %v2666, %v2766
        %v2768 = vpop.f32.mrb[0].mxu0
        %v2769 = vpop.f32.mrb[0].mxu0
        %v2770 = vadd.f32 %v2666, %v2769
        %v2771 = vpop.f32.mrb[0].mxu0
        %2772 = vmatprep.mubr.bf16.mxu0 0
        %2773 = vmatmul.mubr.bf16.gmra.mrb[0].mxu0 %v2632
        %v2774 = vpop.f32.mrb[0].mxu0
        %v2775 = vadd.f32 %v2666, %v2774
        %v2776 = vpop.f32.mrb[0].mxu0
        %v2777 = vpop.f32.mrb[0].mxu0
        %v2778 = vadd.f32 %v2666, %v2777
        %v2779 = vpop.f32.mrb[0].mxu0
        %2780 = vmatprep.mubr.bf16.mxu0 0
        %2781 = vmatmul.mubr.bf16.gmra.mrb[0].mxu0 %v2633
        %v2782 = vpop.f32.mrb[0].mxu0
        %v2783 = vadd.f32 %v2666, %v2782
        %v2784 = vpop.f32.mrb[0].mxu0
        %v2785 = vpop.f32.mrb[0].mxu0
        %v2786 = vadd.f32 %v2666, %v2785
        %v2787 = vpop.f32.mrb[0].mxu0
        %2788 = vmatprep.mubr.bf16.mxu0 0
        %2789 = vmatmul.mubr.bf16.gmra.mrb[0].mxu0 %v2634
        %v2790 = vpop.f32.mrb[0].mxu0
        %v2791 = vadd.f32 %v2666, %v2790
        %v2792 = vpop.f32.mrb[0].mxu0
        %v2793 = vpop.f32.mrb[0].mxu0
        %v2794 = vadd.f32 %v2666, %v2793
        %v2795 = vpop.f32.mrb[0].mxu0
        %2796 = vmatprep.mubr.bf16.mxu0 0
        %2797 = vmatmul.mubr.bf16.gmra.mrb[0].mxu0 %v2635
        %v2798 = vpop.f32.mrb[0].mxu0
        %v2799 = vadd.f32 %v2666, %v2798
        %v2800 = vpop.f32.mrb[0].mxu0
        %v2801 = vpop.f32.mrb[0].mxu0
        %v2802 = vadd.f32 %v2666, %v2801
        %v2803 = vpop.f32.mrb[0].mxu0
        %2804 = vmatprep.mubr.bf16.mxu0 0
        %2805 = vmatmul.mubr.bf16.gmra.mrb[0].mxu0 %v2636
        %v2806 = vpop.f32.mrb[0].mxu0
        %v2807 = vadd.f32 %v2666, %v2806
        %v2808 = vpop.f32.mrb[0].mxu0
        %v2809 = vpop.f32.mrb[0].mxu0
        %v2810 = vadd.f32 %v2666, %v2809
        %v2811 = vpop.f32.mrb[0].mxu0
        %2812 = vmatprep.mubr.bf16.mxu0 0
        %2813 = vmatmul.mubr.bf16.gmra.mrb[0].mxu0 %v2637
        %v2814 = vpop.f32.mrb[0].mxu0
        %v2815 = vadd.f32 %v2666, %v2814
        %v2816 = vpop.f32.mrb[0].mxu0
        %v2817 = vpop.f32.mrb[0].mxu0
        %v2818 = vadd.f32 %v2666, %v2817
        %v2819 = vpop.f32.mrb[0].mxu0
        %2820 = vmatprep.mubr.bf16.mxu0 0
        %2821 = vmatmul.mubr.bf16.gmra.mrb[0].mxu0 %v2638
        %v2822 = vpop.f32.mrb[0].mxu0
        %v2823 = vadd.f32 %v2666, %v2822
        %v2824 = vpop.f32.mrb[0].mxu0
        %v2825 = vpop.f32.mrb[0].mxu0
        %v2826 = vadd.f32 %v2666, %v2825
        %v2827 = vpop.f32.mrb[0].mxu0
        %2828 = vmatprep.mubr.bf16.mxu0 0
        %2829 = vmatmul.mubr.bf16.gmra.mrb[0].mxu0 %v2639
        %v2830 = vpop.f32.mrb[0].mxu0
        %v2831 = vadd.f32 %v2666, %v2830
        %v2832 = vpop.f32.mrb[0].mxu0
        %v2833 = vpop.f32.mrb[0].mxu0
        %v2834 = vadd.f32 %v2666, %v2833
        %v2835 = vpop.f32.mrb[0].mxu0
        %2836 = vmatprep.mubr.bf16.mxu0 0
        %2837 = vmatmul.mubr.bf16.gmra.mrb[0].mxu0 %v2640
        %v2838 = vpop.f32.mrb[0].mxu0
        %v2839 = vadd.f32 %v2666, %v2838
        %v2840 = vpop.f32.mrb[0].mxu0
        %v2841 = vpop.f32.mrb[0].mxu0
        %v2842 = vadd.f32 %v2666, %v2841
        %v2843 = vpop.f32.mrb[0].mxu0
        %2844 = vmatprep.mubr.bf16.mxu0 0
        %2845 = vmatmul.mubr.bf16.gmra.mrb[0].mxu0 %v2641
        %v2846 = vpop.f32.mrb[0].mxu0
        %v2847 = vadd.f32 %v2666, %v2846
        %v2848 = vpop.f32.mrb[0].mxu0
        %v2849 = vpop.f32.mrb[0].mxu0
        %v2850 = vadd.f32 %v2666, %v2849
        %v2851 = vpop.f32.mrb[0].mxu0
        %2852 = vmatprep.mubr.bf16.mxu0 0
        %2853 = vmatmul.mubr.bf16.gmra.mrb[0].mxu0 %v2642
        %v2854 = vpop.f32.mrb[0].mxu0
        %v2855 = vadd.f32 %v2666, %v2854
        %v2856 = vpop.f32.mrb[0].mxu0
        %v2857 = vpop.f32.mrb[0].mxu0
        %v2858 = vadd.f32 %v2666, %v2857
        %v2859 = vpop.f32.mrb[0].mxu0
        %2860 = vmatprep.mubr.bf16.mxu0 0
        %2861 = vmatmul.mubr.bf16.gmra.mrb[0].mxu0 %v2643
        %v2862 = vpop.f32.mrb[0].mxu0
        %v2863 = vadd.f32 %v2666, %v2862
        %v2864 = vpop.f32.mrb[0].mxu0
        %v2865 = vpop.f32.mrb[0].mxu0
        %v2866 = vadd.f32 %v2666, %v2865
        %v2867 = vpop.f32.mrb[0].mxu0
        %2868 = vmatprep.mubr.bf16.mxu0 0
        %2869 = vmatmul.mubr.bf16.gmra.mrb[0].mxu0 %v2644
        %v2870 = vpop.f32.mrb[0].mxu0
        %v2871 = vadd.f32 %v2666, %v2870
        %v2872 = vpop.f32.mrb[0].mxu0
        %v2873 = vpop.f32.mrb[0].mxu0
        %v2874 = vadd.f32 %v2666, %v2873
        %v2875 = vpop.f32.mrb[0].mxu0
        %2876 = vdwg.mxu0
        %s2877 = scalar_lea.vmem %s375, %s1678 [#allocation5]
        %v2878 = vld [vmem:[%s2877] sm:$0xff]
        %v2879 = vld [vmem:[%s2877 + $0x8] sm:$0xff]
        %v2880 = vld [vmem:[%s2877 + $0x10] sm:$0xff]
        %v2881 = vld [vmem:[%s2877 + $0x18] sm:$0xff]
        %v2882 = vld [vmem:[%s2877 + $0x20] sm:$0xff]
        %v2883 = vld [vmem:[%s2877 + $0x28] sm:$0xff]
        %v2884 = vld [vmem:[%s2877 + $0x30] sm:$0xff]
        %v2885 = vld [vmem:[%s2877 + $0x38] sm:$0xff]
        %v2886 = vld [vmem:[%s2877 + $0x40] sm:$0xff]
        %v2887 = vld [vmem:[%s2877 + $0x48] sm:$0xff]
        %v2888 = vld [vmem:[%s2877 + $0x50] sm:$0xff]
        %v2889 = vld [vmem:[%s2877 + $0x58] sm:$0xff]
        %v2890 = vld [vmem:[%s2877 + $0x60] sm:$0xff]
        %v2891 = vld [vmem:[%s2877 + $0x68] sm:$0xff]
        %v2892 = vld [vmem:[%s2877 + $0x70] sm:$0xff]
        %v2893 = vld [vmem:[%s2877 + $0x78] sm:$0xff]
        %v2894 = vld [vmem:[%s2877 + $0x80] sm:$0xff]
        %v2895 = vld [vmem:[%s2877 + $0x88] sm:$0xff]
        %v2896 = vld [vmem:[%s2877 + $0x90] sm:$0xff]
        %v2897 = vld [vmem:[%s2877 + $0x98] sm:$0xff]
        %v2898 = vld [vmem:[%s2877 + $0xa0] sm:$0xff]
        %v2899 = vld [vmem:[%s2877 + $0xa8] sm:$0xff]
        %v2900 = vld [vmem:[%s2877 + $0xb0] sm:$0xff]
        %v2901 = vld [vmem:[%s2877 + $0xb8] sm:$0xff]
        %v2902 = vld [vmem:[%s2877 + $0xc0] sm:$0xff]
        %v2903 = vld [vmem:[%s2877 + $0xc8] sm:$0xff]
        %v2904 = vld [vmem:[%s2877 + $0xd0] sm:$0xff]
        %v2905 = vld [vmem:[%s2877 + $0xd8] sm:$0xff]
        %v2906 = vld [vmem:[%s2877 + $0xe0] sm:$0xff]
        %v2907 = vld [vmem:[%s2877 + $0xe8] sm:$0xff]
        %v2908 = vld [vmem:[%s2877 + $0xf0] sm:$0xff]
        %v2909 = vld [vmem:[%s2877 + $0xf8] sm:$0xff]
        %v2910 = vadd.f32 %v2878, %v2751
        %v2911 = vadd.f32 %v2879, %v2754
        %v2912 = vadd.f32 %v2880, %v2759
        %v2913 = vadd.f32 %v2881, %v2762
        %v2914 = vadd.f32 %v2882, %v2767
        %v2915 = vadd.f32 %v2883, %v2770
        %v2916 = vadd.f32 %v2884, %v2775
        %v2917 = vadd.f32 %v2885, %v2778
        %v2918 = vadd.f32 %v2886, %v2783
        %v2919 = vadd.f32 %v2887, %v2786
        %v2920 = vadd.f32 %v2888, %v2791
        %v2921 = vadd.f32 %v2889, %v2794
        %v2922 = vadd.f32 %v2890, %v2799
        %v2923 = vadd.f32 %v2891, %v2802
        %v2924 = vadd.f32 %v2892, %v2807
        %v2925 = vadd.f32 %v2893, %v2810
        %v2926 = vadd.f32 %v2894, %v2815
        %v2927 = vadd.f32 %v2895, %v2818
        %v2928 = vadd.f32 %v2896, %v2823
        %v2929 = vadd.f32 %v2897, %v2826
        %v2930 = vadd.f32 %v2898, %v2831
        %v2931 = vadd.f32 %v2899, %v2834
        %v2932 = vadd.f32 %v2900, %v2839
        %v2933 = vadd.f32 %v2901, %v2842
        %v2934 = vadd.f32 %v2902, %v2847
        %v2935 = vadd.f32 %v2903, %v2850
        %v2936 = vadd.f32 %v2904, %v2855
        %v2937 = vadd.f32 %v2905, %v2858
        %v2938 = vadd.f32 %v2906, %v2863
        %v2939 = vadd.f32 %v2907, %v2866
        %v2940 = vadd.f32 %v2908, %v2871
        %v2941 = vadd.f32 %v2909, %v2874
        %2942 = vst [vmem:[%s429] sm:$0xff] %v2910
        %2943 = vst [vmem:[%s429 + $0x8] sm:$0xff] %v2911
        %2944 = vst [vmem:[%s429 + $0x10] sm:$0xff] %v2912
        %2945 = vst [vmem:[%s429 + $0x18] sm:$0xff] %v2913
        %2946 = vst [vmem:[%s429 + $0x20] sm:$0xff] %v2914
        %2947 = vst [vmem:[%s429 + $0x28] sm:$0xff] %v2915
        %2948 = vst [vmem:[%s429 + $0x30] sm:$0xff] %v2916
        %2949 = vst [vmem:[%s429 + $0x38] sm:$0xff] %v2917
        %2950 = vst [vmem:[%s429 + $0x40] sm:$0xff] %v2918
        %2951 = vst [vmem:[%s429 + $0x48] sm:$0xff] %v2919
        %2952 = vst [vmem:[%s429 + $0x50] sm:$0xff] %v2920
        %2953 = vst [vmem:[%s429 + $0x58] sm:$0xff] %v2921
        %2954 = vst [vmem:[%s429 + $0x60] sm:$0xff] %v2922
        %2955 = vst [vmem:[%s429 + $0x68] sm:$0xff] %v2923
        %2956 = vst [vmem:[%s429 + $0x70] sm:$0xff] %v2924
        %2957 = vst [vmem:[%s429 + $0x78] sm:$0xff] %v2925
        %2958 = vst [vmem:[%s429 + $0x80] sm:$0xff] %v2926
        %2959 = vst [vmem:[%s429 + $0x88] sm:$0xff] %v2927
        %2960 = vst [vmem:[%s429 + $0x90] sm:$0xff] %v2928
        %2961 = vst [vmem:[%s429 + $0x98] sm:$0xff] %v2929
        %2962 = vst [vmem:[%s429 + $0xa0] sm:$0xff] %v2930
        %2963 = vst [vmem:[%s429 + $0xa8] sm:$0xff] %v2931
        %2964 = vst [vmem:[%s429 + $0xb0] sm:$0xff] %v2932
        %2965 = vst [vmem:[%s429 + $0xb8] sm:$0xff] %v2933
        %2966 = vst [vmem:[%s429 + $0xc0] sm:$0xff] %v2934
        %2967 = vst [vmem:[%s429 + $0xc8] sm:$0xff] %v2935
        %2968 = vst [vmem:[%s429 + $0xd0] sm:$0xff] %v2936
        %2969 = vst [vmem:[%s429 + $0xd8] sm:$0xff] %v2937
        %2970 = vst [vmem:[%s429 + $0xe0] sm:$0xff] %v2938
        %2971 = vst [vmem:[%s429 + $0xe8] sm:$0xff] %v2939
        %2972 = vst [vmem:[%s429 + $0xf0] sm:$0xff] %v2940
        %2973 = vst [vmem:[%s429 + $0xf8] sm:$0xff] %v2941
        %s2974 = sand.u32 %s245, 1
        %s2975 = scalar_lea.sflag [#allocation7], %s2974
        %s2976 = sand.u32 %s245, 1
        %s2977 = smul.addr %s2976, 256
        %s2978 = scalar_lea.vmem [#allocation16], %s2977
        // Predicated region
        $region85: #{attn_block_forward.1} parent=55 // pred_check
          %p2979 = pneg %p255
        $region86: #{attn_block_forward.1} parent=55 // pred_check_branch
          %2981 = sbr.rel (%p2979) target = $region88
        $region87: #{attn_block_forward.1} parent=55 // pred_region
          %s2982 = smul.u32 32, %s34
          %s2984 = ssub.s32 4096, 4096
          %2985 = vsyncadd %s2975, %s2984
          %s2986 = smul.addr %s33, 32
          %s2987 = sadd.s32 %s2982, %s2986
          %s2988 = smul.addr %s2987, 128
          %s2989 = scalar_lea.hbm %s9, %s2988
          %s2990 = sshll.u32 %s2978, 4
          %s2991 = int_to_ptr.vmem [resolvable:$true] %s2990
          %2996 = dma.vmem_to_hbm [thread:$0]  %s2991, 4096, %s2989, %s2975, 128, 128, 8
        $region88: #{attn_block_forward.1} parent=55 // pred_fallthru
          _
      $region56: #{attn_block_forward.1} parent=5 // pred_fallthru
        _
      %p2997 = scmp.le.s32.totalorder 2, %s24
      // Predicated region
      $region89: #{attn_block_forward.1} parent=5 // pred_check
        %p2998 = pneg %p2997
      $region90: #{attn_block_forward.1} parent=5 // pred_check_branch
        %3000 = sbr.rel (%p2998) target = $region92
      $region91: #{attn_block_forward.1} parent=5 // pred_region
        %s3001 = ssub.s32 %s24, 2
        // Predicated region
        $region93: #{attn_block_forward.1} parent=91 // pred_check
          %p3002 = pneg %p261
        $region94: #{attn_block_forward.1} parent=91 // pred_check_branch
          %3004 = sbr.rel (%p3002) target = $region96
        $region95: #{attn_block_forward.1} parent=91 // pred_region
          %s3005 = sand.u32 %s246, 1
          %s3006 = scalar_lea.sflag [#allocation7], %s3005
          %s3007 = sand.u32 %s246, 1
          %s3008 = smul.addr %s3007, 256
          %s3009 = scalar_lea.vmem [#allocation16], %s3008
          %3010 = dma.done %s3006, 4096
        $region96: #{attn_block_forward.1} parent=91 // pred_fallthru
          _
      $region92: #{attn_block_forward.1} parent=5 // pred_fallthru
        _
    $region6: #{attn_block_forward.1} parent=1 // loop_footer
      %s28 = sadd.s32 1, %s24
    $region7: #{attn_block_forward.1} parent=1 // loop_footer_branch
      %23 = sbr.rel target = $region3
    $region8: #{attn_block_forward.1} parent=1 // loop_exit
      _
    %3011 = vsyncpa [#allocation6], 1
    %s3012 = scalar_lea.sflag [#allocation6], 1
    %3013 = vsyncpa %s3012, 1
    %3014 = vsyncpa [#allocation9], 1
    %3015 = vsyncpa [#allocation12], 1
    %3016 = vsyncpa [#allocation15], 1
    %3017 = vsyncpa [#allocation7], 1
    %s3018 = scalar_lea.sflag [#allocation7], 1
    %3019 = vsyncpa %s3018, 1

</llo_original>
